<compile_context>
chip_gen: v7x
topology: tpu7x:2x2x1
jax: 0.10.0
libtpu: 0.0.40
codegen_flags: <defaults>
</compile_context>

<pallas_src>
import math

import jax
import jax.numpy as jnp
from jax.experimental import pallas as pl
from jax.experimental.pallas import tpu as pltpu


def _gelu(x):
    # tanh-approximation of GELU (TPU/EUP friendly); reference uses the same formula.
    c = math.sqrt(2.0 / math.pi)
    return 0.5 * x * (1.0 + jnp.tanh(c * (x + 0.044715 * x * x * x)))


_HIGHEST = jax.lax.Precision.HIGHEST   # keep full f32 accuracy on the MXU dots


# ------------------------------ Pallas kernels ------------------------------ #
def spectral_mix_kernel(xr_ref, xi_ref, w1r_ref, w1i_ref, w2r_ref, w2i_ref,
                        or_ref, oi_ref):
    """Per-mode complex channel mixing + in-kernel zero padding of the spectrum.

    Blocks (one batch element per grid step):
      xr/xi   : (1, Ci, H, Wf)    real / imag planes of rfft2(x)
      w1*/w2* : (Ci, Co, m1, m2)  spectral weights (top / bottom frequency band)
      or/oi   : (1, Co, H, Wf)    real / imag planes of the FULL zero-padded output
                                  spectrum, consumed directly by irfft2 — no XLA
                                  zeros / scatter round trips remain.
    """
    ci, co, m1, m2 = w1r_ref.shape
    h = xr_ref.shape[2]

    # Zero the whole output block once, then overwrite the two retained corners.
    or_ref[...] = jnp.zeros_like(or_ref)
    oi_ref[...] = jnp.zeros_like(oi_ref)

    xr = xr_ref[0]                      # (Ci, H, Wf)
    xi = xi_ref[0]
    w1r, w1i = w1r_ref[...], w1i_ref[...]
    w2r, w2i = w2r_ref[...], w2i_ref[...]

    def mix(row0, wr, wi):
        xr_c = xr[:, row0:row0 + m1, :m2]          # (Ci, m1, m2)
        xi_c = xi[:, row0:row0 + m1, :m2]
        acc_r = jnp.zeros((co, m1, m2), jnp.float32)
        acc_i = jnp.zeros((co, m1, m2), jnp.float32)
        # Broadcast-FMA over the (small) input-channel axis.
        # TODO(synk): at C >= 32 replace with a mode-batched MXU dot ('mbi,mio->mbo').
        for i in range(ci):
            xr_i = xr_c[i][None]                   # (1, m1, m2)
            xi_i = xi_c[i][None]
            acc_r = acc_r + xr_i * wr[i] - xi_i * wi[i]
            acc_i = acc_i + xr_i * wi[i] + xi_i * wr[i]
        return acc_r, acc_i

    top_r, top_i = mix(0, w1r, w1i)                # weights1 -> rows [:m1]
    bot_r, bot_i = mix(h - m1, w2r, w2i)           # weights2 -> rows [-m1:]

    or_ref[0, :, 0:m1, 0:m2] = top_r
    oi_ref[0, :, 0:m1, 0:m2] = top_i
    or_ref[0, :, h - m1:h, 0:m2] = bot_r
    oi_ref[0, :, h - m1:h, 0:m2] = bot_i


def fno_pointwise_kernel(x_ref, x1_ref, theta_ref, t_ref,
                         wc_ref, bc_ref,
                         th_w1_ref, th_b1_ref, th_w2_ref, th_b2_ref,
                         t_w1_ref, t_b1_ref, t_w2_ref, t_b2_ref,
                         o_ref):
    """Fused MLP_t_theta + residual add + final GELU, one batch element per grid step.

    x/x1/o  : (1, C, HW)  channels on sublanes, HW lane-dense (multiple of 128).
    theta/t : (1, 4C, 1)  per-batch embedding inputs as columns.
    Weights : PyTorch-native (out, in); biases are (C, 1) columns (prepared once).
    All contractions run on the MXU (jnp.dot) in full f32.
    """
    theta_col = theta_ref[0]                       # (4C, 1)
    t_col = t_ref[0]

    # theta path:  theta_emb2(gelu(theta_emb1(theta)))
    th = jnp.dot(th_w1_ref[...], theta_col,
                 preferred_element_type=jnp.float32, precision=_HIGHEST) + th_b1_ref[...]
    th = _gelu(th)
    th = jnp.dot(th_w2_ref[...], th,
                 preferred_element_type=jnp.float32, precision=_HIGHEST) + th_b2_ref[...]

    # time path:  time_emb2(swish(time_emb1(t)))
    tt = jnp.dot(t_w1_ref[...], t_col,
                 preferred_element_type=jnp.float32, precision=_HIGHEST) + t_b1_ref[...]
    # Exact Swish: operand is a single (C,1) column, so the approximate EUP
    # reciprocal would save nothing here and only risk the 1e-4 check.
    tt = tt * pl.reciprocal(1.0 + jnp.exp(-tt), approx=False)
    tt = jnp.dot(t_w2_ref[...], tt,
                 preferred_element_type=jnp.float32, precision=_HIGHEST) + t_b2_ref[...]

    # Per-channel bias column: both embeddings + the 1x1-conv bias.
    bias_col = th + tt + bc_ref[...]               # (C, 1)

    # 1x1 conv on the MXU: (C_out, C_in) @ (C_in, HW).
    conv = jnp.dot(wc_ref[...], x_ref[0],
                   preferred_element_type=jnp.float32, precision=_HIGHEST)      # (C, HW)
    o_ref[0] = _gelu(conv + bias_col + x1_ref[0]).astype(o_ref.dtype)


# --------------------------------- wrapper ---------------------------------- #
def fno_block_t_theta(x, theta, t, prep, modes1, modes2):
    """Forward pass of FNOBlock_t_theta (non-flip SpectralConv2d)."""
    B, C, H, W = x.shape
    HW = H * W
    Wf = W // 2 + 1
    C4 = 4 * C
    assert 2 * modes1 <= H and modes2 <= Wf, "modes too large for the spatial grid"

    parallel = pltpu.CompilerParams(dimension_semantics=("parallel",))

    # ---- spectral branch: rfft2 (XLA) -> Pallas mix+pad -> irfft2 (XLA) ---- #
    x_ft = jnp.fft.rfft2(x)                                        # (B, C, H, Wf) c64
    xr = jnp.real(x_ft).astype(jnp.float32)
    xi = jnp.imag(x_ft).astype(jnp.float32)

    band = pl.BlockSpec((1, C, H, Wf), lambda b: (b, 0, 0, 0))
    wspec = pl.BlockSpec((C, C, modes1, modes2), lambda b: (0, 0, 0, 0))
    out_r, out_i = pl.pallas_call(
        spectral_mix_kernel,
        grid=(B,),
        out_shape=(jax.ShapeDtypeStruct((B, C, H, Wf), jnp.float32),
                   jax.ShapeDtypeStruct((B, C, H, Wf), jnp.float32)),
        in_specs=[band, band, wspec, wspec, wspec, wspec],
        out_specs=(band, band),
        compiler_params=parallel,
    )(xr, xi, prep["spec_w1_r"], prep["spec_w1_i"],
      prep["spec_w2_r"], prep["spec_w2_i"])

    x1 = jnp.fft.irfft2(jax.lax.complex(out_r, out_i), s=(H, W))   # (B, C, H, W) f32

    # ---- fused pointwise branch + combine (batch-parallel pallas_call) ----- #
    xc_spec = pl.BlockSpec((1, C, HW), lambda b: (b, 0, 0))
    col_spec = pl.BlockSpec((1, C4, 1), lambda b: (b, 0, 0))

    def full(shape):
        return pl.BlockSpec(shape, lambda b, _s=shape: (0,) * len(_s))

    out_flat = pl.pallas_call(
        fno_pointwise_kernel,
        grid=(B,),
        out_shape=jax.ShapeDtypeStruct((B, C, HW), jnp.float32),
        in_specs=[xc_spec, xc_spec, col_spec, col_spec,
                  full((C, C)), full((C, 1)),
                  full((C, C4)), full((C, 1)), full((C, C)), full((C, 1)),
                  full((C, C4)), full((C, 1)), full((C, C)), full((C, 1))],
        out_specs=xc_spec,
        compiler_params=parallel,
    )(x.reshape(B, C, HW).astype(jnp.float32),
      x1.reshape(B, C, HW),
      theta.astype(jnp.float32)[:, :, None],
      t.astype(jnp.float32)[:, :, None],
      prep["mlp1_w"], prep["mlp1_b"],
      prep["theta_w1"], prep["theta_b1"], prep["theta_w2"], prep["theta_b2"],
      prep["time_w1"], prep["time_b1"], prep["time_w2"], prep["time_b2"])
    return out_flat.reshape(B, C, H, W)


# ------------------------------ plain-JAX reference ------------------------- #
def reference_forward(x, theta, t, params, modes1, modes2):
    """Pure-jnp replica of the PyTorch forward (same tanh-GELU formula)."""
    B, C, H, W = x.shape
    w1c = jax.lax.complex(params["spec_w1_r"], params["spec_w1_i"])
    w2c = jax.lax.complex(params["spec_w2_r"], params["spec_w2_i"])

    def compl_mul2d(xs, w):   # einsum('bixy,ioxy->boxy') written as an exact sum
        return jnp.sum(xs[:, :, None, :, :] * w[None, :, :, :, :], axis=1)

    x_ft = jnp.fft.rfft2(x)
    out_ft = jnp.zeros((B, C, H, W // 2 + 1), jnp.complex64)
    out_ft = out_ft.at[:, :, :modes1, :modes2].set(
        compl_mul2d(x_ft[:, :, :modes1, :modes2], w1c))
    out_ft = out_ft.at[:, :, H - modes1:, :modes2].set(
        compl_mul2d(x_ft[:, :, H - modes1:, :modes2], w2c))
    x1 = jnp.fft.irfft2(out_ft, s=(H, W))

    def linear(v, w, b):      # PyTorch nn.Linear: v @ w.T + b (exact f32 sum)
        return jnp.sum(v[:, None, :] * w[None, :, :], axis=-1) + b

    th = linear(theta, params["theta_w1"], params["theta_b1"])
    th = _gelu(th)
    th = linear(th, params["theta_w2"], params["theta_b2"])

    tt = linear(t, params["time_w1"], params["time_b1"])
    tt = tt * (1.0 / (1.0 + jnp.exp(-tt)))
    tt = linear(tt, params["time_w2"], params["time_b2"])

    conv = (jnp.sum(params["mlp1_w"][None, :, :, None, None] * x[:, None, :, :, :], axis=2)
            + params["mlp1_b"][None, :, None, None])
    x2 = conv + th[:, :, None, None] + tt[:, :, None, None]
    return _gelu(x1 + x2)


# ---------------------------------- params ----------------------------------- #
def init_params(key, width, modes1, modes2):
    C = width
    tc = 4 * width        # t_channels = theta_channels = width * 4
    ks = jax.random.split(key, 14)
    spec_scale = 1.0 / (C * C)

    def n(k, shape, s):
        return jax.random.normal(k, shape, jnp.float32) * s

    return {
        # SpectralConv2d weights (complex, stored as real/imag): (Cin, Cout, m1, m2)
        "spec_w1_r": spec_scale * jax.random.uniform(ks[0], (C, C, modes1, modes2), jnp.float32),
        "spec_w1_i": spec_scale * jax.random.uniform(ks[1], (C, C, modes1, modes2), jnp.float32),
        "spec_w2_r": spec_scale * jax.random.uniform(ks[2], (C, C, modes1, modes2), jnp.float32),
        "spec_w2_i": spec_scale * jax.random.uniform(ks[3], (C, C, modes1, modes2), jnp.float32),
        # MLP_t_theta.mlp1 = Conv2d(C, C, 1) -- PyTorch (out, in) layout
        "mlp1_w":   n(ks[4], (C, C), 1.0 / math.sqrt(C)),
        "mlp1_b":   n(ks[5], (C,), 0.01),
        # theta_emb1 / theta_emb2 : Linear(4C, C), Linear(C, C) -- (out, in) layout
        "theta_w1": n(ks[6], (C, tc), 1.0 / math.sqrt(tc)),
        "theta_b1": n(ks[7], (C,), 0.01),
        "theta_w2": n(ks[8], (C, C), 1.0 / math.sqrt(C)),
        "theta_b2": n(ks[9], (C,), 0.01),
        # time_emb1 / time_emb2 : Linear(4C, C), Linear(C, C) -- (out, in) layout
        "time_w1":  n(ks[10], (C, tc), 1.0 / math.sqrt(tc)),
        "time_b1":  n(ks[11], (C,), 0.01),
        "time_w2":  n(ks[12], (C, C), 1.0 / math.sqrt(C)),
        "time_b2":  n(ks[13], (C,), 0.01),
    }


def prepare_params(raw):
    """One-time layout plumbing, hoisted out of the per-call forward:
    f32 casts and biases as (C, 1) columns.  Dense weights stay PyTorch-native
    (out, in); no per-forward concats / transposes remain."""
    p = {k: jnp.asarray(v, jnp.float32) for k, v in raw.items()}
    for name in ("mlp1_b", "theta_b1", "theta_b2", "time_b1", "time_b2"):
        p[name] = p[name].reshape(-1, 1)
    return p


if __name__ == "__main__":
    width = 4            # FNO width (channels)
    modes1 = modes2 = 4
    B, H, W = 2, 16, 16

    key = jax.random.PRNGKey(0)
    kp, kx, kth, kt = jax.random.split(key, 4)
    raw_params = init_params(kp, width, modes1, modes2)
    prep = prepare_params(raw_params)

    x = jax.random.normal(kx, (B, width, H, W), jnp.float32)
    theta = jax.random.normal(kth, (B, 4 * width), jnp.float32)
    t = jax.random.normal(kt, (B, 4 * width), jnp.float32)

    fwd = jax.jit(fno_block_t_theta, static_argnums=(4, 5))
    out = fwd(x, theta, t, prep, modes1, modes2)
    out = jax.block_until_ready(out)

    ref = reference_forward(x, theta, t, raw_params, modes1, modes2)
    assert out.shape == (B, width, H, W)
    err = float(jnp.max(jnp.abs(out - ref)))
    assert jnp.allclose(out, ref, atol=1e-4, rtol=1e-4), (
        f"mismatch vs reference (max abs err {err})")

    print("KERNEL_OK")
</pallas_src>

<mosaic_0001>
module attributes {stable_mosaic.version = 11 : i64} {
  func.func @spectral_mix_kernel(%arg0: i32, %arg1: memref<1x4x16x9xf32, #tpu.memory_space<vmem>>, %arg2: memref<1x4x16x9xf32, #tpu.memory_space<vmem>>, %arg3: memref<4x4x4x4xf32, #tpu.memory_space<vmem>>, %arg4: memref<4x4x4x4xf32, #tpu.memory_space<vmem>>, %arg5: memref<4x4x4x4xf32, #tpu.memory_space<vmem>>, %arg6: memref<4x4x4x4xf32, #tpu.memory_space<vmem>>, %arg7: memref<1x4x16x9xf32, #tpu.memory_space<vmem>>, %arg8: memref<1x4x16x9xf32, #tpu.memory_space<vmem>>) attributes {dimension_semantics = [#tpu.dimension_semantics<parallel>], iteration_bounds = array<i64: 2>, scalar_prefetch = 0 : i64, scratch_operands = 0 : i64, tpu.core_type = #tpu.core_type<tc>, window_params = [{transform_indices = @transform_0, window_bounds = array<i64: 1, 4, 16, 9>}, {transform_indices = @transform_1, window_bounds = array<i64: 1, 4, 16, 9>}, {pipeline_mode = #tpu.pipeline_mode<synchronous>, transform_indices = @transform_2, window_bounds = array<i64: 4, 4, 4, 4>}, {pipeline_mode = #tpu.pipeline_mode<synchronous>, transform_indices = @transform_3, window_bounds = array<i64: 4, 4, 4, 4>}, {pipeline_mode = #tpu.pipeline_mode<synchronous>, transform_indices = @transform_4, window_bounds = array<i64: 4, 4, 4, 4>}, {pipeline_mode = #tpu.pipeline_mode<synchronous>, transform_indices = @transform_5, window_bounds = array<i64: 4, 4, 4, 4>}, {transform_indices = @transform_6, window_bounds = array<i64: 1, 4, 16, 9>}, {transform_indices = @transform_7, window_bounds = array<i64: 1, 4, 16, 9>}]} {
    %cst = arith.constant 0.000000e+00 : f32
    %0 = vector.broadcast %cst : f32 to vector<1x4x16x9xf32>
    %c0 = arith.constant 0 : index
    %c0_0 = arith.constant 0 : index
    %c0_1 = arith.constant 0 : index
    %c0_2 = arith.constant 0 : index
    %1 = vector.load %arg7[%c0, %c0_0, %c0_1, %c0_2] : memref<1x4x16x9xf32, #tpu.memory_space<vmem>>, vector<1x4x16x9xf32>
    tpu.vector_store %arg7[%c0, %c0_0, %c0_1, %c0_2], %0 {strides = array<i32>} : memref<1x4x16x9xf32, #tpu.memory_space<vmem>>, vector<1x4x16x9xf32>,
    %cst_3 = arith.constant 0.000000e+00 : f32
    %2 = vector.broadcast %cst_3 : f32 to vector<1x4x16x9xf32>
    %c0_4 = arith.constant 0 : index
    %c0_5 = arith.constant 0 : index
    %c0_6 = arith.constant 0 : index
    %c0_7 = arith.constant 0 : index
    %3 = vector.load %arg8[%c0_4, %c0_5, %c0_6, %c0_7] : memref<1x4x16x9xf32, #tpu.memory_space<vmem>>, vector<1x4x16x9xf32>
    tpu.vector_store %arg8[%c0_4, %c0_5, %c0_6, %c0_7], %2 {strides = array<i32>} : memref<1x4x16x9xf32, #tpu.memory_space<vmem>>, vector<1x4x16x9xf32>,
    %c0_8 = arith.constant 0 : index
    %c0_9 = arith.constant 0 : index
    %c0_10 = arith.constant 0 : index
    %c0_11 = arith.constant 0 : index
    %4 = vector.load %arg1[%c0_8, %c0_9, %c0_10, %c0_11] : memref<1x4x16x9xf32, #tpu.memory_space<vmem>>, vector<1x4x16x9xf32>
    %5 = vector.shape_cast %4 : vector<1x4x16x9xf32> to vector<4x16x9xf32>
    %c0_12 = arith.constant 0 : index
    %c0_13 = arith.constant 0 : index
    %c0_14 = arith.constant 0 : index
    %c0_15 = arith.constant 0 : index
    %6 = vector.load %arg2[%c0_12, %c0_13, %c0_14, %c0_15] : memref<1x4x16x9xf32, #tpu.memory_space<vmem>>, vector<1x4x16x9xf32>
    %7 = vector.shape_cast %6 : vector<1x4x16x9xf32> to vector<4x16x9xf32>
    %c0_16 = arith.constant 0 : index
    %c0_17 = arith.constant 0 : index
    %c0_18 = arith.constant 0 : index
    %c0_19 = arith.constant 0 : index
    %8 = vector.load %arg3[%c0_16, %c0_17, %c0_18, %c0_19] : memref<4x4x4x4xf32, #tpu.memory_space<vmem>>, vector<4x4x4x4xf32>
    %c0_20 = arith.constant 0 : index
    %c0_21 = arith.constant 0 : index
    %c0_22 = arith.constant 0 : index
    %c0_23 = arith.constant 0 : index
    %9 = vector.load %arg4[%c0_20, %c0_21, %c0_22, %c0_23] : memref<4x4x4x4xf32, #tpu.memory_space<vmem>>, vector<4x4x4x4xf32>
    %c0_24 = arith.constant 0 : index
    %c0_25 = arith.constant 0 : index
    %c0_26 = arith.constant 0 : index
    %c0_27 = arith.constant 0 : index
    %10 = vector.load %arg5[%c0_24, %c0_25, %c0_26, %c0_27] : memref<4x4x4x4xf32, #tpu.memory_space<vmem>>, vector<4x4x4x4xf32>
    %c0_28 = arith.constant 0 : index
    %c0_29 = arith.constant 0 : index
    %c0_30 = arith.constant 0 : index
    %c0_31 = arith.constant 0 : index
    %11 = vector.load %arg6[%c0_28, %c0_29, %c0_30, %c0_31] : memref<4x4x4x4xf32, #tpu.memory_space<vmem>>, vector<4x4x4x4xf32>
    %12 = vector.extract_strided_slice %5 {offsets = [0, 0, 0], sizes = [4, 4, 4], strides = [1, 1, 1]} : vector<4x16x9xf32> to vector<4x4x4xf32>
    %13 = vector.extract_strided_slice %7 {offsets = [0, 0, 0], sizes = [4, 4, 4], strides = [1, 1, 1]} : vector<4x16x9xf32> to vector<4x4x4xf32>
    %cst_32 = arith.constant 0.000000e+00 : f32
    %14 = vector.broadcast %cst_32 : f32 to vector<4x4x4xf32>
    %cst_33 = arith.constant 0.000000e+00 : f32
    %15 = vector.broadcast %cst_33 : f32 to vector<4x4x4xf32>
    %16 = vector.extract_strided_slice %12 {offsets = [0, 0, 0], sizes = [1, 4, 4], strides = [1, 1, 1]} : vector<4x4x4xf32> to vector<1x4x4xf32>
    %17 = vector.shape_cast %16 : vector<1x4x4xf32> to vector<4x4xf32>
    %18 = vector.shape_cast %17 : vector<4x4xf32> to vector<1x4x4xf32>
    %19 = vector.extract_strided_slice %13 {offsets = [0, 0, 0], sizes = [1, 4, 4], strides = [1, 1, 1]} : vector<4x4x4xf32> to vector<1x4x4xf32>
    %20 = vector.shape_cast %19 : vector<1x4x4xf32> to vector<4x4xf32>
    %21 = vector.shape_cast %20 : vector<4x4xf32> to vector<1x4x4xf32>
    %22 = vector.extract_strided_slice %8 {offsets = [0, 0, 0, 0], sizes = [1, 4, 4, 4], strides = [1, 1, 1, 1]} : vector<4x4x4x4xf32> to vector<1x4x4x4xf32>
    %23 = vector.shape_cast %22 : vector<1x4x4x4xf32> to vector<4x4x4xf32>
    %24 = vector.broadcast %18 : vector<1x4x4xf32> to vector<4x4x4xf32>
    %25 = arith.mulf %24, %23 : vector<4x4x4xf32>
    %26 = arith.addf %14, %25 : vector<4x4x4xf32>
    %27 = vector.extract_strided_slice %9 {offsets = [0, 0, 0, 0], sizes = [1, 4, 4, 4], strides = [1, 1, 1, 1]} : vector<4x4x4x4xf32> to vector<1x4x4x4xf32>
    %28 = vector.shape_cast %27 : vector<1x4x4x4xf32> to vector<4x4x4xf32>
    %29 = vector.broadcast %21 : vector<1x4x4xf32> to vector<4x4x4xf32>
    %30 = arith.mulf %29, %28 : vector<4x4x4xf32>
    %31 = arith.subf %26, %30 : vector<4x4x4xf32>
    %32 = vector.extract_strided_slice %9 {offsets = [0, 0, 0, 0], sizes = [1, 4, 4, 4], strides = [1, 1, 1, 1]} : vector<4x4x4x4xf32> to vector<1x4x4x4xf32>
    %33 = vector.shape_cast %32 : vector<1x4x4x4xf32> to vector<4x4x4xf32>
    %34 = vector.broadcast %18 : vector<1x4x4xf32> to vector<4x4x4xf32>
    %35 = arith.mulf %34, %33 : vector<4x4x4xf32>
    %36 = arith.addf %15, %35 : vector<4x4x4xf32>
    %37 = vector.extract_strided_slice %8 {offsets = [0, 0, 0, 0], sizes = [1, 4, 4, 4], strides = [1, 1, 1, 1]} : vector<4x4x4x4xf32> to vector<1x4x4x4xf32>
    %38 = vector.shape_cast %37 : vector<1x4x4x4xf32> to vector<4x4x4xf32>
    %39 = vector.broadcast %21 : vector<1x4x4xf32> to vector<4x4x4xf32>
    %40 = arith.mulf %39, %38 : vector<4x4x4xf32>
    %41 = arith.addf %36, %40 : vector<4x4x4xf32>
    %42 = vector.extract_strided_slice %12 {offsets = [1, 0, 0], sizes = [1, 4, 4], strides = [1, 1, 1]} : vector<4x4x4xf32> to vector<1x4x4xf32>
    %43 = vector.shape_cast %42 : vector<1x4x4xf32> to vector<4x4xf32>
    %44 = vector.shape_cast %43 : vector<4x4xf32> to vector<1x4x4xf32>
    %45 = vector.extract_strided_slice %13 {offsets = [1, 0, 0], sizes = [1, 4, 4], strides = [1, 1, 1]} : vector<4x4x4xf32> to vector<1x4x4xf32>
    %46 = vector.shape_cast %45 : vector<1x4x4xf32> to vector<4x4xf32>
    %47 = vector.shape_cast %46 : vector<4x4xf32> to vector<1x4x4xf32>
    %48 = vector.extract_strided_slice %8 {offsets = [1, 0, 0, 0], sizes = [1, 4, 4, 4], strides = [1, 1, 1, 1]} : vector<4x4x4x4xf32> to vector<1x4x4x4xf32>
    %49 = vector.shape_cast %48 : vector<1x4x4x4xf32> to vector<4x4x4xf32>
    %50 = vector.broadcast %44 : vector<1x4x4xf32> to vector<4x4x4xf32>
    %51 = arith.mulf %50, %49 : vector<4x4x4xf32>
    %52 = arith.addf %31, %51 : vector<4x4x4xf32>
    %53 = vector.extract_strided_slice %9 {offsets = [1, 0, 0, 0], sizes = [1, 4, 4, 4], strides = [1, 1, 1, 1]} : vector<4x4x4x4xf32> to vector<1x4x4x4xf32>
    %54 = vector.shape_cast %53 : vector<1x4x4x4xf32> to vector<4x4x4xf32>
    %55 = vector.broadcast %47 : vector<1x4x4xf32> to vector<4x4x4xf32>
    %56 = arith.mulf %55, %54 : vector<4x4x4xf32>
    %57 = arith.subf %52, %56 : vector<4x4x4xf32>
    %58 = vector.extract_strided_slice %9 {offsets = [1, 0, 0, 0], sizes = [1, 4, 4, 4], strides = [1, 1, 1, 1]} : vector<4x4x4x4xf32> to vector<1x4x4x4xf32>
    %59 = vector.shape_cast %58 : vector<1x4x4x4xf32> to vector<4x4x4xf32>
    %60 = vector.broadcast %44 : vector<1x4x4xf32> to vector<4x4x4xf32>
    %61 = arith.mulf %60, %59 : vector<4x4x4xf32>
    %62 = arith.addf %41, %61 : vector<4x4x4xf32>
    %63 = vector.extract_strided_slice %8 {offsets = [1, 0, 0, 0], sizes = [1, 4, 4, 4], strides = [1, 1, 1, 1]} : vector<4x4x4x4xf32> to vector<1x4x4x4xf32>
    %64 = vector.shape_cast %63 : vector<1x4x4x4xf32> to vector<4x4x4xf32>
    %65 = vector.broadcast %47 : vector<1x4x4xf32> to vector<4x4x4xf32>
    %66 = arith.mulf %65, %64 : vector<4x4x4xf32>
    %67 = arith.addf %62, %66 : vector<4x4x4xf32>
    %68 = vector.extract_strided_slice %12 {offsets = [2, 0, 0], sizes = [1, 4, 4], strides = [1, 1, 1]} : vector<4x4x4xf32> to vector<1x4x4xf32>
    %69 = vector.shape_cast %68 : vector<1x4x4xf32> to vector<4x4xf32>
    %70 = vector.shape_cast %69 : vector<4x4xf32> to vector<1x4x4xf32>
    %71 = vector.extract_strided_slice %13 {offsets = [2, 0, 0], sizes = [1, 4, 4], strides = [1, 1, 1]} : vector<4x4x4xf32> to vector<1x4x4xf32>
    %72 = vector.shape_cast %71 : vector<1x4x4xf32> to vector<4x4xf32>
    %73 = vector.shape_cast %72 : vector<4x4xf32> to vector<1x4x4xf32>
    %74 = vector.extract_strided_slice %8 {offsets = [2, 0, 0, 0], sizes = [1, 4, 4, 4], strides = [1, 1, 1, 1]} : vector<4x4x4x4xf32> to vector<1x4x4x4xf32>
    %75 = vector.shape_cast %74 : vector<1x4x4x4xf32> to vector<4x4x4xf32>
    %76 = vector.broadcast %70 : vector<1x4x4xf32> to vector<4x4x4xf32>
    %77 = arith.mulf %76, %75 : vector<4x4x4xf32>
    %78 = arith.addf %57, %77 : vector<4x4x4xf32>
    %79 = vector.extract_strided_slice %9 {offsets = [2, 0, 0, 0], sizes = [1, 4, 4, 4], strides = [1, 1, 1, 1]} : vector<4x4x4x4xf32> to vector<1x4x4x4xf32>
    %80 = vector.shape_cast %79 : vector<1x4x4x4xf32> to vector<4x4x4xf32>
    %81 = vector.broadcast %73 : vector<1x4x4xf32> to vector<4x4x4xf32>
    %82 = arith.mulf %81, %80 : vector<4x4x4xf32>
    %83 = arith.subf %78, %82 : vector<4x4x4xf32>
    %84 = vector.extract_strided_slice %9 {offsets = [2, 0, 0, 0], sizes = [1, 4, 4, 4], strides = [1, 1, 1, 1]} : vector<4x4x4x4xf32> to vector<1x4x4x4xf32>
    %85 = vector.shape_cast %84 : vector<1x4x4x4xf32> to vector<4x4x4xf32>
    %86 = vector.broadcast %70 : vector<1x4x4xf32> to vector<4x4x4xf32>
    %87 = arith.mulf %86, %85 : vector<4x4x4xf32>
    %88 = arith.addf %67, %87 : vector<4x4x4xf32>
    %89 = vector.extract_strided_slice %8 {offsets = [2, 0, 0, 0], sizes = [1, 4, 4, 4], strides = [1, 1, 1, 1]} : vector<4x4x4x4xf32> to vector<1x4x4x4xf32>
    %90 = vector.shape_cast %89 : vector<1x4x4x4xf32> to vector<4x4x4xf32>
    %91 = vector.broadcast %73 : vector<1x4x4xf32> to vector<4x4x4xf32>
    %92 = arith.mulf %91, %90 : vector<4x4x4xf32>
    %93 = arith.addf %88, %92 : vector<4x4x4xf32>
    %94 = vector.extract_strided_slice %12 {offsets = [3, 0, 0], sizes = [1, 4, 4], strides = [1, 1, 1]} : vector<4x4x4xf32> to vector<1x4x4xf32>
    %95 = vector.shape_cast %94 : vector<1x4x4xf32> to vector<4x4xf32>
    %96 = vector.shape_cast %95 : vector<4x4xf32> to vector<1x4x4xf32>
    %97 = vector.extract_strided_slice %13 {offsets = [3, 0, 0], sizes = [1, 4, 4], strides = [1, 1, 1]} : vector<4x4x4xf32> to vector<1x4x4xf32>
    %98 = vector.shape_cast %97 : vector<1x4x4xf32> to vector<4x4xf32>
    %99 = vector.shape_cast %98 : vector<4x4xf32> to vector<1x4x4xf32>
    %100 = vector.extract_strided_slice %8 {offsets = [3, 0, 0, 0], sizes = [1, 4, 4, 4], strides = [1, 1, 1, 1]} : vector<4x4x4x4xf32> to vector<1x4x4x4xf32>
    %101 = vector.shape_cast %100 : vector<1x4x4x4xf32> to vector<4x4x4xf32>
    %102 = vector.broadcast %96 : vector<1x4x4xf32> to vector<4x4x4xf32>
    %103 = arith.mulf %102, %101 : vector<4x4x4xf32>
    %104 = arith.addf %83, %103 : vector<4x4x4xf32>
    %105 = vector.extract_strided_slice %9 {offsets = [3, 0, 0, 0], sizes = [1, 4, 4, 4], strides = [1, 1, 1, 1]} : vector<4x4x4x4xf32> to vector<1x4x4x4xf32>
    %106 = vector.shape_cast %105 : vector<1x4x4x4xf32> to vector<4x4x4xf32>
    %107 = vector.broadcast %99 : vector<1x4x4xf32> to vector<4x4x4xf32>
    %108 = arith.mulf %107, %106 : vector<4x4x4xf32>
    %109 = arith.subf %104, %108 : vector<4x4x4xf32>
    %110 = vector.extract_strided_slice %9 {offsets = [3, 0, 0, 0], sizes = [1, 4, 4, 4], strides = [1, 1, 1, 1]} : vector<4x4x4x4xf32> to vector<1x4x4x4xf32>
    %111 = vector.shape_cast %110 : vector<1x4x4x4xf32> to vector<4x4x4xf32>
    %112 = vector.broadcast %96 : vector<1x4x4xf32> to vector<4x4x4xf32>
    %113 = arith.mulf %112, %111 : vector<4x4x4xf32>
    %114 = arith.addf %93, %113 : vector<4x4x4xf32>
    %115 = vector.extract_strided_slice %8 {offsets = [3, 0, 0, 0], sizes = [1, 4, 4, 4], strides = [1, 1, 1, 1]} : vector<4x4x4x4xf32> to vector<1x4x4x4xf32>
    %116 = vector.shape_cast %115 : vector<1x4x4x4xf32> to vector<4x4x4xf32>
    %117 = vector.broadcast %99 : vector<1x4x4xf32> to vector<4x4x4xf32>
    %118 = arith.mulf %117, %116 : vector<4x4x4xf32>
    %119 = arith.addf %114, %118 : vector<4x4x4xf32>
    %120 = vector.extract_strided_slice %5 {offsets = [0, 12, 0], sizes = [4, 4, 4], strides = [1, 1, 1]} : vector<4x16x9xf32> to vector<4x4x4xf32>
    %121 = vector.extract_strided_slice %7 {offsets = [0, 12, 0], sizes = [4, 4, 4], strides = [1, 1, 1]} : vector<4x16x9xf32> to vector<4x4x4xf32>
    %cst_34 = arith.constant 0.000000e+00 : f32
    %122 = vector.broadcast %cst_34 : f32 to vector<4x4x4xf32>
    %cst_35 = arith.constant 0.000000e+00 : f32
    %123 = vector.broadcast %cst_35 : f32 to vector<4x4x4xf32>
    %124 = vector.extract_strided_slice %120 {offsets = [0, 0, 0], sizes = [1, 4, 4], strides = [1, 1, 1]} : vector<4x4x4xf32> to vector<1x4x4xf32>
    %125 = vector.shape_cast %124 : vector<1x4x4xf32> to vector<4x4xf32>
    %126 = vector.shape_cast %125 : vector<4x4xf32> to vector<1x4x4xf32>
    %127 = vector.extract_strided_slice %121 {offsets = [0, 0, 0], sizes = [1, 4, 4], strides = [1, 1, 1]} : vector<4x4x4xf32> to vector<1x4x4xf32>
    %128 = vector.shape_cast %127 : vector<1x4x4xf32> to vector<4x4xf32>
    %129 = vector.shape_cast %128 : vector<4x4xf32> to vector<1x4x4xf32>
    %130 = vector.extract_strided_slice %10 {offsets = [0, 0, 0, 0], sizes = [1, 4, 4, 4], strides = [1, 1, 1, 1]} : vector<4x4x4x4xf32> to vector<1x4x4x4xf32>
    %131 = vector.shape_cast %130 : vector<1x4x4x4xf32> to vector<4x4x4xf32>
    %132 = vector.broadcast %126 : vector<1x4x4xf32> to vector<4x4x4xf32>
    %133 = arith.mulf %132, %131 : vector<4x4x4xf32>
    %134 = arith.addf %122, %133 : vector<4x4x4xf32>
    %135 = vector.extract_strided_slice %11 {offsets = [0, 0, 0, 0], sizes = [1, 4, 4, 4], strides = [1, 1, 1, 1]} : vector<4x4x4x4xf32> to vector<1x4x4x4xf32>
    %136 = vector.shape_cast %135 : vector<1x4x4x4xf32> to vector<4x4x4xf32>
    %137 = vector.broadcast %129 : vector<1x4x4xf32> to vector<4x4x4xf32>
    %138 = arith.mulf %137, %136 : vector<4x4x4xf32>
    %139 = arith.subf %134, %138 : vector<4x4x4xf32>
    %140 = vector.extract_strided_slice %11 {offsets = [0, 0, 0, 0], sizes = [1, 4, 4, 4], strides = [1, 1, 1, 1]} : vector<4x4x4x4xf32> to vector<1x4x4x4xf32>
    %141 = vector.shape_cast %140 : vector<1x4x4x4xf32> to vector<4x4x4xf32>
    %142 = vector.broadcast %126 : vector<1x4x4xf32> to vector<4x4x4xf32>
    %143 = arith.mulf %142, %141 : vector<4x4x4xf32>
    %144 = arith.addf %123, %143 : vector<4x4x4xf32>
    %145 = vector.extract_strided_slice %10 {offsets = [0, 0, 0, 0], sizes = [1, 4, 4, 4], strides = [1, 1, 1, 1]} : vector<4x4x4x4xf32> to vector<1x4x4x4xf32>
    %146 = vector.shape_cast %145 : vector<1x4x4x4xf32> to vector<4x4x4xf32>
    %147 = vector.broadcast %129 : vector<1x4x4xf32> to vector<4x4x4xf32>
    %148 = arith.mulf %147, %146 : vector<4x4x4xf32>
    %149 = arith.addf %144, %148 : vector<4x4x4xf32>
    %150 = vector.extract_strided_slice %120 {offsets = [1, 0, 0], sizes = [1, 4, 4], strides = [1, 1, 1]} : vector<4x4x4xf32> to vector<1x4x4xf32>
    %151 = vector.shape_cast %150 : vector<1x4x4xf32> to vector<4x4xf32>
    %152 = vector.shape_cast %151 : vector<4x4xf32> to vector<1x4x4xf32>
    %153 = vector.extract_strided_slice %121 {offsets = [1, 0, 0], sizes = [1, 4, 4], strides = [1, 1, 1]} : vector<4x4x4xf32> to vector<1x4x4xf32>
    %154 = vector.shape_cast %153 : vector<1x4x4xf32> to vector<4x4xf32>
    %155 = vector.shape_cast %154 : vector<4x4xf32> to vector<1x4x4xf32>
    %156 = vector.extract_strided_slice %10 {offsets = [1, 0, 0, 0], sizes = [1, 4, 4, 4], strides = [1, 1, 1, 1]} : vector<4x4x4x4xf32> to vector<1x4x4x4xf32>
    %157 = vector.shape_cast %156 : vector<1x4x4x4xf32> to vector<4x4x4xf32>
    %158 = vector.broadcast %152 : vector<1x4x4xf32> to vector<4x4x4xf32>
    %159 = arith.mulf %158, %157 : vector<4x4x4xf32>
    %160 = arith.addf %139, %159 : vector<4x4x4xf32>
    %161 = vector.extract_strided_slice %11 {offsets = [1, 0, 0, 0], sizes = [1, 4, 4, 4], strides = [1, 1, 1, 1]} : vector<4x4x4x4xf32> to vector<1x4x4x4xf32>
    %162 = vector.shape_cast %161 : vector<1x4x4x4xf32> to vector<4x4x4xf32>
    %163 = vector.broadcast %155 : vector<1x4x4xf32> to vector<4x4x4xf32>
    %164 = arith.mulf %163, %162 : vector<4x4x4xf32>
    %165 = arith.subf %160, %164 : vector<4x4x4xf32>
    %166 = vector.extract_strided_slice %11 {offsets = [1, 0, 0, 0], sizes = [1, 4, 4, 4], strides = [1, 1, 1, 1]} : vector<4x4x4x4xf32> to vector<1x4x4x4xf32>
    %167 = vector.shape_cast %166 : vector<1x4x4x4xf32> to vector<4x4x4xf32>
    %168 = vector.broadcast %152 : vector<1x4x4xf32> to vector<4x4x4xf32>
    %169 = arith.mulf %168, %167 : vector<4x4x4xf32>
    %170 = arith.addf %149, %169 : vector<4x4x4xf32>
    %171 = vector.extract_strided_slice %10 {offsets = [1, 0, 0, 0], sizes = [1, 4, 4, 4], strides = [1, 1, 1, 1]} : vector<4x4x4x4xf32> to vector<1x4x4x4xf32>
    %172 = vector.shape_cast %171 : vector<1x4x4x4xf32> to vector<4x4x4xf32>
    %173 = vector.broadcast %155 : vector<1x4x4xf32> to vector<4x4x4xf32>
    %174 = arith.mulf %173, %172 : vector<4x4x4xf32>
    %175 = arith.addf %170, %174 : vector<4x4x4xf32>
    %176 = vector.extract_strided_slice %120 {offsets = [2, 0, 0], sizes = [1, 4, 4], strides = [1, 1, 1]} : vector<4x4x4xf32> to vector<1x4x4xf32>
    %177 = vector.shape_cast %176 : vector<1x4x4xf32> to vector<4x4xf32>
    %178 = vector.shape_cast %177 : vector<4x4xf32> to vector<1x4x4xf32>
    %179 = vector.extract_strided_slice %121 {offsets = [2, 0, 0], sizes = [1, 4, 4], strides = [1, 1, 1]} : vector<4x4x4xf32> to vector<1x4x4xf32>
    %180 = vector.shape_cast %179 : vector<1x4x4xf32> to vector<4x4xf32>
    %181 = vector.shape_cast %180 : vector<4x4xf32> to vector<1x4x4xf32>
    %182 = vector.extract_strided_slice %10 {offsets = [2, 0, 0, 0], sizes = [1, 4, 4, 4], strides = [1, 1, 1, 1]} : vector<4x4x4x4xf32> to vector<1x4x4x4xf32>
    %183 = vector.shape_cast %182 : vector<1x4x4x4xf32> to vector<4x4x4xf32>
    %184 = vector.broadcast %178 : vector<1x4x4xf32> to vector<4x4x4xf32>
    %185 = arith.mulf %184, %183 : vector<4x4x4xf32>
    %186 = arith.addf %165, %185 : vector<4x4x4xf32>
    %187 = vector.extract_strided_slice %11 {offsets = [2, 0, 0, 0], sizes = [1, 4, 4, 4], strides = [1, 1, 1, 1]} : vector<4x4x4x4xf32> to vector<1x4x4x4xf32>
    %188 = vector.shape_cast %187 : vector<1x4x4x4xf32> to vector<4x4x4xf32>
    %189 = vector.broadcast %181 : vector<1x4x4xf32> to vector<4x4x4xf32>
    %190 = arith.mulf %189, %188 : vector<4x4x4xf32>
    %191 = arith.subf %186, %190 : vector<4x4x4xf32>
    %192 = vector.extract_strided_slice %11 {offsets = [2, 0, 0, 0], sizes = [1, 4, 4, 4], strides = [1, 1, 1, 1]} : vector<4x4x4x4xf32> to vector<1x4x4x4xf32>
    %193 = vector.shape_cast %192 : vector<1x4x4x4xf32> to vector<4x4x4xf32>
    %194 = vector.broadcast %178 : vector<1x4x4xf32> to vector<4x4x4xf32>
    %195 = arith.mulf %194, %193 : vector<4x4x4xf32>
    %196 = arith.addf %175, %195 : vector<4x4x4xf32>
    %197 = vector.extract_strided_slice %10 {offsets = [2, 0, 0, 0], sizes = [1, 4, 4, 4], strides = [1, 1, 1, 1]} : vector<4x4x4x4xf32> to vector<1x4x4x4xf32>
    %198 = vector.shape_cast %197 : vector<1x4x4x4xf32> to vector<4x4x4xf32>
    %199 = vector.broadcast %181 : vector<1x4x4xf32> to vector<4x4x4xf32>
    %200 = arith.mulf %199, %198 : vector<4x4x4xf32>
    %201 = arith.addf %196, %200 : vector<4x4x4xf32>
    %202 = vector.extract_strided_slice %120 {offsets = [3, 0, 0], sizes = [1, 4, 4], strides = [1, 1, 1]} : vector<4x4x4xf32> to vector<1x4x4xf32>
    %203 = vector.shape_cast %202 : vector<1x4x4xf32> to vector<4x4xf32>
    %204 = vector.shape_cast %203 : vector<4x4xf32> to vector<1x4x4xf32>
    %205 = vector.extract_strided_slice %121 {offsets = [3, 0, 0], sizes = [1, 4, 4], strides = [1, 1, 1]} : vector<4x4x4xf32> to vector<1x4x4xf32>
    %206 = vector.shape_cast %205 : vector<1x4x4xf32> to vector<4x4xf32>
    %207 = vector.shape_cast %206 : vector<4x4xf32> to vector<1x4x4xf32>
    %208 = vector.extract_strided_slice %10 {offsets = [3, 0, 0, 0], sizes = [1, 4, 4, 4], strides = [1, 1, 1, 1]} : vector<4x4x4x4xf32> to vector<1x4x4x4xf32>
    %209 = vector.shape_cast %208 : vector<1x4x4x4xf32> to vector<4x4x4xf32>
    %210 = vector.broadcast %204 : vector<1x4x4xf32> to vector<4x4x4xf32>
    %211 = arith.mulf %210, %209 : vector<4x4x4xf32>
    %212 = arith.addf %191, %211 : vector<4x4x4xf32>
    %213 = vector.extract_strided_slice %11 {offsets = [3, 0, 0, 0], sizes = [1, 4, 4, 4], strides = [1, 1, 1, 1]} : vector<4x4x4x4xf32> to vector<1x4x4x4xf32>
    %214 = vector.shape_cast %213 : vector<1x4x4x4xf32> to vector<4x4x4xf32>
    %215 = vector.broadcast %207 : vector<1x4x4xf32> to vector<4x4x4xf32>
    %216 = arith.mulf %215, %214 : vector<4x4x4xf32>
    %217 = arith.subf %212, %216 : vector<4x4x4xf32>
    %218 = vector.extract_strided_slice %11 {offsets = [3, 0, 0, 0], sizes = [1, 4, 4, 4], strides = [1, 1, 1, 1]} : vector<4x4x4x4xf32> to vector<1x4x4x4xf32>
    %219 = vector.shape_cast %218 : vector<1x4x4x4xf32> to vector<4x4x4xf32>
    %220 = vector.broadcast %204 : vector<1x4x4xf32> to vector<4x4x4xf32>
    %221 = arith.mulf %220, %219 : vector<4x4x4xf32>
    %222 = arith.addf %201, %221 : vector<4x4x4xf32>
    %223 = vector.extract_strided_slice %10 {offsets = [3, 0, 0, 0], sizes = [1, 4, 4, 4], strides = [1, 1, 1, 1]} : vector<4x4x4x4xf32> to vector<1x4x4x4xf32>
    %224 = vector.shape_cast %223 : vector<1x4x4x4xf32> to vector<4x4x4xf32>
    %225 = vector.broadcast %207 : vector<1x4x4xf32> to vector<4x4x4xf32>
    %226 = arith.mulf %225, %224 : vector<4x4x4xf32>
    %227 = arith.addf %222, %226 : vector<4x4x4xf32>
    %c0_36 = arith.constant 0 : index
    %c0_37 = arith.constant 0 : index
    %c0_38 = arith.constant 0 : index
    %c0_39 = arith.constant 0 : index
    %228 = vector.load %arg7[%c0_36, %c0_37, %c0_38, %c0_39] : memref<1x4x16x9xf32, #tpu.memory_space<vmem>>, vector<1x4x4x4xf32>
    %229 = vector.shape_cast %228 : vector<1x4x4x4xf32> to vector<4x4x4xf32>
    %230 = vector.shape_cast %109 : vector<4x4x4xf32> to vector<1x4x4x4xf32>
    tpu.vector_store %arg7[%c0_36, %c0_37, %c0_38, %c0_39], %230 {strides = array<i32>} : memref<1x4x16x9xf32, #tpu.memory_space<vmem>>, vector<1x4x4x4xf32>,
    %c0_40 = arith.constant 0 : index
    %c0_41 = arith.constant 0 : index
    %c0_42 = arith.constant 0 : index
    %c0_43 = arith.constant 0 : index
    %231 = vector.load %arg8[%c0_40, %c0_41, %c0_42, %c0_43] : memref<1x4x16x9xf32, #tpu.memory_space<vmem>>, vector<1x4x4x4xf32>
    %232 = vector.shape_cast %231 : vector<1x4x4x4xf32> to vector<4x4x4xf32>
    %233 = vector.shape_cast %119 : vector<4x4x4xf32> to vector<1x4x4x4xf32>
    tpu.vector_store %arg8[%c0_40, %c0_41, %c0_42, %c0_43], %233 {strides = array<i32>} : memref<1x4x16x9xf32, #tpu.memory_space<vmem>>, vector<1x4x4x4xf32>,
    %c0_44 = arith.constant 0 : index
    %c0_45 = arith.constant 0 : index
    %c12 = arith.constant 12 : index
    %c0_46 = arith.constant 0 : index
    %234 = vector.load %arg7[%c0_44, %c0_45, %c12, %c0_46] : memref<1x4x16x9xf32, #tpu.memory_space<vmem>>, vector<1x4x4x4xf32>
    %235 = vector.shape_cast %234 : vector<1x4x4x4xf32> to vector<4x4x4xf32>
    %236 = vector.shape_cast %217 : vector<4x4x4xf32> to vector<1x4x4x4xf32>
    tpu.vector_store %arg7[%c0_44, %c0_45, %c12, %c0_46], %236 {strides = array<i32>} : memref<1x4x16x9xf32, #tpu.memory_space<vmem>>, vector<1x4x4x4xf32>,
    %c0_47 = arith.constant 0 : index
    %c0_48 = arith.constant 0 : index
    %c12_49 = arith.constant 12 : index
    %c0_50 = arith.constant 0 : index
    %237 = vector.load %arg8[%c0_47, %c0_48, %c12_49, %c0_50] : memref<1x4x16x9xf32, #tpu.memory_space<vmem>>, vector<1x4x4x4xf32>
    %238 = vector.shape_cast %237 : vector<1x4x4x4xf32> to vector<4x4x4xf32>
    %239 = vector.shape_cast %227 : vector<4x4x4xf32> to vector<1x4x4x4xf32>
    tpu.vector_store %arg8[%c0_47, %c0_48, %c12_49, %c0_50], %239 {strides = array<i32>} : memref<1x4x16x9xf32, #tpu.memory_space<vmem>>, vector<1x4x4x4xf32>,
    return
  }
  func.func @transform_0(%arg0: i32) -> (i32, i32, i32, i32) {
    %c0_i32 = arith.constant 0 : i32
    %c0_i32_0 = arith.constant 0 : i32
    %c0_i32_1 = arith.constant 0 : i32
    %c0_i32_2 = arith.constant 0 : i32
    return %arg0, %c0_i32, %c0_i32_0, %c0_i32_1 : i32, i32, i32, i32
  }
  func.func @transform_1(%arg0: i32) -> (i32, i32, i32, i32) {
    %c0_i32 = arith.constant 0 : i32
    %c0_i32_0 = arith.constant 0 : i32
    %c0_i32_1 = arith.constant 0 : i32
    %c0_i32_2 = arith.constant 0 : i32
    return %arg0, %c0_i32, %c0_i32_0, %c0_i32_1 : i32, i32, i32, i32
  }
  func.func @transform_2(%arg0: i32) -> (i32, i32, i32, i32) {
    %c0_i32 = arith.constant 0 : i32
    %c0_i32_0 = arith.constant 0 : i32
    %c0_i32_1 = arith.constant 0 : i32
    %c0_i32_2 = arith.constant 0 : i32
    %c0_i32_3 = arith.constant 0 : i32
    return %c0_i32, %c0_i32_0, %c0_i32_1, %c0_i32_2 : i32, i32, i32, i32
  }
  func.func @transform_3(%arg0: i32) -> (i32, i32, i32, i32) {
    %c0_i32 = arith.constant 0 : i32
    %c0_i32_0 = arith.constant 0 : i32
    %c0_i32_1 = arith.constant 0 : i32
    %c0_i32_2 = arith.constant 0 : i32
    %c0_i32_3 = arith.constant 0 : i32
    return %c0_i32, %c0_i32_0, %c0_i32_1, %c0_i32_2 : i32, i32, i32, i32
  }
  func.func @transform_4(%arg0: i32) -> (i32, i32, i32, i32) {
    %c0_i32 = arith.constant 0 : i32
    %c0_i32_0 = arith.constant 0 : i32
    %c0_i32_1 = arith.constant 0 : i32
    %c0_i32_2 = arith.constant 0 : i32
    %c0_i32_3 = arith.constant 0 : i32
    return %c0_i32, %c0_i32_0, %c0_i32_1, %c0_i32_2 : i32, i32, i32, i32
  }
  func.func @transform_5(%arg0: i32) -> (i32, i32, i32, i32) {
    %c0_i32 = arith.constant 0 : i32
    %c0_i32_0 = arith.constant 0 : i32
    %c0_i32_1 = arith.constant 0 : i32
    %c0_i32_2 = arith.constant 0 : i32
    %c0_i32_3 = arith.constant 0 : i32
    return %c0_i32, %c0_i32_0, %c0_i32_1, %c0_i32_2 : i32, i32, i32, i32
  }
  func.func @transform_6(%arg0: i32) -> (i32, i32, i32, i32) {
    %c0_i32 = arith.constant 0 : i32
    %c0_i32_0 = arith.constant 0 : i32
    %c0_i32_1 = arith.constant 0 : i32
    %c0_i32_2 = arith.constant 0 : i32
    return %arg0, %c0_i32, %c0_i32_0, %c0_i32_1 : i32, i32, i32, i32
  }
  func.func @transform_7(%arg0: i32) -> (i32, i32, i32, i32) {
    %c0_i32 = arith.constant 0 : i32
    %c0_i32_0 = arith.constant 0 : i32
    %c0_i32_1 = arith.constant 0 : i32
    %c0_i32_2 = arith.constant 0 : i32
    return %arg0, %c0_i32, %c0_i32_0, %c0_i32_1 : i32, i32, i32, i32
  }
}

module attributes {stable_mosaic.version = 11 : i64} {
  func.func @fno_pointwise_kernel(%arg0: i32, %arg1: memref<1x4x256xf32, #tpu.memory_space<vmem>>, %arg2: memref<1x4x256xf32, #tpu.memory_space<vmem>>, %arg3: memref<1x16x1xf32, #tpu.memory_space<vmem>>, %arg4: memref<1x16x1xf32, #tpu.memory_space<vmem>>, %arg5: memref<4x4xf32, #tpu.memory_space<vmem>>, %arg6: memref<4x1xf32, #tpu.memory_space<vmem>>, %arg7: memref<4x16xf32, #tpu.memory_space<vmem>>, %arg8: memref<4x1xf32, #tpu.memory_space<vmem>>, %arg9: memref<4x4xf32, #tpu.memory_space<vmem>>, %arg10: memref<4x1xf32, #tpu.memory_space<vmem>>, %arg11: memref<4x16xf32, #tpu.memory_space<vmem>>, %arg12: memref<4x1xf32, #tpu.memory_space<vmem>>, %arg13: memref<4x4xf32, #tpu.memory_space<vmem>>, %arg14: memref<4x1xf32, #tpu.memory_space<vmem>>, %arg15: memref<1x4x256xf32, #tpu.memory_space<vmem>>) attributes {dimension_semantics = [#tpu.dimension_semantics<parallel>], iteration_bounds = array<i64: 2>, scalar_prefetch = 0 : i64, scratch_operands = 0 : i64, tpu.core_type = #tpu.core_type<tc>, window_params = [{transform_indices = @transform_0, window_bounds = array<i64: 1, 4, 256>}, {transform_indices = @transform_1, window_bounds = array<i64: 1, 4, 256>}, {transform_indices = @transform_2, window_bounds = array<i64: 1, 16, 1>}, {transform_indices = @transform_3, window_bounds = array<i64: 1, 16, 1>}, {pipeline_mode = #tpu.pipeline_mode<synchronous>, transform_indices = @transform_4, window_bounds = array<i64: 4, 4>}, {pipeline_mode = #tpu.pipeline_mode<synchronous>, transform_indices = @transform_5, window_bounds = array<i64: 4, 1>}, {pipeline_mode = #tpu.pipeline_mode<synchronous>, transform_indices = @transform_6, window_bounds = array<i64: 4, 16>}, {pipeline_mode = #tpu.pipeline_mode<synchronous>, transform_indices = @transform_7, window_bounds = array<i64: 4, 1>}, {pipeline_mode = #tpu.pipeline_mode<synchronous>, transform_indices = @transform_8, window_bounds = array<i64: 4, 4>}, {pipeline_mode = #tpu.pipeline_mode<synchronous>, transform_indices = @transform_9, window_bounds = array<i64: 4, 1>}, {pipeline_mode = #tpu.pipeline_mode<synchronous>, transform_indices = @transform_10, window_bounds = array<i64: 4, 16>}, {pipeline_mode = #tpu.pipeline_mode<synchronous>, transform_indices = @transform_11, window_bounds = array<i64: 4, 1>}, {pipeline_mode = #tpu.pipeline_mode<synchronous>, transform_indices = @transform_12, window_bounds = array<i64: 4, 4>}, {pipeline_mode = #tpu.pipeline_mode<synchronous>, transform_indices = @transform_13, window_bounds = array<i64: 4, 1>}, {transform_indices = @transform_14, window_bounds = array<i64: 1, 4, 256>}]} {
    %c0 = arith.constant 0 : index
    %c0_0 = arith.constant 0 : index
    %c0_1 = arith.constant 0 : index
    %0 = vector.load %arg3[%c0, %c0_0, %c0_1] : memref<1x16x1xf32, #tpu.memory_space<vmem>>, vector<1x16x1xf32>
    %1 = vector.shape_cast %0 : vector<1x16x1xf32> to vector<16x1xf32>
    %c0_2 = arith.constant 0 : index
    %c0_3 = arith.constant 0 : index
    %c0_4 = arith.constant 0 : index
    %2 = vector.load %arg4[%c0_2, %c0_3, %c0_4] : memref<1x16x1xf32, #tpu.memory_space<vmem>>, vector<1x16x1xf32>
    %3 = vector.shape_cast %2 : vector<1x16x1xf32> to vector<16x1xf32>
    %c0_5 = arith.constant 0 : index
    %c0_6 = arith.constant 0 : index
    %4 = vector.load %arg7[%c0_5, %c0_6] : memref<4x16xf32, #tpu.memory_space<vmem>>, vector<4x16xf32>
    %cst = arith.constant dense<0.000000e+00> : vector<4x1xf32>
    %5 = tpu.matmul %4, %1, %cst {dimension_numbers = #tpu.dot_dimension_numbers<[1], [0], [0], [1], [0, 0, 1, 1], [], []>, precision = #tpu.contract_precision<fp32>} : vector<4x16xf32>, vector<16x1xf32>, vector<4x1xf32> -> vector<4x1xf32>
    %c0_7 = arith.constant 0 : index
    %c0_8 = arith.constant 0 : index
    %6 = vector.load %arg8[%c0_7, %c0_8] : memref<4x1xf32, #tpu.memory_space<vmem>>, vector<4x1xf32>
    %7 = arith.addf %5, %6 : vector<4x1xf32>
    %cst_9 = arith.constant 5.000000e-01 : f32
    %8 = vector.broadcast %cst_9 : f32 to vector<4x1xf32>
    %9 = arith.mulf %8, %7 : vector<4x1xf32>
    %cst_10 = arith.constant 4.471500e-02 : f32
    %10 = vector.broadcast %cst_10 : f32 to vector<4x1xf32>
    %11 = arith.mulf %10, %7 : vector<4x1xf32>
    %12 = arith.mulf %11, %7 : vector<4x1xf32>
    %13 = arith.mulf %12, %7 : vector<4x1xf32>
    %14 = arith.addf %7, %13 : vector<4x1xf32>
    %cst_11 = arith.constant 0.797884583 : f32
    %15 = vector.broadcast %cst_11 : f32 to vector<4x1xf32>
    %16 = arith.mulf %15, %14 : vector<4x1xf32>
    %17 = math.tanh %16 : vector<4x1xf32>
    %cst_12 = arith.constant 1.000000e+00 : f32
    %18 = vector.broadcast %cst_12 : f32 to vector<4x1xf32>
    %19 = arith.addf %18, %17 : vector<4x1xf32>
    %20 = arith.mulf %9, %19 : vector<4x1xf32>
    %c0_13 = arith.constant 0 : index
    %c0_14 = arith.constant 0 : index
    %21 = vector.load %arg9[%c0_13, %c0_14] : memref<4x4xf32, #tpu.memory_space<vmem>>, vector<4x4xf32>
    %cst_15 = arith.constant dense<0.000000e+00> : vector<4x1xf32>
    %22 = tpu.matmul %21, %20, %cst_15 {dimension_numbers = #tpu.dot_dimension_numbers<[1], [0], [0], [1], [0, 0, 1, 1], [], []>, precision = #tpu.contract_precision<fp32>} : vector<4x4xf32>, vector<4x1xf32>, vector<4x1xf32> -> vector<4x1xf32>
    %c0_16 = arith.constant 0 : index
    %c0_17 = arith.constant 0 : index
    %23 = vector.load %arg10[%c0_16, %c0_17] : memref<4x1xf32, #tpu.memory_space<vmem>>, vector<4x1xf32>
    %24 = arith.addf %22, %23 : vector<4x1xf32>
    %c0_18 = arith.constant 0 : index
    %c0_19 = arith.constant 0 : index
    %25 = vector.load %arg11[%c0_18, %c0_19] : memref<4x16xf32, #tpu.memory_space<vmem>>, vector<4x16xf32>
    %cst_20 = arith.constant dense<0.000000e+00> : vector<4x1xf32>
    %26 = tpu.matmul %25, %3, %cst_20 {dimension_numbers = #tpu.dot_dimension_numbers<[1], [0], [0], [1], [0, 0, 1, 1], [], []>, precision = #tpu.contract_precision<fp32>} : vector<4x16xf32>, vector<16x1xf32>, vector<4x1xf32> -> vector<4x1xf32>
    %c0_21 = arith.constant 0 : index
    %c0_22 = arith.constant 0 : index
    %27 = vector.load %arg12[%c0_21, %c0_22] : memref<4x1xf32, #tpu.memory_space<vmem>>, vector<4x1xf32>
    %28 = arith.addf %26, %27 : vector<4x1xf32>
    %cst_23 = arith.constant 0.000000e+00 : f32
    %29 = vector.broadcast %cst_23 : f32 to vector<4x1xf32>
    %30 = arith.subf %29, %28 : vector<4x1xf32>
    %31 = math.exp %30 : vector<4x1xf32>
    %cst_24 = arith.constant 1.000000e+00 : f32
    %32 = vector.broadcast %cst_24 : f32 to vector<4x1xf32>
    %33 = arith.addf %32, %31 : vector<4x1xf32>
    %34 = tpu.reciprocal %33 : vector<4x1xf32> -> vector<4x1xf32>
    %35 = arith.mulf %28, %34 : vector<4x1xf32>
    %c0_25 = arith.constant 0 : index
    %c0_26 = arith.constant 0 : index
    %36 = vector.load %arg13[%c0_25, %c0_26] : memref<4x4xf32, #tpu.memory_space<vmem>>, vector<4x4xf32>
    %cst_27 = arith.constant dense<0.000000e+00> : vector<4x1xf32>
    %37 = tpu.matmul %36, %35, %cst_27 {dimension_numbers = #tpu.dot_dimension_numbers<[1], [0], [0], [1], [0, 0, 1, 1], [], []>, precision = #tpu.contract_precision<fp32>} : vector<4x4xf32>, vector<4x1xf32>, vector<4x1xf32> -> vector<4x1xf32>
    %c0_28 = arith.constant 0 : index
    %c0_29 = arith.constant 0 : index
    %38 = vector.load %arg14[%c0_28, %c0_29] : memref<4x1xf32, #tpu.memory_space<vmem>>, vector<4x1xf32>
    %39 = arith.addf %37, %38 : vector<4x1xf32>
    %40 = arith.addf %24, %39 : vector<4x1xf32>
    %c0_30 = arith.constant 0 : index
    %c0_31 = arith.constant 0 : index
    %41 = vector.load %arg6[%c0_30, %c0_31] : memref<4x1xf32, #tpu.memory_space<vmem>>, vector<4x1xf32>
    %42 = arith.addf %40, %41 : vector<4x1xf32>
    %c0_32 = arith.constant 0 : index
    %c0_33 = arith.constant 0 : index
    %43 = vector.load %arg5[%c0_32, %c0_33] : memref<4x4xf32, #tpu.memory_space<vmem>>, vector<4x4xf32>
    %c0_34 = arith.constant 0 : index
    %c0_35 = arith.constant 0 : index
    %c0_36 = arith.constant 0 : index
    %44 = vector.load %arg1[%c0_34, %c0_35, %c0_36] : memref<1x4x256xf32, #tpu.memory_space<vmem>>, vector<1x4x256xf32>
    %45 = vector.shape_cast %44 : vector<1x4x256xf32> to vector<4x256xf32>
    %cst_37 = arith.constant dense<0.000000e+00> : vector<4x256xf32>
    %46 = tpu.matmul %43, %45, %cst_37 {dimension_numbers = #tpu.dot_dimension_numbers<[1], [0], [0], [1], [0, 0, 1, 1], [], []>, precision = #tpu.contract_precision<fp32>} : vector<4x4xf32>, vector<4x256xf32>, vector<4x256xf32> -> vector<4x256xf32>
    %47 = vector.broadcast %42 : vector<4x1xf32> to vector<4x256xf32>
    %48 = arith.addf %46, %47 : vector<4x256xf32>
    %c0_38 = arith.constant 0 : index
    %c0_39 = arith.constant 0 : index
    %c0_40 = arith.constant 0 : index
    %49 = vector.load %arg2[%c0_38, %c0_39, %c0_40] : memref<1x4x256xf32, #tpu.memory_space<vmem>>, vector<1x4x256xf32>
    %50 = vector.shape_cast %49 : vector<1x4x256xf32> to vector<4x256xf32>
    %51 = arith.addf %48, %50 : vector<4x256xf32>
    %cst_41 = arith.constant 5.000000e-01 : f32
    %52 = vector.broadcast %cst_41 : f32 to vector<4x256xf32>
    %53 = arith.mulf %52, %51 : vector<4x256xf32>
    %cst_42 = arith.constant 4.471500e-02 : f32
    %54 = vector.broadcast %cst_42 : f32 to vector<4x256xf32>
    %55 = arith.mulf %54, %51 : vector<4x256xf32>
    %56 = arith.mulf %55, %51 : vector<4x256xf32>
    %57 = arith.mulf %56, %51 : vector<4x256xf32>
    %58 = arith.addf %51, %57 : vector<4x256xf32>
    %cst_43 = arith.constant 0.797884583 : f32
    %59 = vector.broadcast %cst_43 : f32 to vector<4x256xf32>
    %60 = arith.mulf %59, %58 : vector<4x256xf32>
    %61 = math.tanh %60 : vector<4x256xf32>
    %cst_44 = arith.constant 1.000000e+00 : f32
    %62 = vector.broadcast %cst_44 : f32 to vector<4x256xf32>
    %63 = arith.addf %62, %61 : vector<4x256xf32>
    %64 = arith.mulf %53, %63 : vector<4x256xf32>
    %c0_45 = arith.constant 0 : index
    %c0_46 = arith.constant 0 : index
    %c0_47 = arith.constant 0 : index
    %65 = vector.load %arg15[%c0_45, %c0_46, %c0_47] : memref<1x4x256xf32, #tpu.memory_space<vmem>>, vector<1x4x256xf32>
    %66 = vector.shape_cast %65 : vector<1x4x256xf32> to vector<4x256xf32>
    %67 = vector.shape_cast %64 : vector<4x256xf32> to vector<1x4x256xf32>
    tpu.vector_store %arg15[%c0_45, %c0_46, %c0_47], %67 {strides = array<i32>} : memref<1x4x256xf32, #tpu.memory_space<vmem>>, vector<1x4x256xf32>,
    return
  }
  func.func @transform_0(%arg0: i32) -> (i32, i32, i32) {
    %c0_i32 = arith.constant 0 : i32
    %c0_i32_0 = arith.constant 0 : i32
    %c0_i32_1 = arith.constant 0 : i32
    return %arg0, %c0_i32, %c0_i32_0 : i32, i32, i32
  }
  func.func @transform_1(%arg0: i32) -> (i32, i32, i32) {
    %c0_i32 = arith.constant 0 : i32
    %c0_i32_0 = arith.constant 0 : i32
    %c0_i32_1 = arith.constant 0 : i32
    return %arg0, %c0_i32, %c0_i32_0 : i32, i32, i32
  }
  func.func @transform_2(%arg0: i32) -> (i32, i32, i32) {
    %c0_i32 = arith.constant 0 : i32
    %c0_i32_0 = arith.constant 0 : i32
    %c0_i32_1 = arith.constant 0 : i32
    return %arg0, %c0_i32, %c0_i32_0 : i32, i32, i32
  }
  func.func @transform_3(%arg0: i32) -> (i32, i32, i32) {
    %c0_i32 = arith.constant 0 : i32
    %c0_i32_0 = arith.constant 0 : i32
    %c0_i32_1 = arith.constant 0 : i32
    return %arg0, %c0_i32, %c0_i32_0 : i32, i32, i32
  }
  func.func @transform_4(%arg0: i32) -> (i32, i32) {
    %c0_i32 = arith.constant 0 : i32
    %c0_i32_0 = arith.constant 0 : i32
    %c0_i32_1 = arith.constant 0 : i32
    return %c0_i32, %c0_i32_0 : i32, i32
  }
  func.func @transform_5(%arg0: i32) -> (i32, i32) {
    %c0_i32 = arith.constant 0 : i32
    %c0_i32_0 = arith.constant 0 : i32
    %c0_i32_1 = arith.constant 0 : i32
    return %c0_i32, %c0_i32_0 : i32, i32
  }
  func.func @transform_6(%arg0: i32) -> (i32, i32) {
    %c0_i32 = arith.constant 0 : i32
    %c0_i32_0 = arith.constant 0 : i32
    %c0_i32_1 = arith.constant 0 : i32
    return %c0_i32, %c0_i32_0 : i32, i32
  }
  func.func @transform_7(%arg0: i32) -> (i32, i32) {
    %c0_i32 = arith.constant 0 : i32
    %c0_i32_0 = arith.constant 0 : i32
    %c0_i32_1 = arith.constant 0 : i32
    return %c0_i32, %c0_i32_0 : i32, i32
  }
  func.func @transform_8(%arg0: i32) -> (i32, i32) {
    %c0_i32 = arith.constant 0 : i32
    %c0_i32_0 = arith.constant 0 : i32
    %c0_i32_1 = arith.constant 0 : i32
    return %c0_i32, %c0_i32_0 : i32, i32
  }
  func.func @transform_9(%arg0: i32) -> (i32, i32) {
    %c0_i32 = arith.constant 0 : i32
    %c0_i32_0 = arith.constant 0 : i32
    %c0_i32_1 = arith.constant 0 : i32
    return %c0_i32, %c0_i32_0 : i32, i32
  }
  func.func @transform_10(%arg0: i32) -> (i32, i32) {
    %c0_i32 = arith.constant 0 : i32
    %c0_i32_0 = arith.constant 0 : i32
    %c0_i32_1 = arith.constant 0 : i32
    return %c0_i32, %c0_i32_0 : i32, i32
  }
  func.func @transform_11(%arg0: i32) -> (i32, i32) {
    %c0_i32 = arith.constant 0 : i32
    %c0_i32_0 = arith.constant 0 : i32
    %c0_i32_1 = arith.constant 0 : i32
    return %c0_i32, %c0_i32_0 : i32, i32
  }
  func.func @transform_12(%arg0: i32) -> (i32, i32) {
    %c0_i32 = arith.constant 0 : i32
    %c0_i32_0 = arith.constant 0 : i32
    %c0_i32_1 = arith.constant 0 : i32
    return %c0_i32, %c0_i32_0 : i32, i32
  }
  func.func @transform_13(%arg0: i32) -> (i32, i32) {
    %c0_i32 = arith.constant 0 : i32
    %c0_i32_0 = arith.constant 0 : i32
    %c0_i32_1 = arith.constant 0 : i32
    return %c0_i32, %c0_i32_0 : i32, i32
  }
  func.func @transform_14(%arg0: i32) -> (i32, i32, i32) {
    %c0_i32 = arith.constant 0 : i32
    %c0_i32_0 = arith.constant 0 : i32
    %c0_i32_1 = arith.constant 0 : i32
    return %arg0, %c0_i32, %c0_i32_0 : i32, i32, i32
  }
}

</mosaic_0001>

<llo_original>
// kernel: reverse.0
$region0: #{reverse.0}
  %s0 = inlined_call_operand.vmem [shape: f32[2,4,16,7], index: 0, kind: input, shape index: {}]
  %s1 = inlined_call_operand.vmem [shape: f32[2,4,16,7], index: 1, kind: output, shape index: {}]
  $region1: #{reverse.0} parent=0
    #allocation0 [shape = 'u8[65536]{0}', space=vmem, size = 0x10000, scoped, tag = 'operand span for operand 0']
    #allocation1 [shape = 'u8[32768]{0}', space=vmem, size = 0x8000, scoped, tag = 'operand span for operand 1']
    %s2 = scalar_lea.vmem [#allocation0], 8
    // Predicated region
    $region2: #{reverse.0} parent=1 // pred_check
      _
    $region3: #{reverse.0} parent=1 // pred_check_branch
      %4 = sbr.rel (0) target = $region5
    $region4: #{reverse.0} parent=1 // pred_region
      // Predicated region
      $region6: #{reverse.0} parent=4 // pred_check
        _
      $region7: #{reverse.0} parent=4 // pred_check_branch
        %6 = sbr.rel (0) target = $region9
      $region8: #{reverse.0} parent=4 // pred_region
        // Predicated region
        $region21: #{reverse.0} parent=8 // pred_check
          _
        $region22: #{reverse.0} parent=8 // pred_check_branch
          %35 = sbr.rel (0) target = $region24
        $region23: #{reverse.0} parent=8 // pred_region
          loop: start=0, step=1, limit=1
          $region25: #{reverse.0} parent=23 // loop_pre_header
            _
          $region26: #{reverse.0} parent=23 // loop_header
            %s37 = sphi 0, %s41
            %p38 = scmp.ge.s32.totalorder %s37, 1
            %s42 = sphi %s0, %s0
            %s43 = sphi %s2, %s2
          $region27: #{reverse.0} parent=23 // loop_header_branch
            %40 = sbr.rel (%p38) target = $region31
          $region28: #{reverse.0} parent=23 // loop_body
            %v44 = vld [vmem:[%s42] sm:$0xff]
            %45 = vst [vmem:[%s43] sm:$0xff] %v44
            %v46 = vld [vmem:[%s42 + $0x8] sm:$0xff]
            %47 = vst [vmem:[%s43 + $0x10] sm:$0xff] %v46
            %v48 = vld [vmem:[%s42 + $0x10] sm:$0xff]
            %49 = vst [vmem:[%s43 + $0x20] sm:$0xff] %v48
            %v50 = vld [vmem:[%s42 + $0x18] sm:$0xff]
            %51 = vst [vmem:[%s43 + $0x30] sm:$0xff] %v50
            %v52 = vld [vmem:[%s42 + $0x20] sm:$0xff]
            %53 = vst [vmem:[%s43 + $0x40] sm:$0xff] %v52
            %v54 = vld [vmem:[%s42 + $0x28] sm:$0xff]
            %55 = vst [vmem:[%s43 + $0x50] sm:$0xff] %v54
            %v56 = vld [vmem:[%s42 + $0x30] sm:$0xff]
            %57 = vst [vmem:[%s43 + $0x60] sm:$0xff] %v56
            %v58 = vld [vmem:[%s42 + $0x38] sm:$0xff]
            %59 = vst [vmem:[%s43 + $0x70] sm:$0xff] %v58
          $region29: #{reverse.0} parent=23 // loop_footer
            %s41 = sadd.s32 1, %s37
          $region30: #{reverse.0} parent=23 // loop_footer_branch
            %36 = sbr.rel target = $region26
          $region31: #{reverse.0} parent=23 // loop_exit
            _
        $region24: #{reverse.0} parent=8 // pred_fallthru
          _
        // Predicated region
        $region32: #{reverse.0} parent=8 // pred_check
          _
        $region33: #{reverse.0} parent=8 // pred_check_branch
          %61 = sbr.rel target = $region35
        $region34: #{reverse.0} parent=8 // pred_region
          _
        $region35: #{reverse.0} parent=8 // pred_fallthru
          _
      $region9: #{reverse.0} parent=4 // pred_fallthru
        _
      // Predicated region
      $region10: #{reverse.0} parent=4 // pred_check
        _
      $region11: #{reverse.0} parent=4 // pred_check_branch
        %8 = sbr.rel target = $region13
      $region12: #{reverse.0} parent=4 // pred_region
        loop: start=0, step=1, limit=1
        $region14: #{reverse.0} parent=12 // loop_pre_header
          _
        $region15: #{reverse.0} parent=12 // loop_header
          %s11 = sphi 0, %s15
          %p12 = scmp.ge.s32.totalorder %s11, 1
          %s16 = sphi %s0, %s0
          %s17 = sphi %s2, %s2
        $region16: #{reverse.0} parent=12 // loop_header_branch
          %14 = sbr.rel (%p12) target = $region20
        $region17: #{reverse.0} parent=12 // loop_body
          %v18 = vld [vmem:[%s16] sm:$0xff]
          %19 = vst [vmem:[%s17] sm:$0xff] %v18
          %v20 = vld [vmem:[%s16 + $0x8] sm:$0xff]
          %21 = vst [vmem:[%s17 + $0x10] sm:$0xff] %v20
          %v22 = vld [vmem:[%s16 + $0x10] sm:$0xff]
          %23 = vst [vmem:[%s17 + $0x20] sm:$0xff] %v22
          %v24 = vld [vmem:[%s16 + $0x18] sm:$0xff]
          %25 = vst [vmem:[%s17 + $0x30] sm:$0xff] %v24
          %v26 = vld [vmem:[%s16 + $0x20] sm:$0xff]
          %27 = vst [vmem:[%s17 + $0x40] sm:$0xff] %v26
          %v28 = vld [vmem:[%s16 + $0x28] sm:$0xff]
          %29 = vst [vmem:[%s17 + $0x50] sm:$0xff] %v28
          %v30 = vld [vmem:[%s16 + $0x30] sm:$0xff]
          %31 = vst [vmem:[%s17 + $0x60] sm:$0xff] %v30
          %v32 = vld [vmem:[%s16 + $0x38] sm:$0xff]
          %33 = vst [vmem:[%s17 + $0x70] sm:$0xff] %v32
        $region18: #{reverse.0} parent=12 // loop_footer
          %s15 = sadd.s32 1, %s11
        $region19: #{reverse.0} parent=12 // loop_footer_branch
          %10 = sbr.rel target = $region15
        $region20: #{reverse.0} parent=12 // loop_exit
          _
      $region13: #{reverse.0} parent=4 // pred_fallthru
        _
    $region5: #{reverse.0} parent=1 // pred_fallthru
      _
    %62 = vnop
    %s63 = scalar_lea.vmem [#allocation0], 7
    %v64 = vld [vmem:[%s63] ss:$-1 sm:$0xff]
    %v65 = vrot.slane %v64, 1
    %66 = vst [vmem:[#allocation1] sm:$0xff] %v65
    %s67 = scalar_lea.vmem [#allocation0], 8
    %s68 = scalar_lea.vmem %s67, 7 [#allocation0]
    %v69 = vld [vmem:[%s68] ss:$-1 sm:$0xff]
    %v70 = vrot.slane %v69, 1
    %v71 = vlaneseq
    %v72 = vshrl.u32 %v71, 7
    %vm73 = vcmp.lt.s32.totalorder %v72, 7
    %74 = vst.msk [vmem:[#allocation1] sm:$0xff] %vm73, %v70
    %s75 = scalar_lea.vmem [#allocation1], 8
    %s76 = scalar_lea.vmem [#allocation0], 16
    %s77 = scalar_lea.vmem %s76, 7 [#allocation0]
    %v78 = vld [vmem:[%s77] ss:$-1 sm:$0xff]
    %v79 = vrot.slane %v78, 1
    %80 = vst [vmem:[%s75] sm:$0xff] %v79
    %s81 = scalar_lea.vmem %s76, 8 [#allocation0]
    %s82 = scalar_lea.vmem %s81, 7 [#allocation0]
    %v83 = vld [vmem:[%s82] ss:$-1 sm:$0xff]
    %v84 = vrot.slane %v83, 1
    %v85 = vlaneseq
    %v86 = vshrl.u32 %v85, 7
    %vm87 = vcmp.lt.s32.totalorder %v86, 7
    %88 = vst.msk [vmem:[%s75] sm:$0xff] %vm87, %v84
    %s89 = scalar_lea.vmem [#allocation1], 16
    %s90 = scalar_lea.vmem [#allocation0], 32
    %s91 = scalar_lea.vmem %s90, 7 [#allocation0]
    %v92 = vld [vmem:[%s91] ss:$-1 sm:$0xff]
    %v93 = vrot.slane %v92, 1
    %94 = vst [vmem:[%s89] sm:$0xff] %v93
    %s95 = scalar_lea.vmem %s90, 8 [#allocation0]
    %s96 = scalar_lea.vmem %s95, 7 [#allocation0]
    %v97 = vld [vmem:[%s96] ss:$-1 sm:$0xff]
    %v98 = vrot.slane %v97, 1
    %v99 = vlaneseq
    %v100 = vshrl.u32 %v99, 7
    %vm101 = vcmp.lt.s32.totalorder %v100, 7
    %102 = vst.msk [vmem:[%s89] sm:$0xff] %vm101, %v98
    %s103 = scalar_lea.vmem [#allocation1], 24
    %s104 = scalar_lea.vmem [#allocation0], 48
    %s105 = scalar_lea.vmem %s104, 7 [#allocation0]
    %v106 = vld [vmem:[%s105] ss:$-1 sm:$0xff]
    %v107 = vrot.slane %v106, 1
    %108 = vst [vmem:[%s103] sm:$0xff] %v107
    %s109 = scalar_lea.vmem %s104, 8 [#allocation0]
    %s110 = scalar_lea.vmem %s109, 7 [#allocation0]
    %v111 = vld [vmem:[%s110] ss:$-1 sm:$0xff]
    %v112 = vrot.slane %v111, 1
    %v113 = vlaneseq
    %v114 = vshrl.u32 %v113, 7
    %vm115 = vcmp.lt.s32.totalorder %v114, 7
    %116 = vst.msk [vmem:[%s103] sm:$0xff] %vm115, %v112
    %s117 = scalar_lea.vmem [#allocation1], 32
    %s118 = scalar_lea.vmem [#allocation0], 64
    %s119 = scalar_lea.vmem %s118, 7 [#allocation0]
    %v120 = vld [vmem:[%s119] ss:$-1 sm:$0xff]
    %v121 = vrot.slane %v120, 1
    %122 = vst [vmem:[%s117] sm:$0xff] %v121
    %s123 = scalar_lea.vmem %s118, 8 [#allocation0]
    %s124 = scalar_lea.vmem %s123, 7 [#allocation0]
    %v125 = vld [vmem:[%s124] ss:$-1 sm:$0xff]
    %v126 = vrot.slane %v125, 1
    %v127 = vlaneseq
    %v128 = vshrl.u32 %v127, 7
    %vm129 = vcmp.lt.s32.totalorder %v128, 7
    %130 = vst.msk [vmem:[%s117] sm:$0xff] %vm129, %v126
    %s131 = scalar_lea.vmem [#allocation1], 40
    %s132 = scalar_lea.vmem [#allocation0], 80
    %s133 = scalar_lea.vmem %s132, 7 [#allocation0]
    %v134 = vld [vmem:[%s133] ss:$-1 sm:$0xff]
    %v135 = vrot.slane %v134, 1
    %136 = vst [vmem:[%s131] sm:$0xff] %v135
    %s137 = scalar_lea.vmem %s132, 8 [#allocation0]
    %s138 = scalar_lea.vmem %s137, 7 [#allocation0]
    %v139 = vld [vmem:[%s138] ss:$-1 sm:$0xff]
    %v140 = vrot.slane %v139, 1
    %v141 = vlaneseq
    %v142 = vshrl.u32 %v141, 7
    %vm143 = vcmp.lt.s32.totalorder %v142, 7
    %144 = vst.msk [vmem:[%s131] sm:$0xff] %vm143, %v140
    %s145 = scalar_lea.vmem [#allocation1], 48
    %s146 = scalar_lea.vmem [#allocation0], 96
    %s147 = scalar_lea.vmem %s146, 7 [#allocation0]
    %v148 = vld [vmem:[%s147] ss:$-1 sm:$0xff]
    %v149 = vrot.slane %v148, 1
    %150 = vst [vmem:[%s145] sm:$0xff] %v149
    %s151 = scalar_lea.vmem %s146, 8 [#allocation0]
    %s152 = scalar_lea.vmem %s151, 7 [#allocation0]
    %v153 = vld [vmem:[%s152] ss:$-1 sm:$0xff]
    %v154 = vrot.slane %v153, 1
    %v155 = vlaneseq
    %v156 = vshrl.u32 %v155, 7
    %vm157 = vcmp.lt.s32.totalorder %v156, 7
    %158 = vst.msk [vmem:[%s145] sm:$0xff] %vm157, %v154
    %s159 = scalar_lea.vmem [#allocation1], 56
    %s160 = scalar_lea.vmem [#allocation0], 112
    %s161 = scalar_lea.vmem %s160, 7 [#allocation0]
    %v162 = vld [vmem:[%s161] ss:$-1 sm:$0xff]
    %v163 = vrot.slane %v162, 1
    %164 = vst [vmem:[%s159] sm:$0xff] %v163
    %s165 = scalar_lea.vmem %s160, 8 [#allocation0]
    %s166 = scalar_lea.vmem %s165, 7 [#allocation0]
    %v167 = vld [vmem:[%s166] ss:$-1 sm:$0xff]
    %v168 = vrot.slane %v167, 1
    %v169 = vlaneseq
    %v170 = vshrl.u32 %v169, 7
    %vm171 = vcmp.lt.s32.totalorder %v170, 7
    %172 = vst.msk [vmem:[%s159] sm:$0xff] %vm171, %v168
    // Predicated region
    $region36: #{reverse.0} parent=1 // pred_check
      _
    $region37: #{reverse.0} parent=1 // pred_check_branch
      %174 = sbr.rel (0) target = $region39
    $region38: #{reverse.0} parent=1 // pred_region
      // Predicated region
      $region40: #{reverse.0} parent=38 // pred_check
        _
      $region41: #{reverse.0} parent=38 // pred_check_branch
        %176 = sbr.rel (0) target = $region43
      $region42: #{reverse.0} parent=38 // pred_region
        // Predicated region
        $region55: #{reverse.0} parent=42 // pred_check
          _
        $region56: #{reverse.0} parent=42 // pred_check_branch
          %205 = sbr.rel (0) target = $region58
        $region57: #{reverse.0} parent=42 // pred_region
          loop: start=0, step=1, limit=1
          $region59: #{reverse.0} parent=57 // loop_pre_header
            _
          $region60: #{reverse.0} parent=57 // loop_header
            %s207 = sphi 0, %s211
            %p208 = scmp.ge.s32.totalorder %s207, 1
            %s212 = sphi [#allocation1], [#allocation1]
            %s213 = sphi %s1, %s1
          $region61: #{reverse.0} parent=57 // loop_header_branch
            %210 = sbr.rel (%p208) target = $region65
          $region62: #{reverse.0} parent=57 // loop_body
            %v214 = vld [vmem:[%s212] sm:$0xff]
            %215 = vst [vmem:[%s213] sm:$0xff] %v214
            %v216 = vld [vmem:[%s212 + $0x8] sm:$0xff]
            %217 = vst [vmem:[%s213 + $0x8] sm:$0xff] %v216
            %v218 = vld [vmem:[%s212 + $0x10] sm:$0xff]
            %219 = vst [vmem:[%s213 + $0x10] sm:$0xff] %v218
            %v220 = vld [vmem:[%s212 + $0x18] sm:$0xff]
            %221 = vst [vmem:[%s213 + $0x18] sm:$0xff] %v220
            %v222 = vld [vmem:[%s212 + $0x20] sm:$0xff]
            %223 = vst [vmem:[%s213 + $0x20] sm:$0xff] %v222
            %v224 = vld [vmem:[%s212 + $0x28] sm:$0xff]
            %225 = vst [vmem:[%s213 + $0x28] sm:$0xff] %v224
            %v226 = vld [vmem:[%s212 + $0x30] sm:$0xff]
            %227 = vst [vmem:[%s213 + $0x30] sm:$0xff] %v226
            %v228 = vld [vmem:[%s212 + $0x38] sm:$0xff]
            %229 = vst [vmem:[%s213 + $0x38] sm:$0xff] %v228
          $region63: #{reverse.0} parent=57 // loop_footer
            %s211 = sadd.s32 1, %s207
          $region64: #{reverse.0} parent=57 // loop_footer_branch
            %206 = sbr.rel target = $region60
          $region65: #{reverse.0} parent=57 // loop_exit
            _
        $region58: #{reverse.0} parent=42 // pred_fallthru
          _
        // Predicated region
        $region66: #{reverse.0} parent=42 // pred_check
          _
        $region67: #{reverse.0} parent=42 // pred_check_branch
          %231 = sbr.rel target = $region69
        $region68: #{reverse.0} parent=42 // pred_region
          _
        $region69: #{reverse.0} parent=42 // pred_fallthru
          _
      $region43: #{reverse.0} parent=38 // pred_fallthru
        _
      // Predicated region
      $region44: #{reverse.0} parent=38 // pred_check
        _
      $region45: #{reverse.0} parent=38 // pred_check_branch
        %178 = sbr.rel target = $region47
      $region46: #{reverse.0} parent=38 // pred_region
        loop: start=0, step=1, limit=1
        $region48: #{reverse.0} parent=46 // loop_pre_header
          _
        $region49: #{reverse.0} parent=46 // loop_header
          %s181 = sphi 0, %s185
          %p182 = scmp.ge.s32.totalorder %s181, 1
          %s186 = sphi [#allocation1], [#allocation1]
          %s187 = sphi %s1, %s1
        $region50: #{reverse.0} parent=46 // loop_header_branch
          %184 = sbr.rel (%p182) target = $region54
        $region51: #{reverse.0} parent=46 // loop_body
          %v188 = vld [vmem:[%s186] sm:$0xff]
          %189 = vst [vmem:[%s187] sm:$0xff] %v188
          %v190 = vld [vmem:[%s186 + $0x8] sm:$0xff]
          %191 = vst [vmem:[%s187 + $0x8] sm:$0xff] %v190
          %v192 = vld [vmem:[%s186 + $0x10] sm:$0xff]
          %193 = vst [vmem:[%s187 + $0x10] sm:$0xff] %v192
          %v194 = vld [vmem:[%s186 + $0x18] sm:$0xff]
          %195 = vst [vmem:[%s187 + $0x18] sm:$0xff] %v194
          %v196 = vld [vmem:[%s186 + $0x20] sm:$0xff]
          %197 = vst [vmem:[%s187 + $0x20] sm:$0xff] %v196
          %v198 = vld [vmem:[%s186 + $0x28] sm:$0xff]
          %199 = vst [vmem:[%s187 + $0x28] sm:$0xff] %v198
          %v200 = vld [vmem:[%s186 + $0x30] sm:$0xff]
          %201 = vst [vmem:[%s187 + $0x30] sm:$0xff] %v200
          %v202 = vld [vmem:[%s186 + $0x38] sm:$0xff]
          %203 = vst [vmem:[%s187 + $0x38] sm:$0xff] %v202
        $region52: #{reverse.0} parent=46 // loop_footer
          %s185 = sadd.s32 1, %s181
        $region53: #{reverse.0} parent=46 // loop_footer_branch
          %180 = sbr.rel target = $region49
        $region54: #{reverse.0} parent=46 // loop_exit
          _
      $region47: #{reverse.0} parent=38 // pred_fallthru
        _
    $region39: #{reverse.0} parent=1 // pred_fallthru
      _
    %232 = vnop

// kernel: fno_block_t_theta.2
$region0: #{fno_block_t_theta.2}
  #allocation0 [shape = 'u32[]', space=smem, size = 0x4, offset = 0x4, fixed_abs, tag = 'smem constant byte address 0x4 - core index']
  #allocation1 [shape = 'u32[144,128]{1,0:T(1,128)}', space=vmem, size = 0x12000, scoped, tag = 'internal scratch']
  %s0 = inlined_call_operand.vmem [shape: f32[2,4,16,9], index: 0, kind: input, shape index: {}]
  %s1 = inlined_call_operand.vmem [shape: f32[2,4,16,9], index: 1, kind: input, shape index: {}]
  %s2 = inlined_call_operand.vmem [shape: f32[4,4,4,4], index: 2, kind: input, shape index: {}]
  %s3 = inlined_call_operand.vmem [shape: f32[4,4,4,4], index: 3, kind: input, shape index: {}]
  %s4 = inlined_call_operand.vmem [shape: f32[4,4,4,4], index: 4, kind: input, shape index: {}]
  %s5 = inlined_call_operand.vmem [shape: f32[4,4,4,4], index: 5, kind: input, shape index: {}]
  %s6 = inlined_call_operand.vmem [shape: f32[2,4,16,9], index: 6, kind: output, shape index: {0}]
  %s7 = inlined_call_operand.vmem [shape: f32[2,4,16,9], index: 7, kind: output, shape index: {1}]
  %8 = xla_tuple %s6, %s7
  %s9 = sld [smem:[#allocation0]]
  $region65: #{fno_block_t_theta.2} parent=0
    _
  %s11 = ssub.s32 1, %s9
  %s12 = scalar_select 0, %s11, %s9
  loop: start=0, step=1, limit=4
  $region2: #{fno_block_t_theta.2} parent=0 // loop_pre_header
    _
  $region3: #{fno_block_t_theta.2} parent=0 // loop_header
    %s14 = sphi 0, %s18
    %p15 = scmp.ge.s32.totalorder %s14, 4
    %s24 = sphi 0, %s26
    %s27 = sphi 0, %s24
    %s28 = sphi 0, %s27
    %s44 = sphi 0, %s28
    %s50 = sphi 0, %s52
    %s53 = sphi 0, %s50
    %s54 = sphi 0, %s53
    %s70 = sphi 0, %s54
    %s74 = sphi 0, %s74
    %s76 = sphi 0, %s74
    %s77 = sphi 0, %s76
    %s91 = sphi 0, %s77
    %s95 = sphi 0, %s95
    %s97 = sphi 0, %s95
    %s98 = sphi 0, %s97
    %s112 = sphi 0, %s98
    %s116 = sphi 0, %s116
    %s118 = sphi 0, %s116
    %s119 = sphi 0, %s118
    %s133 = sphi 0, %s119
    %s137 = sphi 0, %s137
    %s139 = sphi 0, %s137
    %s140 = sphi 0, %s139
    %s154 = sphi 0, %s140
    %s160 = sphi 0, %s162
    %s163 = sphi 0, %s160
    %s164 = sphi 0, %s163
    %s180 = sphi 0, %s164
    %s186 = sphi 0, %s188
    %s189 = sphi 0, %s186
    %s190 = sphi 0, %s189
    %s206 = sphi 0, %s190
  $region4: #{fno_block_t_theta.2} parent=0 // loop_header_branch
    %17 = sbr.rel (%p15) target = $region8
  $region5: #{fno_block_t_theta.2} parent=0 // loop_body
    %s19 = ssub.s32 %s14, 1
    %s20 = ssub.s32 %s14, 2
    %s21 = sadd.s32 %s14, 1
    %s22 = ssub.s32 %s14, %s21
    %p23 = scmp.eq.s32.totalorder %s22, 0
    %s25 = sadd.s32 %s24, 1
    %s26 = scalar_select %p23, %s24, %s25
    %p29 = pneg %p23
    %p30 = scmp.eq.s32.totalorder %s14, 1
    %p31 = por %p29, %p30
    %p32 = scmp.ne.s32.totalorder %s24, %s27
    %p33 = scmp.eq.s32.totalorder %s14, 0
    %p34 = por %p32, %p33
    %p35 = scmp.ne.s32.totalorder %s24, %s27
    %p36 = scmp.eq.s32.totalorder %s19, 1
    %p37 = por %p35, %p36
    %p38 = scmp.ne.s32.totalorder %s27, %s28
    %p39 = scmp.eq.s32.totalorder %s19, 0
    %p40 = por %p38, %p39
    %p41 = scmp.ne.s32.totalorder %s27, %s28
    %p42 = scmp.eq.s32.totalorder %s20, 1
    %p43 = por %p41, %p42
    %p45 = scmp.ne.s32.totalorder %s28, %s44
    %p46 = scmp.eq.s32.totalorder %s20, 0
    %p47 = por %p45, %p46
    %s48 = ssub.s32 %s14, %s21
    %p49 = scmp.eq.s32.totalorder %s48, 0
    %s51 = sadd.s32 %s50, 1
    %s52 = scalar_select %p49, %s50, %s51
    %p55 = pneg %p49
    %p56 = scmp.eq.s32.totalorder %s14, 1
    %p57 = por %p55, %p56
    %p58 = scmp.ne.s32.totalorder %s50, %s53
    %p59 = scmp.eq.s32.totalorder %s14, 0
    %p60 = por %p58, %p59
    %p61 = scmp.ne.s32.totalorder %s50, %s53
    %p62 = scmp.eq.s32.totalorder %s19, 1
    %p63 = por %p61, %p62
    %p64 = scmp.ne.s32.totalorder %s53, %s54
    %p65 = scmp.eq.s32.totalorder %s19, 0
    %p66 = por %p64, %p65
    %p67 = scmp.ne.s32.totalorder %s53, %s54
    %p68 = scmp.eq.s32.totalorder %s20, 1
    %p69 = por %p67, %p68
    %p71 = scmp.ne.s32.totalorder %s54, %s70
    %p72 = scmp.eq.s32.totalorder %s20, 0
    %p73 = por %p71, %p72
    %s75 = sadd.s32 %s74, 1
    %p78 = scmp.eq.s32.totalorder %s14, 1
    %p79 = scmp.ne.s32.totalorder %s74, %s76
    %p80 = scmp.eq.s32.totalorder %s14, 0
    %p81 = por %p79, %p80
    %p82 = scmp.ne.s32.totalorder %s74, %s76
    %p83 = scmp.eq.s32.totalorder %s19, 1
    %p84 = por %p82, %p83
    %p85 = scmp.ne.s32.totalorder %s76, %s77
    %p86 = scmp.eq.s32.totalorder %s19, 0
    %p87 = por %p85, %p86
    %p88 = scmp.ne.s32.totalorder %s76, %s77
    %p89 = scmp.eq.s32.totalorder %s20, 1
    %p90 = por %p88, %p89
    %p92 = scmp.ne.s32.totalorder %s77, %s91
    %p93 = scmp.eq.s32.totalorder %s20, 0
    %p94 = por %p92, %p93
    %s96 = sadd.s32 %s95, 1
    %p99 = scmp.eq.s32.totalorder %s14, 1
    %p100 = scmp.ne.s32.totalorder %s95, %s97
    %p101 = scmp.eq.s32.totalorder %s14, 0
    %p102 = por %p100, %p101
    %p103 = scmp.ne.s32.totalorder %s95, %s97
    %p104 = scmp.eq.s32.totalorder %s19, 1
    %p105 = por %p103, %p104
    %p106 = scmp.ne.s32.totalorder %s97, %s98
    %p107 = scmp.eq.s32.totalorder %s19, 0
    %p108 = por %p106, %p107
    %p109 = scmp.ne.s32.totalorder %s97, %s98
    %p110 = scmp.eq.s32.totalorder %s20, 1
    %p111 = por %p109, %p110
    %p113 = scmp.ne.s32.totalorder %s98, %s112
    %p114 = scmp.eq.s32.totalorder %s20, 0
    %p115 = por %p113, %p114
    %s117 = sadd.s32 %s116, 1
    %p120 = scmp.eq.s32.totalorder %s14, 1
    %p121 = scmp.ne.s32.totalorder %s116, %s118
    %p122 = scmp.eq.s32.totalorder %s14, 0
    %p123 = por %p121, %p122
    %p124 = scmp.ne.s32.totalorder %s116, %s118
    %p125 = scmp.eq.s32.totalorder %s19, 1
    %p126 = por %p124, %p125
    %p127 = scmp.ne.s32.totalorder %s118, %s119
    %p128 = scmp.eq.s32.totalorder %s19, 0
    %p129 = por %p127, %p128
    %p130 = scmp.ne.s32.totalorder %s118, %s119
    %p131 = scmp.eq.s32.totalorder %s20, 1
    %p132 = por %p130, %p131
    %p134 = scmp.ne.s32.totalorder %s119, %s133
    %p135 = scmp.eq.s32.totalorder %s20, 0
    %p136 = por %p134, %p135
    %s138 = sadd.s32 %s137, 1
    %p141 = scmp.eq.s32.totalorder %s14, 1
    %p142 = scmp.ne.s32.totalorder %s137, %s139
    %p143 = scmp.eq.s32.totalorder %s14, 0
    %p144 = por %p142, %p143
    %p145 = scmp.ne.s32.totalorder %s137, %s139
    %p146 = scmp.eq.s32.totalorder %s19, 1
    %p147 = por %p145, %p146
    %p148 = scmp.ne.s32.totalorder %s139, %s140
    %p149 = scmp.eq.s32.totalorder %s19, 0
    %p150 = por %p148, %p149
    %p151 = scmp.ne.s32.totalorder %s139, %s140
    %p152 = scmp.eq.s32.totalorder %s20, 1
    %p153 = por %p151, %p152
    %p155 = scmp.ne.s32.totalorder %s140, %s154
    %p156 = scmp.eq.s32.totalorder %s20, 0
    %p157 = por %p155, %p156
    %s158 = ssub.s32 %s14, %s21
    %p159 = scmp.eq.s32.totalorder %s158, 0
    %s161 = sadd.s32 %s160, 1
    %s162 = scalar_select %p159, %s160, %s161
    %p165 = pneg %p159
    %p166 = scmp.eq.s32.totalorder %s14, 1
    %p167 = por %p165, %p166
    %p168 = scmp.ne.s32.totalorder %s160, %s163
    %p169 = scmp.eq.s32.totalorder %s14, 0
    %p170 = por %p168, %p169
    %p171 = scmp.ne.s32.totalorder %s160, %s163
    %p172 = scmp.eq.s32.totalorder %s19, 1
    %p173 = por %p171, %p172
    %p174 = scmp.ne.s32.totalorder %s163, %s164
    %p175 = scmp.eq.s32.totalorder %s19, 0
    %p176 = por %p174, %p175
    %p177 = scmp.ne.s32.totalorder %s163, %s164
    %p178 = scmp.eq.s32.totalorder %s20, 1
    %p179 = por %p177, %p178
    %p181 = scmp.ne.s32.totalorder %s164, %s180
    %p182 = scmp.eq.s32.totalorder %s20, 0
    %p183 = por %p181, %p182
    %s184 = ssub.s32 %s14, %s21
    %p185 = scmp.eq.s32.totalorder %s184, 0
    %s187 = sadd.s32 %s186, 1
    %s188 = scalar_select %p185, %s186, %s187
    %p191 = pneg %p185
    %p192 = scmp.eq.s32.totalorder %s14, 1
    %p193 = por %p191, %p192
    %p194 = scmp.ne.s32.totalorder %s186, %s189
    %p195 = scmp.eq.s32.totalorder %s14, 0
    %p196 = por %p194, %p195
    %p197 = scmp.ne.s32.totalorder %s186, %s189
    %p198 = scmp.eq.s32.totalorder %s19, 1
    %p199 = por %p197, %p198
    %p200 = scmp.ne.s32.totalorder %s189, %s190
    %p201 = scmp.eq.s32.totalorder %s19, 0
    %p202 = por %p200, %p201
    %p203 = scmp.ne.s32.totalorder %s189, %s190
    %p204 = scmp.eq.s32.totalorder %s20, 1
    %p205 = por %p203, %p204
    %p207 = scmp.ne.s32.totalorder %s190, %s206
    %p208 = scmp.eq.s32.totalorder %s20, 0
    %p209 = por %p207, %p208
    %p210 = scmp.le.s32.totalorder 1, %s14
    %p211 = scmp.lt.s32.totalorder %s14, 3
    %p212 = pnand %p210, %p211
    %p213 = pneg %p212
    // Predicated region
    $region9: #{fno_block_t_theta.2} parent=5 // pred_check
      _
    $region10: #{fno_block_t_theta.2} parent=5 // pred_check_branch
      %215 = sbr.rel (%p212) target = $region12
    $region11: #{fno_block_t_theta.2} parent=5 // pred_region
      %s216 = ssub.s32 %s14, 1
      // Predicated region
      $region13: #{fno_block_t_theta.2} parent=11 // pred_check
        %p217 = pneg %p87
      $region14: #{fno_block_t_theta.2} parent=11 // pred_check_branch
        %219 = sbr.rel (%p217) target = $region16
      $region15: #{fno_block_t_theta.2} parent=11 // pred_region
        _
      $region16: #{fno_block_t_theta.2} parent=11 // pred_fallthru
        _
      // Predicated region
      $region17: #{fno_block_t_theta.2} parent=11 // pred_check
        %p220 = pneg %p108
      $region18: #{fno_block_t_theta.2} parent=11 // pred_check_branch
        %222 = sbr.rel (%p220) target = $region20
      $region19: #{fno_block_t_theta.2} parent=11 // pred_region
        _
      $region20: #{fno_block_t_theta.2} parent=11 // pred_fallthru
        _
      // Predicated region
      $region21: #{fno_block_t_theta.2} parent=11 // pred_check
        %p223 = pneg %p129
      $region22: #{fno_block_t_theta.2} parent=11 // pred_check_branch
        %225 = sbr.rel (%p223) target = $region24
      $region23: #{fno_block_t_theta.2} parent=11 // pred_region
        _
      $region24: #{fno_block_t_theta.2} parent=11 // pred_fallthru
        _
      // Predicated region
      $region25: #{fno_block_t_theta.2} parent=11 // pred_check
        %p226 = pneg %p150
      $region26: #{fno_block_t_theta.2} parent=11 // pred_check_branch
        %228 = sbr.rel (%p226) target = $region28
      $region27: #{fno_block_t_theta.2} parent=11 // pred_region
        _
      $region28: #{fno_block_t_theta.2} parent=11 // pred_fallthru
        _
    $region12: #{fno_block_t_theta.2} parent=5 // pred_fallthru
      _
    %p229 = scmp.lt.s32.totalorder %s14, 2
    // Predicated region
    $region29: #{fno_block_t_theta.2} parent=5 // pred_check
      %p230 = pneg %p229
    $region30: #{fno_block_t_theta.2} parent=5 // pred_check_branch
      %232 = sbr.rel (%p230) target = $region32
    $region31: #{fno_block_t_theta.2} parent=5 // pred_region
      // Predicated region
      $region33: #{fno_block_t_theta.2} parent=31 // pred_check
        %p233 = pneg %p34
      $region34: #{fno_block_t_theta.2} parent=31 // pred_check_branch
        %235 = sbr.rel (%p233) target = $region36
      $region35: #{fno_block_t_theta.2} parent=31 // pred_region
        %p236 = scmp.lt.s32.totalorder %s14, 1
        %s237 = scalar_select %p236, %s14, 1
        %s238 = smul.addr %s237, 8
        %s239 = smul.addr %s238, 8
        %s240 = scalar_lea.vmem %s0, %s239
      $region36: #{fno_block_t_theta.2} parent=31 // pred_fallthru
        _
      // Predicated region
      $region37: #{fno_block_t_theta.2} parent=31 // pred_check
        %p241 = pneg %p60
      $region38: #{fno_block_t_theta.2} parent=31 // pred_check_branch
        %243 = sbr.rel (%p241) target = $region40
      $region39: #{fno_block_t_theta.2} parent=31 // pred_region
        %p244 = scmp.lt.s32.totalorder %s14, 1
        %s245 = scalar_select %p244, %s14, 1
        %s246 = smul.addr %s245, 8
        %s247 = smul.addr %s246, 8
        %s248 = scalar_lea.vmem %s1, %s247
      $region40: #{fno_block_t_theta.2} parent=31 // pred_fallthru
        _
    $region32: #{fno_block_t_theta.2} parent=5 // pred_fallthru
      _
    %p249 = scmp.le.s32.totalorder 1, %s14
    %p250 = scmp.lt.s32.totalorder %s14, 3
    %p251 = pnand %p249, %p250
    %p252 = pneg %p251
    // Predicated region
    $region41: #{fno_block_t_theta.2} parent=5 // pred_check
      _
    $region42: #{fno_block_t_theta.2} parent=5 // pred_check_branch
      %254 = sbr.rel (%p251) target = $region44
    $region43: #{fno_block_t_theta.2} parent=5 // pred_region
      %s255 = ssub.s32 %s14, 1
      %p256 = scmp.lt.s32.totalorder %s19, 1
      %s257 = scalar_select %p256, %s19, 1
      %s258 = smul.addr %s257, 8
      %s259 = smul.addr %s258, 8
      %s260 = scalar_lea.vmem %s0, %s259
      %p261 = pneg %p40
      %p262 = pneg %p37
      %p263 = scmp.lt.s32.totalorder %s19, 1
      %s264 = scalar_select %p263, %s19, 1
      %s265 = smul.addr %s264, 8
      %s266 = smul.addr %s265, 8
      %s267 = scalar_lea.vmem %s1, %s266
      %p268 = pneg %p66
      %p269 = pneg %p63
      %p270 = pneg %p87
      %p271 = pneg %p84
      %p272 = pneg %p108
      %p273 = pneg %p105
      %p274 = pneg %p129
      %p275 = pneg %p126
      %p276 = pneg %p150
      %p277 = pneg %p147
      %p278 = pneg %p176
      %p279 = pneg %p173
      %p280 = scmp.lt.s32.totalorder %s19, 1
      %s281 = scalar_select %p280, %s19, 1
      %s282 = smul.addr %s281, 8
      %s283 = smul.addr %s282, 8
      %s284 = scalar_lea.vmem %s6, %s283
      %p285 = pneg %p202
      %p286 = pneg %p199
      %p287 = scmp.lt.s32.totalorder %s19, 1
      %s288 = scalar_select %p287, %s19, 1
      %s289 = smul.addr %s288, 8
      %s290 = smul.addr %s289, 8
      %s291 = scalar_lea.vmem %s7, %s290
      %p292 = scmp.lt.s32.totalorder %s19, 1
      %s293 = scalar_select %p292, %s19, 1
      %s294 = smul.addr %s293, 8
      %s295 = smul.addr %s294, 8
      %s296 = scalar_lea.vmem %s0, %s295
      %p297 = scmp.lt.s32.totalorder %s19, 1
      %s298 = scalar_select %p297, %s19, 1
      %s299 = smul.addr %s298, 8
      %s300 = smul.addr %s299, 8
      %s301 = scalar_lea.vmem %s1, %s300
      %p302 = scmp.lt.s32.totalorder %s19, 1
      %s303 = scalar_select %p302, %s19, 1
      %s304 = smul.addr %s303, 8
      %s305 = smul.addr %s304, 8
      %s306 = scalar_lea.vmem %s6, %s305
      %p307 = scmp.lt.s32.totalorder %s19, 1
      %s308 = scalar_select %p307, %s19, 1
      %s309 = smul.addr %s308, 8
      %s310 = smul.addr %s309, 8
      %s311 = scalar_lea.vmem %s7, %s310
      %vm312 = vcmask 72704
      %313 = vst.msk [vmem:[%s306] sm:$0xff] %vm312, 0.0
      %314 = vst.msk [vmem:[%s306 + $0x8] sm:$0xff] %vm312, 0.0
      %315 = vst.msk [vmem:[%s306 + $0x10] sm:$0xff] %vm312, 0.0
      %316 = vst.msk [vmem:[%s306 + $0x18] sm:$0xff] %vm312, 0.0
      %317 = vst.msk [vmem:[%s306 + $0x20] sm:$0xff] %vm312, 0.0
      %318 = vst.msk [vmem:[%s306 + $0x28] sm:$0xff] %vm312, 0.0
      %319 = vst.msk [vmem:[%s306 + $0x30] sm:$0xff] %vm312, 0.0
      %320 = vst.msk [vmem:[%s306 + $0x38] sm:$0xff] %vm312, 0.0
      %321 = vst.msk [vmem:[%s311] sm:$0xff] %vm312, 0.0
      %322 = vst.msk [vmem:[%s311 + $0x8] sm:$0xff] %vm312, 0.0
      %323 = vst.msk [vmem:[%s311 + $0x10] sm:$0xff] %vm312, 0.0
      %324 = vst.msk [vmem:[%s311 + $0x18] sm:$0xff] %vm312, 0.0
      %325 = vst.msk [vmem:[%s311 + $0x20] sm:$0xff] %vm312, 0.0
      %326 = vst.msk [vmem:[%s311 + $0x28] sm:$0xff] %vm312, 0.0
      %327 = vst.msk [vmem:[%s311 + $0x30] sm:$0xff] %vm312, 0.0
      %328 = vst.msk [vmem:[%s311 + $0x38] sm:$0xff] %vm312, 0.0
      %v329 = vld [vmem:[%s296] sm:$0xff]
      %v330 = vld [vmem:[%s296 + $0x8] sm:$0xff]
      %v331 = vld [vmem:[%s296 + $0x10] sm:$0xff]
      %v332 = vld [vmem:[%s296 + $0x18] sm:$0xff]
      %v333 = vld [vmem:[%s296 + $0x20] sm:$0xff]
      %v334 = vld [vmem:[%s296 + $0x28] sm:$0xff]
      %v335 = vld [vmem:[%s296 + $0x30] sm:$0xff]
      %v336 = vld [vmem:[%s296 + $0x38] sm:$0xff]
      %v337 = vld [vmem:[%s301] sm:$0xff]
      %v338 = vld [vmem:[%s301 + $0x8] sm:$0xff]
      %v339 = vld [vmem:[%s301 + $0x10] sm:$0xff]
      %v340 = vld [vmem:[%s301 + $0x18] sm:$0xff]
      %v341 = vld [vmem:[%s301 + $0x20] sm:$0xff]
      %v342 = vld [vmem:[%s301 + $0x28] sm:$0xff]
      %v343 = vld [vmem:[%s301 + $0x30] sm:$0xff]
      %v344 = vld [vmem:[%s301 + $0x38] sm:$0xff]
      %v345 = vld [vmem:[%s2] sm:$0xf]
      %v346 = vld [vmem:[%s2 + $0x4] sm:$0xf]
      %v347 = vld [vmem:[%s2 + $0x8] sm:$0xf]
      %v348 = vld [vmem:[%s2 + $0xc] sm:$0xf]
      %v349 = vld [vmem:[%s2 + $0x10] sm:$0xf]
      %v350 = vld [vmem:[%s2 + $0x14] sm:$0xf]
      %v351 = vld [vmem:[%s2 + $0x18] sm:$0xf]
      %v352 = vld [vmem:[%s2 + $0x1c] sm:$0xf]
      %v353 = vld [vmem:[%s2 + $0x20] sm:$0xf]
      %v354 = vld [vmem:[%s2 + $0x24] sm:$0xf]
      %v355 = vld [vmem:[%s2 + $0x28] sm:$0xf]
      %v356 = vld [vmem:[%s2 + $0x2c] sm:$0xf]
      %v357 = vld [vmem:[%s2 + $0x30] sm:$0xf]
      %v358 = vld [vmem:[%s2 + $0x34] sm:$0xf]
      %v359 = vld [vmem:[%s2 + $0x38] sm:$0xf]
      %v360 = vld [vmem:[%s2 + $0x3c] sm:$0xf]
      %v361 = vld [vmem:[%s3] sm:$0xf]
      %v362 = vld [vmem:[%s3 + $0x4] sm:$0xf]
      %v363 = vld [vmem:[%s3 + $0x8] sm:$0xf]
      %v364 = vld [vmem:[%s3 + $0xc] sm:$0xf]
      %v365 = vld [vmem:[%s3 + $0x10] sm:$0xf]
      %v366 = vld [vmem:[%s3 + $0x14] sm:$0xf]
      %v367 = vld [vmem:[%s3 + $0x18] sm:$0xf]
      %v368 = vld [vmem:[%s3 + $0x1c] sm:$0xf]
      %v369 = vld [vmem:[%s3 + $0x20] sm:$0xf]
      %v370 = vld [vmem:[%s3 + $0x24] sm:$0xf]
      %v371 = vld [vmem:[%s3 + $0x28] sm:$0xf]
      %v372 = vld [vmem:[%s3 + $0x2c] sm:$0xf]
      %v373 = vld [vmem:[%s3 + $0x30] sm:$0xf]
      %v374 = vld [vmem:[%s3 + $0x34] sm:$0xf]
      %v375 = vld [vmem:[%s3 + $0x38] sm:$0xf]
      %v376 = vld [vmem:[%s3 + $0x3c] sm:$0xf]
      %v377 = vld [vmem:[%s4] sm:$0xf]
      %v378 = vld [vmem:[%s4 + $0x4] sm:$0xf]
      %v379 = vld [vmem:[%s4 + $0x8] sm:$0xf]
      %v380 = vld [vmem:[%s4 + $0xc] sm:$0xf]
      %v381 = vld [vmem:[%s4 + $0x10] sm:$0xf]
      %v382 = vld [vmem:[%s4 + $0x14] sm:$0xf]
      %v383 = vld [vmem:[%s4 + $0x18] sm:$0xf]
      %v384 = vld [vmem:[%s4 + $0x1c] sm:$0xf]
      %v385 = vld [vmem:[%s4 + $0x20] sm:$0xf]
      %v386 = vld [vmem:[%s4 + $0x24] sm:$0xf]
      %v387 = vld [vmem:[%s4 + $0x28] sm:$0xf]
      %v388 = vld [vmem:[%s4 + $0x2c] sm:$0xf]
      %v389 = vld [vmem:[%s4 + $0x30] sm:$0xf]
      %v390 = vld [vmem:[%s4 + $0x34] sm:$0xf]
      %v391 = vld [vmem:[%s4 + $0x38] sm:$0xf]
      %v392 = vld [vmem:[%s4 + $0x3c] sm:$0xf]
      %v393 = vld [vmem:[%s5] sm:$0xf]
      %v394 = vld [vmem:[%s5 + $0x4] sm:$0xf]
      %v395 = vld [vmem:[%s5 + $0x8] sm:$0xf]
      %v396 = vld [vmem:[%s5 + $0xc] sm:$0xf]
      %v397 = vld [vmem:[%s5 + $0x10] sm:$0xf]
      %v398 = vld [vmem:[%s5 + $0x14] sm:$0xf]
      %v399 = vld [vmem:[%s5 + $0x18] sm:$0xf]
      %v400 = vld [vmem:[%s5 + $0x1c] sm:$0xf]
      %v401 = vld [vmem:[%s5 + $0x20] sm:$0xf]
      %v402 = vld [vmem:[%s5 + $0x24] sm:$0xf]
      %v403 = vld [vmem:[%s5 + $0x28] sm:$0xf]
      %v404 = vld [vmem:[%s5 + $0x2c] sm:$0xf]
      %v405 = vld [vmem:[%s5 + $0x30] sm:$0xf]
      %v406 = vld [vmem:[%s5 + $0x34] sm:$0xf]
      %v407 = vld [vmem:[%s5 + $0x38] sm:$0xf]
      %v408 = vld [vmem:[%s5 + $0x3c] sm:$0xf]
      %v409 = vmul.f32 %v329, %v345
      %v410 = vmul.f32 %v329, %v346
      %v411 = vmul.f32 %v329, %v347
      %v412 = vmul.f32 %v329, %v348
      %v413 = vadd.f32 %v409, 0.0
      %v414 = vadd.f32 %v410, 0.0
      %v415 = vadd.f32 %v411, 0.0
      %v416 = vadd.f32 %v412, 0.0
      %v417 = vmul.f32 %v337, %v361
      %v418 = vmul.f32 %v337, %v362
      %v419 = vmul.f32 %v337, %v363
      %v420 = vmul.f32 %v337, %v364
      %v421 = vsub.f32 %v413, %v417
      %v422 = vsub.f32 %v414, %v418
      %v423 = vsub.f32 %v415, %v419
      %v424 = vsub.f32 %v416, %v420
      %v425 = vmul.f32 %v329, %v361
      %v426 = vmul.f32 %v329, %v362
      %v427 = vmul.f32 %v329, %v363
      %v428 = vmul.f32 %v329, %v364
      %v429 = vadd.f32 %v425, 0.0
      %v430 = vadd.f32 %v426, 0.0
      %v431 = vadd.f32 %v427, 0.0
      %v432 = vadd.f32 %v428, 0.0
      %v433 = vmul.f32 %v337, %v345
      %v434 = vmul.f32 %v337, %v346
      %v435 = vmul.f32 %v337, %v347
      %v436 = vmul.f32 %v337, %v348
      %v437 = vadd.f32 %v429, %v433
      %v438 = vadd.f32 %v430, %v434
      %v439 = vadd.f32 %v431, %v435
      %v440 = vadd.f32 %v432, %v436
      %v441 = vmul.f32 %v331, %v349
      %v442 = vmul.f32 %v331, %v350
      %v443 = vmul.f32 %v331, %v351
      %v444 = vmul.f32 %v331, %v352
      %v445 = vadd.f32 %v421, %v441
      %v446 = vadd.f32 %v422, %v442
      %v447 = vadd.f32 %v423, %v443
      %v448 = vadd.f32 %v424, %v444
      %v449 = vmul.f32 %v339, %v365
      %v450 = vmul.f32 %v339, %v366
      %v451 = vmul.f32 %v339, %v367
      %v452 = vmul.f32 %v339, %v368
      %v453 = vsub.f32 %v445, %v449
      %v454 = vsub.f32 %v446, %v450
      %v455 = vsub.f32 %v447, %v451
      %v456 = vsub.f32 %v448, %v452
      %v457 = vmul.f32 %v331, %v365
      %v458 = vmul.f32 %v331, %v366
      %v459 = vmul.f32 %v331, %v367
      %v460 = vmul.f32 %v331, %v368
      %v461 = vadd.f32 %v437, %v457
      %v462 = vadd.f32 %v438, %v458
      %v463 = vadd.f32 %v439, %v459
      %v464 = vadd.f32 %v440, %v460
      %v465 = vmul.f32 %v339, %v349
      %v466 = vmul.f32 %v339, %v350
      %v467 = vmul.f32 %v339, %v351
      %v468 = vmul.f32 %v339, %v352
      %v469 = vadd.f32 %v461, %v465
      %v470 = vadd.f32 %v462, %v466
      %v471 = vadd.f32 %v463, %v467
      %v472 = vadd.f32 %v464, %v468
      %v473 = vmul.f32 %v333, %v353
      %v474 = vmul.f32 %v333, %v354
      %v475 = vmul.f32 %v333, %v355
      %v476 = vmul.f32 %v333, %v356
      %v477 = vadd.f32 %v453, %v473
      %v478 = vadd.f32 %v454, %v474
      %v479 = vadd.f32 %v455, %v475
      %v480 = vadd.f32 %v456, %v476
      %v481 = vmul.f32 %v341, %v369
      %v482 = vmul.f32 %v341, %v370
      %v483 = vmul.f32 %v341, %v371
      %v484 = vmul.f32 %v341, %v372
      %v485 = vsub.f32 %v477, %v481
      %v486 = vsub.f32 %v478, %v482
      %v487 = vsub.f32 %v479, %v483
      %v488 = vsub.f32 %v480, %v484
      %v489 = vmul.f32 %v333, %v369
      %v490 = vmul.f32 %v333, %v370
      %v491 = vmul.f32 %v333, %v371
      %v492 = vmul.f32 %v333, %v372
      %v493 = vadd.f32 %v469, %v489
      %v494 = vadd.f32 %v470, %v490
      %v495 = vadd.f32 %v471, %v491
      %v496 = vadd.f32 %v472, %v492
      %v497 = vmul.f32 %v341, %v353
      %v498 = vmul.f32 %v341, %v354
      %v499 = vmul.f32 %v341, %v355
      %v500 = vmul.f32 %v341, %v356
      %v501 = vadd.f32 %v493, %v497
      %v502 = vadd.f32 %v494, %v498
      %v503 = vadd.f32 %v495, %v499
      %v504 = vadd.f32 %v496, %v500
      %v505 = vmul.f32 %v335, %v357
      %v506 = vmul.f32 %v335, %v358
      %v507 = vmul.f32 %v335, %v359
      %v508 = vmul.f32 %v335, %v360
      %v509 = vadd.f32 %v485, %v505
      %v510 = vadd.f32 %v486, %v506
      %v511 = vadd.f32 %v487, %v507
      %v512 = vadd.f32 %v488, %v508
      %v513 = vmul.f32 %v343, %v373
      %v514 = vmul.f32 %v343, %v374
      %v515 = vmul.f32 %v343, %v375
      %v516 = vmul.f32 %v343, %v376
      %v517 = vsub.f32 %v509, %v513
      %v518 = vsub.f32 %v510, %v514
      %v519 = vsub.f32 %v511, %v515
      %v520 = vsub.f32 %v512, %v516
      %v521 = vmul.f32 %v335, %v373
      %v522 = vmul.f32 %v335, %v374
      %v523 = vmul.f32 %v335, %v375
      %v524 = vmul.f32 %v335, %v376
      %v525 = vadd.f32 %v501, %v521
      %v526 = vadd.f32 %v502, %v522
      %v527 = vadd.f32 %v503, %v523
      %v528 = vadd.f32 %v504, %v524
      %v529 = vmul.f32 %v343, %v357
      %v530 = vmul.f32 %v343, %v358
      %v531 = vmul.f32 %v343, %v359
      %v532 = vmul.f32 %v343, %v360
      %v533 = vadd.f32 %v525, %v529
      %v534 = vadd.f32 %v526, %v530
      %v535 = vadd.f32 %v527, %v531
      %v536 = vadd.f32 %v528, %v532
      %v541 = vrot.slane %v377, 4
      %v542 = vrot.slane %v378, 4
      %v543 = vrot.slane %v379, 4
      %v544 = vrot.slane %v380, 4
      %v549 = vmul.f32 %v330, %v541
      %v550 = vmul.f32 %v330, %v542
      %v551 = vmul.f32 %v330, %v543
      %v552 = vmul.f32 %v330, %v544
      %v553 = vadd.f32 %v549, 0.0
      %v554 = vadd.f32 %v550, 0.0
      %v555 = vadd.f32 %v551, 0.0
      %v556 = vadd.f32 %v552, 0.0
      %v561 = vrot.slane %v393, 4
      %v562 = vrot.slane %v394, 4
      %v563 = vrot.slane %v395, 4
      %v564 = vrot.slane %v396, 4
      %v569 = vmul.f32 %v338, %v561
      %v570 = vmul.f32 %v338, %v562
      %v571 = vmul.f32 %v338, %v563
      %v572 = vmul.f32 %v338, %v564
      %v573 = vsub.f32 %v553, %v569
      %v574 = vsub.f32 %v554, %v570
      %v575 = vsub.f32 %v555, %v571
      %v576 = vsub.f32 %v556, %v572
      %v577 = vmul.f32 %v330, %v561
      %v578 = vmul.f32 %v330, %v562
      %v579 = vmul.f32 %v330, %v563
      %v580 = vmul.f32 %v330, %v564
      %v581 = vadd.f32 %v577, 0.0
      %v582 = vadd.f32 %v578, 0.0
      %v583 = vadd.f32 %v579, 0.0
      %v584 = vadd.f32 %v580, 0.0
      %v585 = vmul.f32 %v338, %v541
      %v586 = vmul.f32 %v338, %v542
      %v587 = vmul.f32 %v338, %v543
      %v588 = vmul.f32 %v338, %v544
      %v589 = vadd.f32 %v581, %v585
      %v590 = vadd.f32 %v582, %v586
      %v591 = vadd.f32 %v583, %v587
      %v592 = vadd.f32 %v584, %v588
      %v597 = vrot.slane %v381, 4
      %v598 = vrot.slane %v382, 4
      %v599 = vrot.slane %v383, 4
      %v600 = vrot.slane %v384, 4
      %v605 = vmul.f32 %v332, %v597
      %v606 = vmul.f32 %v332, %v598
      %v607 = vmul.f32 %v332, %v599
      %v608 = vmul.f32 %v332, %v600
      %v609 = vadd.f32 %v573, %v605
      %v610 = vadd.f32 %v574, %v606
      %v611 = vadd.f32 %v575, %v607
      %v612 = vadd.f32 %v576, %v608
      %v617 = vrot.slane %v397, 4
      %v618 = vrot.slane %v398, 4
      %v619 = vrot.slane %v399, 4
      %v620 = vrot.slane %v400, 4
      %v625 = vmul.f32 %v340, %v617
      %v626 = vmul.f32 %v340, %v618
      %v627 = vmul.f32 %v340, %v619
      %v628 = vmul.f32 %v340, %v620
      %v629 = vsub.f32 %v609, %v625
      %v630 = vsub.f32 %v610, %v626
      %v631 = vsub.f32 %v611, %v627
      %v632 = vsub.f32 %v612, %v628
      %v633 = vmul.f32 %v332, %v617
      %v634 = vmul.f32 %v332, %v618
      %v635 = vmul.f32 %v332, %v619
      %v636 = vmul.f32 %v332, %v620
      %v637 = vadd.f32 %v589, %v633
      %v638 = vadd.f32 %v590, %v634
      %v639 = vadd.f32 %v591, %v635
      %v640 = vadd.f32 %v592, %v636
      %v641 = vmul.f32 %v340, %v597
      %v642 = vmul.f32 %v340, %v598
      %v643 = vmul.f32 %v340, %v599
      %v644 = vmul.f32 %v340, %v600
      %v645 = vadd.f32 %v637, %v641
      %v646 = vadd.f32 %v638, %v642
      %v647 = vadd.f32 %v639, %v643
      %v648 = vadd.f32 %v640, %v644
      %v653 = vrot.slane %v385, 4
      %v654 = vrot.slane %v386, 4
      %v655 = vrot.slane %v387, 4
      %v656 = vrot.slane %v388, 4
      %v661 = vmul.f32 %v334, %v653
      %v662 = vmul.f32 %v334, %v654
      %v663 = vmul.f32 %v334, %v655
      %v664 = vmul.f32 %v334, %v656
      %v665 = vadd.f32 %v629, %v661
      %v666 = vadd.f32 %v630, %v662
      %v667 = vadd.f32 %v631, %v663
      %v668 = vadd.f32 %v632, %v664
      %v673 = vrot.slane %v401, 4
      %v674 = vrot.slane %v402, 4
      %v675 = vrot.slane %v403, 4
      %v676 = vrot.slane %v404, 4
      %v681 = vmul.f32 %v342, %v673
      %v682 = vmul.f32 %v342, %v674
      %v683 = vmul.f32 %v342, %v675
      %v684 = vmul.f32 %v342, %v676
      %v685 = vsub.f32 %v665, %v681
      %v686 = vsub.f32 %v666, %v682
      %v687 = vsub.f32 %v667, %v683
      %v688 = vsub.f32 %v668, %v684
      %v689 = vmul.f32 %v334, %v673
      %v690 = vmul.f32 %v334, %v674
      %v691 = vmul.f32 %v334, %v675
      %v692 = vmul.f32 %v334, %v676
      %v693 = vadd.f32 %v645, %v689
      %v694 = vadd.f32 %v646, %v690
      %v695 = vadd.f32 %v647, %v691
      %v696 = vadd.f32 %v648, %v692
      %v697 = vmul.f32 %v342, %v653
      %v698 = vmul.f32 %v342, %v654
      %v699 = vmul.f32 %v342, %v655
      %v700 = vmul.f32 %v342, %v656
      %v701 = vadd.f32 %v693, %v697
      %v702 = vadd.f32 %v694, %v698
      %v703 = vadd.f32 %v695, %v699
      %v704 = vadd.f32 %v696, %v700
      %v709 = vrot.slane %v389, 4
      %v710 = vrot.slane %v390, 4
      %v711 = vrot.slane %v391, 4
      %v712 = vrot.slane %v392, 4
      %v717 = vmul.f32 %v336, %v709
      %v718 = vmul.f32 %v336, %v710
      %v719 = vmul.f32 %v336, %v711
      %v720 = vmul.f32 %v336, %v712
      %v721 = vadd.f32 %v685, %v717
      %v722 = vadd.f32 %v686, %v718
      %v723 = vadd.f32 %v687, %v719
      %v724 = vadd.f32 %v688, %v720
      %v729 = vrot.slane %v405, 4
      %v730 = vrot.slane %v406, 4
      %v731 = vrot.slane %v407, 4
      %v732 = vrot.slane %v408, 4
      %v737 = vmul.f32 %v344, %v729
      %v738 = vmul.f32 %v344, %v730
      %v739 = vmul.f32 %v344, %v731
      %v740 = vmul.f32 %v344, %v732
      %v741 = vsub.f32 %v721, %v737
      %v742 = vsub.f32 %v722, %v738
      %v743 = vsub.f32 %v723, %v739
      %v744 = vsub.f32 %v724, %v740
      %v745 = vmul.f32 %v336, %v729
      %v746 = vmul.f32 %v336, %v730
      %v747 = vmul.f32 %v336, %v731
      %v748 = vmul.f32 %v336, %v732
      %v749 = vadd.f32 %v701, %v745
      %v750 = vadd.f32 %v702, %v746
      %v751 = vadd.f32 %v703, %v747
      %v752 = vadd.f32 %v704, %v748
      %v753 = vmul.f32 %v344, %v709
      %v754 = vmul.f32 %v344, %v710
      %v755 = vmul.f32 %v344, %v711
      %v756 = vmul.f32 %v344, %v712
      %v757 = vadd.f32 %v749, %v753
      %v758 = vadd.f32 %v750, %v754
      %v759 = vadd.f32 %v751, %v755
      %v760 = vadd.f32 %v752, %v756
      %vm761 = vcmask 27648
      %762 = vst.msk [vmem:[%s306] sm:$0xf] %vm761, %v517
      %763 = vst.msk [vmem:[%s306 + $0x10] sm:$0xf] %vm761, %v518
      %764 = vst.msk [vmem:[%s306 + $0x20] sm:$0xf] %vm761, %v519
      %765 = vst.msk [vmem:[%s306 + $0x30] sm:$0xf] %vm761, %v520
      %766 = vst.msk [vmem:[%s311] sm:$0xf] %vm761, %v533
      %767 = vst.msk [vmem:[%s311 + $0x10] sm:$0xf] %vm761, %v534
      %768 = vst.msk [vmem:[%s311 + $0x20] sm:$0xf] %vm761, %v535
      %769 = vst.msk [vmem:[%s311 + $0x30] sm:$0xf] %vm761, %v536
      %vm770 = vcmask 31748
      %771 = vst.msk [vmem:[%s306 + $0x8] sm:$0xf0] %vm770, %v741
      %772 = vst.msk [vmem:[%s306 + $0x18] sm:$0xf0] %vm770, %v742
      %773 = vst.msk [vmem:[%s306 + $0x28] sm:$0xf0] %vm770, %v743
      %774 = vst.msk [vmem:[%s306 + $0x38] sm:$0xf0] %vm770, %v744
      %775 = vst.msk [vmem:[%s311 + $0x8] sm:$0xf0] %vm770, %v757
      %776 = vst.msk [vmem:[%s311 + $0x18] sm:$0xf0] %vm770, %v758
      %777 = vst.msk [vmem:[%s311 + $0x28] sm:$0xf0] %vm770, %v759
      %778 = vst.msk [vmem:[%s311 + $0x38] sm:$0xf0] %vm770, %v760
      %p779 = scmp.lt.s32.totalorder %s19, 1
      %s780 = scalar_select %p779, %s19, 1
      %s781 = smul.addr %s780, 8
      %s782 = smul.addr %s781, 8
      %s783 = scalar_lea.vmem %s6, %s782
      %p784 = scmp.lt.s32.totalorder %s19, 1
      %s785 = scalar_select %p784, %s19, 1
      %s786 = smul.addr %s785, 8
      %s787 = smul.addr %s786, 8
      %s788 = scalar_lea.vmem %s7, %s787
      // Predicated region
      $region45: #{fno_block_t_theta.2} parent=43 // pred_check
        %p789 = pneg %p173
      $region46: #{fno_block_t_theta.2} parent=43 // pred_check_branch
        %791 = sbr.rel (%p789) target = $region48
      $region47: #{fno_block_t_theta.2} parent=43 // pred_region
        _
      $region48: #{fno_block_t_theta.2} parent=43 // pred_fallthru
        _
      // Predicated region
      $region49: #{fno_block_t_theta.2} parent=43 // pred_check
        %p792 = pneg %p199
      $region50: #{fno_block_t_theta.2} parent=43 // pred_check_branch
        %794 = sbr.rel (%p792) target = $region52
      $region51: #{fno_block_t_theta.2} parent=43 // pred_region
        _
      $region52: #{fno_block_t_theta.2} parent=43 // pred_fallthru
        _
    $region44: #{fno_block_t_theta.2} parent=5 // pred_fallthru
      _
    %p795 = scmp.le.s32.totalorder 2, %s14
    // Predicated region
    $region53: #{fno_block_t_theta.2} parent=5 // pred_check
      %p796 = pneg %p795
    $region54: #{fno_block_t_theta.2} parent=5 // pred_check_branch
      %798 = sbr.rel (%p796) target = $region56
    $region55: #{fno_block_t_theta.2} parent=5 // pred_region
      %s799 = ssub.s32 %s14, 2
      // Predicated region
      $region57: #{fno_block_t_theta.2} parent=55 // pred_check
        %p800 = pneg %p179
      $region58: #{fno_block_t_theta.2} parent=55 // pred_check_branch
        %802 = sbr.rel (%p800) target = $region60
      $region59: #{fno_block_t_theta.2} parent=55 // pred_region
        %p803 = scmp.lt.s32.totalorder %s20, 1
        %s804 = scalar_select %p803, %s20, 1
        %s805 = smul.addr %s804, 8
        %s806 = smul.addr %s805, 8
        %s807 = scalar_lea.vmem %s6, %s806
      $region60: #{fno_block_t_theta.2} parent=55 // pred_fallthru
        _
      // Predicated region
      $region61: #{fno_block_t_theta.2} parent=55 // pred_check
        %p808 = pneg %p205
      $region62: #{fno_block_t_theta.2} parent=55 // pred_check_branch
        %810 = sbr.rel (%p808) target = $region64
      $region63: #{fno_block_t_theta.2} parent=55 // pred_region
        %p811 = scmp.lt.s32.totalorder %s20, 1
        %s812 = scalar_select %p811, %s20, 1
        %s813 = smul.addr %s812, 8
        %s814 = smul.addr %s813, 8
        %s815 = scalar_lea.vmem %s7, %s814
      $region64: #{fno_block_t_theta.2} parent=55 // pred_fallthru
        _
    $region56: #{fno_block_t_theta.2} parent=5 // pred_fallthru
      _
  $region6: #{fno_block_t_theta.2} parent=0 // loop_footer
    %s18 = sadd.s32 1, %s14
  $region7: #{fno_block_t_theta.2} parent=0 // loop_footer_branch
    %13 = sbr.rel target = $region3
  $region8: #{fno_block_t_theta.2} parent=0 // loop_exit
    _

// kernel: fno_block_t_theta.3
$region0: #{fno_block_t_theta.3}
  #allocation0 [shape = 'u32[]', space=smem, size = 0x4, offset = 0x4, fixed_abs, tag = 'smem constant byte address 0x4 - core index']
  #allocation1 [shape = 'u32[144,128]{1,0:T(1,128)}', space=vmem, size = 0x12000, scoped, tag = 'internal scratch']
  %s0 = inlined_call_operand.vmem [shape: f32[2,4,256], index: 0, kind: input, shape index: {}]
  %s1 = inlined_call_operand.vmem [shape: f32[2,4,256], index: 1, kind: input, shape index: {}]
  %s2 = inlined_call_operand.vmem [shape: f32[2,16,1], index: 2, kind: input, shape index: {}]
  %s3 = inlined_call_operand.vmem [shape: f32[2,16,1], index: 3, kind: input, shape index: {}]
  %s4 = inlined_call_operand.vmem [shape: f32[4,4], index: 4, kind: input, shape index: {}]
  %s5 = inlined_call_operand.vmem [shape: f32[4,1], index: 5, kind: input, shape index: {}]
  %s6 = inlined_call_operand.vmem [shape: f32[4,16], index: 6, kind: input, shape index: {}]
  %s7 = inlined_call_operand.vmem [shape: f32[4,1], index: 7, kind: input, shape index: {}]
  %s8 = inlined_call_operand.vmem [shape: f32[4,4], index: 8, kind: input, shape index: {}]
  %s9 = inlined_call_operand.vmem [shape: f32[4,1], index: 9, kind: input, shape index: {}]
  %s10 = inlined_call_operand.vmem [shape: f32[4,16], index: 10, kind: input, shape index: {}]
  %s11 = inlined_call_operand.vmem [shape: f32[4,1], index: 11, kind: input, shape index: {}]
  %s12 = inlined_call_operand.vmem [shape: f32[4,4], index: 12, kind: input, shape index: {}]
  %s13 = inlined_call_operand.vmem [shape: f32[4,1], index: 13, kind: input, shape index: {}]
  %s14 = inlined_call_operand.vmem [shape: f32[2,4,256], index: 14, kind: output, shape index: {}]
  %s15 = sld [smem:[#allocation0]]
  $region89: #{fno_block_t_theta.3} parent=0
    _
  %s17 = ssub.s32 1, %s15
  %s18 = scalar_select 0, %s17, %s15
  loop: start=0, step=1, limit=4
  $region2: #{fno_block_t_theta.3} parent=0 // loop_pre_header
    _
  $region3: #{fno_block_t_theta.3} parent=0 // loop_header
    %s20 = sphi 0, %s24
    %p21 = scmp.ge.s32.totalorder %s20, 4
    %s30 = sphi 0, %s32
    %s33 = sphi 0, %s30
    %s34 = sphi 0, %s33
    %s50 = sphi 0, %s34
    %s56 = sphi 0, %s58
    %s59 = sphi 0, %s56
    %s60 = sphi 0, %s59
    %s76 = sphi 0, %s60
    %s82 = sphi 0, %s84
    %s85 = sphi 0, %s82
    %s86 = sphi 0, %s85
    %s102 = sphi 0, %s86
    %s108 = sphi 0, %s110
    %s111 = sphi 0, %s108
    %s112 = sphi 0, %s111
    %s128 = sphi 0, %s112
    %s132 = sphi 0, %s132
    %s134 = sphi 0, %s132
    %s135 = sphi 0, %s134
    %s149 = sphi 0, %s135
    %s153 = sphi 0, %s153
    %s155 = sphi 0, %s153
    %s156 = sphi 0, %s155
    %s170 = sphi 0, %s156
    %s174 = sphi 0, %s174
    %s176 = sphi 0, %s174
    %s177 = sphi 0, %s176
    %s191 = sphi 0, %s177
    %s195 = sphi 0, %s195
    %s197 = sphi 0, %s195
    %s198 = sphi 0, %s197
    %s212 = sphi 0, %s198
    %s216 = sphi 0, %s216
    %s218 = sphi 0, %s216
    %s219 = sphi 0, %s218
    %s233 = sphi 0, %s219
    %s237 = sphi 0, %s237
    %s239 = sphi 0, %s237
    %s240 = sphi 0, %s239
    %s254 = sphi 0, %s240
    %s258 = sphi 0, %s258
    %s260 = sphi 0, %s258
    %s261 = sphi 0, %s260
    %s275 = sphi 0, %s261
    %s279 = sphi 0, %s279
    %s281 = sphi 0, %s279
    %s282 = sphi 0, %s281
    %s296 = sphi 0, %s282
    %s300 = sphi 0, %s300
    %s302 = sphi 0, %s300
    %s303 = sphi 0, %s302
    %s317 = sphi 0, %s303
    %s321 = sphi 0, %s321
    %s323 = sphi 0, %s321
    %s324 = sphi 0, %s323
    %s338 = sphi 0, %s324
    %s344 = sphi 0, %s346
    %s347 = sphi 0, %s344
    %s348 = sphi 0, %s347
    %s364 = sphi 0, %s348
  $region4: #{fno_block_t_theta.3} parent=0 // loop_header_branch
    %23 = sbr.rel (%p21) target = $region8
  $region5: #{fno_block_t_theta.3} parent=0 // loop_body
    %s25 = ssub.s32 %s20, 1
    %s26 = ssub.s32 %s20, 2
    %s27 = sadd.s32 %s20, 1
    %s28 = ssub.s32 %s20, %s27
    %p29 = scmp.eq.s32.totalorder %s28, 0
    %s31 = sadd.s32 %s30, 1
    %s32 = scalar_select %p29, %s30, %s31
    %p35 = pneg %p29
    %p36 = scmp.eq.s32.totalorder %s20, 1
    %p37 = por %p35, %p36
    %p38 = scmp.ne.s32.totalorder %s30, %s33
    %p39 = scmp.eq.s32.totalorder %s20, 0
    %p40 = por %p38, %p39
    %p41 = scmp.ne.s32.totalorder %s30, %s33
    %p42 = scmp.eq.s32.totalorder %s25, 1
    %p43 = por %p41, %p42
    %p44 = scmp.ne.s32.totalorder %s33, %s34
    %p45 = scmp.eq.s32.totalorder %s25, 0
    %p46 = por %p44, %p45
    %p47 = scmp.ne.s32.totalorder %s33, %s34
    %p48 = scmp.eq.s32.totalorder %s26, 1
    %p49 = por %p47, %p48
    %p51 = scmp.ne.s32.totalorder %s34, %s50
    %p52 = scmp.eq.s32.totalorder %s26, 0
    %p53 = por %p51, %p52
    %s54 = ssub.s32 %s20, %s27
    %p55 = scmp.eq.s32.totalorder %s54, 0
    %s57 = sadd.s32 %s56, 1
    %s58 = scalar_select %p55, %s56, %s57
    %p61 = pneg %p55
    %p62 = scmp.eq.s32.totalorder %s20, 1
    %p63 = por %p61, %p62
    %p64 = scmp.ne.s32.totalorder %s56, %s59
    %p65 = scmp.eq.s32.totalorder %s20, 0
    %p66 = por %p64, %p65
    %p67 = scmp.ne.s32.totalorder %s56, %s59
    %p68 = scmp.eq.s32.totalorder %s25, 1
    %p69 = por %p67, %p68
    %p70 = scmp.ne.s32.totalorder %s59, %s60
    %p71 = scmp.eq.s32.totalorder %s25, 0
    %p72 = por %p70, %p71
    %p73 = scmp.ne.s32.totalorder %s59, %s60
    %p74 = scmp.eq.s32.totalorder %s26, 1
    %p75 = por %p73, %p74
    %p77 = scmp.ne.s32.totalorder %s60, %s76
    %p78 = scmp.eq.s32.totalorder %s26, 0
    %p79 = por %p77, %p78
    %s80 = ssub.s32 %s20, %s27
    %p81 = scmp.eq.s32.totalorder %s80, 0
    %s83 = sadd.s32 %s82, 1
    %s84 = scalar_select %p81, %s82, %s83
    %p87 = pneg %p81
    %p88 = scmp.eq.s32.totalorder %s20, 1
    %p89 = por %p87, %p88
    %p90 = scmp.ne.s32.totalorder %s82, %s85
    %p91 = scmp.eq.s32.totalorder %s20, 0
    %p92 = por %p90, %p91
    %p93 = scmp.ne.s32.totalorder %s82, %s85
    %p94 = scmp.eq.s32.totalorder %s25, 1
    %p95 = por %p93, %p94
    %p96 = scmp.ne.s32.totalorder %s85, %s86
    %p97 = scmp.eq.s32.totalorder %s25, 0
    %p98 = por %p96, %p97
    %p99 = scmp.ne.s32.totalorder %s85, %s86
    %p100 = scmp.eq.s32.totalorder %s26, 1
    %p101 = por %p99, %p100
    %p103 = scmp.ne.s32.totalorder %s86, %s102
    %p104 = scmp.eq.s32.totalorder %s26, 0
    %p105 = por %p103, %p104
    %s106 = ssub.s32 %s20, %s27
    %p107 = scmp.eq.s32.totalorder %s106, 0
    %s109 = sadd.s32 %s108, 1
    %s110 = scalar_select %p107, %s108, %s109
    %p113 = pneg %p107
    %p114 = scmp.eq.s32.totalorder %s20, 1
    %p115 = por %p113, %p114
    %p116 = scmp.ne.s32.totalorder %s108, %s111
    %p117 = scmp.eq.s32.totalorder %s20, 0
    %p118 = por %p116, %p117
    %p119 = scmp.ne.s32.totalorder %s108, %s111
    %p120 = scmp.eq.s32.totalorder %s25, 1
    %p121 = por %p119, %p120
    %p122 = scmp.ne.s32.totalorder %s111, %s112
    %p123 = scmp.eq.s32.totalorder %s25, 0
    %p124 = por %p122, %p123
    %p125 = scmp.ne.s32.totalorder %s111, %s112
    %p126 = scmp.eq.s32.totalorder %s26, 1
    %p127 = por %p125, %p126
    %p129 = scmp.ne.s32.totalorder %s112, %s128
    %p130 = scmp.eq.s32.totalorder %s26, 0
    %p131 = por %p129, %p130
    %s133 = sadd.s32 %s132, 1
    %p136 = scmp.eq.s32.totalorder %s20, 1
    %p137 = scmp.ne.s32.totalorder %s132, %s134
    %p138 = scmp.eq.s32.totalorder %s20, 0
    %p139 = por %p137, %p138
    %p140 = scmp.ne.s32.totalorder %s132, %s134
    %p141 = scmp.eq.s32.totalorder %s25, 1
    %p142 = por %p140, %p141
    %p143 = scmp.ne.s32.totalorder %s134, %s135
    %p144 = scmp.eq.s32.totalorder %s25, 0
    %p145 = por %p143, %p144
    %p146 = scmp.ne.s32.totalorder %s134, %s135
    %p147 = scmp.eq.s32.totalorder %s26, 1
    %p148 = por %p146, %p147
    %p150 = scmp.ne.s32.totalorder %s135, %s149
    %p151 = scmp.eq.s32.totalorder %s26, 0
    %p152 = por %p150, %p151
    %s154 = sadd.s32 %s153, 1
    %p157 = scmp.eq.s32.totalorder %s20, 1
    %p158 = scmp.ne.s32.totalorder %s153, %s155
    %p159 = scmp.eq.s32.totalorder %s20, 0
    %p160 = por %p158, %p159
    %p161 = scmp.ne.s32.totalorder %s153, %s155
    %p162 = scmp.eq.s32.totalorder %s25, 1
    %p163 = por %p161, %p162
    %p164 = scmp.ne.s32.totalorder %s155, %s156
    %p165 = scmp.eq.s32.totalorder %s25, 0
    %p166 = por %p164, %p165
    %p167 = scmp.ne.s32.totalorder %s155, %s156
    %p168 = scmp.eq.s32.totalorder %s26, 1
    %p169 = por %p167, %p168
    %p171 = scmp.ne.s32.totalorder %s156, %s170
    %p172 = scmp.eq.s32.totalorder %s26, 0
    %p173 = por %p171, %p172
    %s175 = sadd.s32 %s174, 1
    %p178 = scmp.eq.s32.totalorder %s20, 1
    %p179 = scmp.ne.s32.totalorder %s174, %s176
    %p180 = scmp.eq.s32.totalorder %s20, 0
    %p181 = por %p179, %p180
    %p182 = scmp.ne.s32.totalorder %s174, %s176
    %p183 = scmp.eq.s32.totalorder %s25, 1
    %p184 = por %p182, %p183
    %p185 = scmp.ne.s32.totalorder %s176, %s177
    %p186 = scmp.eq.s32.totalorder %s25, 0
    %p187 = por %p185, %p186
    %p188 = scmp.ne.s32.totalorder %s176, %s177
    %p189 = scmp.eq.s32.totalorder %s26, 1
    %p190 = por %p188, %p189
    %p192 = scmp.ne.s32.totalorder %s177, %s191
    %p193 = scmp.eq.s32.totalorder %s26, 0
    %p194 = por %p192, %p193
    %s196 = sadd.s32 %s195, 1
    %p199 = scmp.eq.s32.totalorder %s20, 1
    %p200 = scmp.ne.s32.totalorder %s195, %s197
    %p201 = scmp.eq.s32.totalorder %s20, 0
    %p202 = por %p200, %p201
    %p203 = scmp.ne.s32.totalorder %s195, %s197
    %p204 = scmp.eq.s32.totalorder %s25, 1
    %p205 = por %p203, %p204
    %p206 = scmp.ne.s32.totalorder %s197, %s198
    %p207 = scmp.eq.s32.totalorder %s25, 0
    %p208 = por %p206, %p207
    %p209 = scmp.ne.s32.totalorder %s197, %s198
    %p210 = scmp.eq.s32.totalorder %s26, 1
    %p211 = por %p209, %p210
    %p213 = scmp.ne.s32.totalorder %s198, %s212
    %p214 = scmp.eq.s32.totalorder %s26, 0
    %p215 = por %p213, %p214
    %s217 = sadd.s32 %s216, 1
    %p220 = scmp.eq.s32.totalorder %s20, 1
    %p221 = scmp.ne.s32.totalorder %s216, %s218
    %p222 = scmp.eq.s32.totalorder %s20, 0
    %p223 = por %p221, %p222
    %p224 = scmp.ne.s32.totalorder %s216, %s218
    %p225 = scmp.eq.s32.totalorder %s25, 1
    %p226 = por %p224, %p225
    %p227 = scmp.ne.s32.totalorder %s218, %s219
    %p228 = scmp.eq.s32.totalorder %s25, 0
    %p229 = por %p227, %p228
    %p230 = scmp.ne.s32.totalorder %s218, %s219
    %p231 = scmp.eq.s32.totalorder %s26, 1
    %p232 = por %p230, %p231
    %p234 = scmp.ne.s32.totalorder %s219, %s233
    %p235 = scmp.eq.s32.totalorder %s26, 0
    %p236 = por %p234, %p235
    %s238 = sadd.s32 %s237, 1
    %p241 = scmp.eq.s32.totalorder %s20, 1
    %p242 = scmp.ne.s32.totalorder %s237, %s239
    %p243 = scmp.eq.s32.totalorder %s20, 0
    %p244 = por %p242, %p243
    %p245 = scmp.ne.s32.totalorder %s237, %s239
    %p246 = scmp.eq.s32.totalorder %s25, 1
    %p247 = por %p245, %p246
    %p248 = scmp.ne.s32.totalorder %s239, %s240
    %p249 = scmp.eq.s32.totalorder %s25, 0
    %p250 = por %p248, %p249
    %p251 = scmp.ne.s32.totalorder %s239, %s240
    %p252 = scmp.eq.s32.totalorder %s26, 1
    %p253 = por %p251, %p252
    %p255 = scmp.ne.s32.totalorder %s240, %s254
    %p256 = scmp.eq.s32.totalorder %s26, 0
    %p257 = por %p255, %p256
    %s259 = sadd.s32 %s258, 1
    %p262 = scmp.eq.s32.totalorder %s20, 1
    %p263 = scmp.ne.s32.totalorder %s258, %s260
    %p264 = scmp.eq.s32.totalorder %s20, 0
    %p265 = por %p263, %p264
    %p266 = scmp.ne.s32.totalorder %s258, %s260
    %p267 = scmp.eq.s32.totalorder %s25, 1
    %p268 = por %p266, %p267
    %p269 = scmp.ne.s32.totalorder %s260, %s261
    %p270 = scmp.eq.s32.totalorder %s25, 0
    %p271 = por %p269, %p270
    %p272 = scmp.ne.s32.totalorder %s260, %s261
    %p273 = scmp.eq.s32.totalorder %s26, 1
    %p274 = por %p272, %p273
    %p276 = scmp.ne.s32.totalorder %s261, %s275
    %p277 = scmp.eq.s32.totalorder %s26, 0
    %p278 = por %p276, %p277
    %s280 = sadd.s32 %s279, 1
    %p283 = scmp.eq.s32.totalorder %s20, 1
    %p284 = scmp.ne.s32.totalorder %s279, %s281
    %p285 = scmp.eq.s32.totalorder %s20, 0
    %p286 = por %p284, %p285
    %p287 = scmp.ne.s32.totalorder %s279, %s281
    %p288 = scmp.eq.s32.totalorder %s25, 1
    %p289 = por %p287, %p288
    %p290 = scmp.ne.s32.totalorder %s281, %s282
    %p291 = scmp.eq.s32.totalorder %s25, 0
    %p292 = por %p290, %p291
    %p293 = scmp.ne.s32.totalorder %s281, %s282
    %p294 = scmp.eq.s32.totalorder %s26, 1
    %p295 = por %p293, %p294
    %p297 = scmp.ne.s32.totalorder %s282, %s296
    %p298 = scmp.eq.s32.totalorder %s26, 0
    %p299 = por %p297, %p298
    %s301 = sadd.s32 %s300, 1
    %p304 = scmp.eq.s32.totalorder %s20, 1
    %p305 = scmp.ne.s32.totalorder %s300, %s302
    %p306 = scmp.eq.s32.totalorder %s20, 0
    %p307 = por %p305, %p306
    %p308 = scmp.ne.s32.totalorder %s300, %s302
    %p309 = scmp.eq.s32.totalorder %s25, 1
    %p310 = por %p308, %p309
    %p311 = scmp.ne.s32.totalorder %s302, %s303
    %p312 = scmp.eq.s32.totalorder %s25, 0
    %p313 = por %p311, %p312
    %p314 = scmp.ne.s32.totalorder %s302, %s303
    %p315 = scmp.eq.s32.totalorder %s26, 1
    %p316 = por %p314, %p315
    %p318 = scmp.ne.s32.totalorder %s303, %s317
    %p319 = scmp.eq.s32.totalorder %s26, 0
    %p320 = por %p318, %p319
    %s322 = sadd.s32 %s321, 1
    %p325 = scmp.eq.s32.totalorder %s20, 1
    %p326 = scmp.ne.s32.totalorder %s321, %s323
    %p327 = scmp.eq.s32.totalorder %s20, 0
    %p328 = por %p326, %p327
    %p329 = scmp.ne.s32.totalorder %s321, %s323
    %p330 = scmp.eq.s32.totalorder %s25, 1
    %p331 = por %p329, %p330
    %p332 = scmp.ne.s32.totalorder %s323, %s324
    %p333 = scmp.eq.s32.totalorder %s25, 0
    %p334 = por %p332, %p333
    %p335 = scmp.ne.s32.totalorder %s323, %s324
    %p336 = scmp.eq.s32.totalorder %s26, 1
    %p337 = por %p335, %p336
    %p339 = scmp.ne.s32.totalorder %s324, %s338
    %p340 = scmp.eq.s32.totalorder %s26, 0
    %p341 = por %p339, %p340
    %s342 = ssub.s32 %s20, %s27
    %p343 = scmp.eq.s32.totalorder %s342, 0
    %s345 = sadd.s32 %s344, 1
    %s346 = scalar_select %p343, %s344, %s345
    %p349 = pneg %p343
    %p350 = scmp.eq.s32.totalorder %s20, 1
    %p351 = por %p349, %p350
    %p352 = scmp.ne.s32.totalorder %s344, %s347
    %p353 = scmp.eq.s32.totalorder %s20, 0
    %p354 = por %p352, %p353
    %p355 = scmp.ne.s32.totalorder %s344, %s347
    %p356 = scmp.eq.s32.totalorder %s25, 1
    %p357 = por %p355, %p356
    %p358 = scmp.ne.s32.totalorder %s347, %s348
    %p359 = scmp.eq.s32.totalorder %s25, 0
    %p360 = por %p358, %p359
    %p361 = scmp.ne.s32.totalorder %s347, %s348
    %p362 = scmp.eq.s32.totalorder %s26, 1
    %p363 = por %p361, %p362
    %p365 = scmp.ne.s32.totalorder %s348, %s364
    %p366 = scmp.eq.s32.totalorder %s26, 0
    %p367 = por %p365, %p366
    %p368 = scmp.le.s32.totalorder 1, %s20
    %p369 = scmp.lt.s32.totalorder %s20, 3
    %p370 = pnand %p368, %p369
    %p371 = pneg %p370
    // Predicated region
    $region9: #{fno_block_t_theta.3} parent=5 // pred_check
      _
    $region10: #{fno_block_t_theta.3} parent=5 // pred_check_branch
      %373 = sbr.rel (%p370) target = $region12
    $region11: #{fno_block_t_theta.3} parent=5 // pred_region
      %s374 = ssub.s32 %s20, 1
      // Predicated region
      $region13: #{fno_block_t_theta.3} parent=11 // pred_check
        %p375 = pneg %p145
      $region14: #{fno_block_t_theta.3} parent=11 // pred_check_branch
        %377 = sbr.rel (%p375) target = $region16
      $region15: #{fno_block_t_theta.3} parent=11 // pred_region
        _
      $region16: #{fno_block_t_theta.3} parent=11 // pred_fallthru
        _
      // Predicated region
      $region17: #{fno_block_t_theta.3} parent=11 // pred_check
        %p378 = pneg %p166
      $region18: #{fno_block_t_theta.3} parent=11 // pred_check_branch
        %380 = sbr.rel (%p378) target = $region20
      $region19: #{fno_block_t_theta.3} parent=11 // pred_region
        _
      $region20: #{fno_block_t_theta.3} parent=11 // pred_fallthru
        _
      // Predicated region
      $region21: #{fno_block_t_theta.3} parent=11 // pred_check
        %p381 = pneg %p187
      $region22: #{fno_block_t_theta.3} parent=11 // pred_check_branch
        %383 = sbr.rel (%p381) target = $region24
      $region23: #{fno_block_t_theta.3} parent=11 // pred_region
        _
      $region24: #{fno_block_t_theta.3} parent=11 // pred_fallthru
        _
      // Predicated region
      $region25: #{fno_block_t_theta.3} parent=11 // pred_check
        %p384 = pneg %p208
      $region26: #{fno_block_t_theta.3} parent=11 // pred_check_branch
        %386 = sbr.rel (%p384) target = $region28
      $region27: #{fno_block_t_theta.3} parent=11 // pred_region
        _
      $region28: #{fno_block_t_theta.3} parent=11 // pred_fallthru
        _
      // Predicated region
      $region29: #{fno_block_t_theta.3} parent=11 // pred_check
        %p387 = pneg %p229
      $region30: #{fno_block_t_theta.3} parent=11 // pred_check_branch
        %389 = sbr.rel (%p387) target = $region32
      $region31: #{fno_block_t_theta.3} parent=11 // pred_region
        _
      $region32: #{fno_block_t_theta.3} parent=11 // pred_fallthru
        _
      // Predicated region
      $region33: #{fno_block_t_theta.3} parent=11 // pred_check
        %p390 = pneg %p250
      $region34: #{fno_block_t_theta.3} parent=11 // pred_check_branch
        %392 = sbr.rel (%p390) target = $region36
      $region35: #{fno_block_t_theta.3} parent=11 // pred_region
        _
      $region36: #{fno_block_t_theta.3} parent=11 // pred_fallthru
        _
      // Predicated region
      $region37: #{fno_block_t_theta.3} parent=11 // pred_check
        %p393 = pneg %p271
      $region38: #{fno_block_t_theta.3} parent=11 // pred_check_branch
        %395 = sbr.rel (%p393) target = $region40
      $region39: #{fno_block_t_theta.3} parent=11 // pred_region
        _
      $region40: #{fno_block_t_theta.3} parent=11 // pred_fallthru
        _
      // Predicated region
      $region41: #{fno_block_t_theta.3} parent=11 // pred_check
        %p396 = pneg %p292
      $region42: #{fno_block_t_theta.3} parent=11 // pred_check_branch
        %398 = sbr.rel (%p396) target = $region44
      $region43: #{fno_block_t_theta.3} parent=11 // pred_region
        _
      $region44: #{fno_block_t_theta.3} parent=11 // pred_fallthru
        _
      // Predicated region
      $region45: #{fno_block_t_theta.3} parent=11 // pred_check
        %p399 = pneg %p313
      $region46: #{fno_block_t_theta.3} parent=11 // pred_check_branch
        %401 = sbr.rel (%p399) target = $region48
      $region47: #{fno_block_t_theta.3} parent=11 // pred_region
        _
      $region48: #{fno_block_t_theta.3} parent=11 // pred_fallthru
        _
      // Predicated region
      $region49: #{fno_block_t_theta.3} parent=11 // pred_check
        %p402 = pneg %p334
      $region50: #{fno_block_t_theta.3} parent=11 // pred_check_branch
        %404 = sbr.rel (%p402) target = $region52
      $region51: #{fno_block_t_theta.3} parent=11 // pred_region
        _
      $region52: #{fno_block_t_theta.3} parent=11 // pred_fallthru
        _
    $region12: #{fno_block_t_theta.3} parent=5 // pred_fallthru
      _
    %p405 = scmp.lt.s32.totalorder %s20, 2
    // Predicated region
    $region53: #{fno_block_t_theta.3} parent=5 // pred_check
      %p406 = pneg %p405
    $region54: #{fno_block_t_theta.3} parent=5 // pred_check_branch
      %408 = sbr.rel (%p406) target = $region56
    $region55: #{fno_block_t_theta.3} parent=5 // pred_region
      // Predicated region
      $region57: #{fno_block_t_theta.3} parent=55 // pred_check
        %p409 = pneg %p40
      $region58: #{fno_block_t_theta.3} parent=55 // pred_check_branch
        %411 = sbr.rel (%p409) target = $region60
      $region59: #{fno_block_t_theta.3} parent=55 // pred_region
        %p412 = scmp.lt.s32.totalorder %s20, 1
        %s413 = scalar_select %p412, %s20, 1
        %s414 = smul.addr %s413, 2
        %s415 = smul.addr %s414, 4
        %s416 = scalar_lea.vmem %s0, %s415
      $region60: #{fno_block_t_theta.3} parent=55 // pred_fallthru
        _
      // Predicated region
      $region61: #{fno_block_t_theta.3} parent=55 // pred_check
        %p417 = pneg %p66
      $region62: #{fno_block_t_theta.3} parent=55 // pred_check_branch
        %419 = sbr.rel (%p417) target = $region64
      $region63: #{fno_block_t_theta.3} parent=55 // pred_region
        %p420 = scmp.lt.s32.totalorder %s20, 1
        %s421 = scalar_select %p420, %s20, 1
        %s422 = smul.addr %s421, 2
        %s423 = smul.addr %s422, 4
        %s424 = scalar_lea.vmem %s1, %s423
      $region64: #{fno_block_t_theta.3} parent=55 // pred_fallthru
        _
      // Predicated region
      $region65: #{fno_block_t_theta.3} parent=55 // pred_check
        %p425 = pneg %p92
      $region66: #{fno_block_t_theta.3} parent=55 // pred_check_branch
        %427 = sbr.rel (%p425) target = $region68
      $region67: #{fno_block_t_theta.3} parent=55 // pred_region
        %p428 = scmp.lt.s32.totalorder %s20, 1
        %s429 = scalar_select %p428, %s20, 1
        %s430 = smul.addr %s429, 2
        %s431 = smul.addr %s430, 8
        %s432 = scalar_lea.vmem %s2, %s431
      $region68: #{fno_block_t_theta.3} parent=55 // pred_fallthru
        _
      // Predicated region
      $region69: #{fno_block_t_theta.3} parent=55 // pred_check
        %p433 = pneg %p118
      $region70: #{fno_block_t_theta.3} parent=55 // pred_check_branch
        %435 = sbr.rel (%p433) target = $region72
      $region71: #{fno_block_t_theta.3} parent=55 // pred_region
        %p436 = scmp.lt.s32.totalorder %s20, 1
        %s437 = scalar_select %p436, %s20, 1
        %s438 = smul.addr %s437, 2
        %s439 = smul.addr %s438, 8
        %s440 = scalar_lea.vmem %s3, %s439
      $region72: #{fno_block_t_theta.3} parent=55 // pred_fallthru
        _
    $region56: #{fno_block_t_theta.3} parent=5 // pred_fallthru
      _
    %p441 = scmp.le.s32.totalorder 1, %s20
    %p442 = scmp.lt.s32.totalorder %s20, 3
    %p443 = pnand %p441, %p442
    %p444 = pneg %p443
    // Predicated region
    $region73: #{fno_block_t_theta.3} parent=5 // pred_check
      _
    $region74: #{fno_block_t_theta.3} parent=5 // pred_check_branch
      %446 = sbr.rel (%p443) target = $region76
    $region75: #{fno_block_t_theta.3} parent=5 // pred_region
      %s447 = ssub.s32 %s20, 1
      %p448 = scmp.lt.s32.totalorder %s25, 1
      %s449 = scalar_select %p448, %s25, 1
      %s450 = smul.addr %s449, 2
      %s451 = smul.addr %s450, 4
      %s452 = scalar_lea.vmem %s0, %s451
      %p453 = pneg %p46
      %p454 = pneg %p43
      %p455 = scmp.lt.s32.totalorder %s25, 1
      %s456 = scalar_select %p455, %s25, 1
      %s457 = smul.addr %s456, 2
      %s458 = smul.addr %s457, 4
      %s459 = scalar_lea.vmem %s1, %s458
      %p460 = pneg %p72
      %p461 = pneg %p69
      %p462 = scmp.lt.s32.totalorder %s25, 1
      %s463 = scalar_select %p462, %s25, 1
      %s464 = smul.addr %s463, 2
      %s465 = smul.addr %s464, 8
      %s466 = scalar_lea.vmem %s2, %s465
      %p467 = pneg %p98
      %p468 = pneg %p95
      %p469 = scmp.lt.s32.totalorder %s25, 1
      %s470 = scalar_select %p469, %s25, 1
      %s471 = smul.addr %s470, 2
      %s472 = smul.addr %s471, 8
      %s473 = scalar_lea.vmem %s3, %s472
      %p474 = pneg %p124
      %p475 = pneg %p121
      %p476 = pneg %p145
      %p477 = pneg %p142
      %p478 = pneg %p166
      %p479 = pneg %p163
      %p480 = pneg %p187
      %p481 = pneg %p184
      %p482 = pneg %p208
      %p483 = pneg %p205
      %p484 = pneg %p229
      %p485 = pneg %p226
      %p486 = pneg %p250
      %p487 = pneg %p247
      %p488 = pneg %p271
      %p489 = pneg %p268
      %p490 = pneg %p292
      %p491 = pneg %p289
      %p492 = pneg %p313
      %p493 = pneg %p310
      %p494 = pneg %p334
      %p495 = pneg %p331
      %p496 = pneg %p360
      %p497 = pneg %p357
      %p498 = scmp.lt.s32.totalorder %s25, 1
      %s499 = scalar_select %p498, %s25, 1
      %s500 = smul.addr %s499, 2
      %s501 = smul.addr %s500, 4
      %s502 = scalar_lea.vmem %s14, %s501
      %p503 = scmp.lt.s32.totalorder %s25, 1
      %s504 = scalar_select %p503, %s25, 1
      %s505 = smul.addr %s504, 2
      %s506 = smul.addr %s505, 4
      %s507 = scalar_lea.vmem %s0, %s506
      %p508 = scmp.lt.s32.totalorder %s25, 1
      %s509 = scalar_select %p508, %s25, 1
      %s510 = smul.addr %s509, 2
      %s511 = smul.addr %s510, 4
      %s512 = scalar_lea.vmem %s1, %s511
      %p513 = scmp.lt.s32.totalorder %s25, 1
      %s514 = scalar_select %p513, %s25, 1
      %s515 = smul.addr %s514, 2
      %s516 = smul.addr %s515, 8
      %s517 = scalar_lea.vmem %s2, %s516
      %p518 = scmp.lt.s32.totalorder %s25, 1
      %s519 = scalar_select %p518, %s25, 1
      %s520 = smul.addr %s519, 2
      %s521 = smul.addr %s520, 8
      %s522 = scalar_lea.vmem %s3, %s521
      %p523 = scmp.lt.s32.totalorder %s25, 1
      %s524 = scalar_select %p523, %s25, 1
      %s525 = smul.addr %s524, 2
      %s526 = smul.addr %s525, 4
      %s527 = scalar_lea.vmem %s14, %s526
      %v528 = vld [vmem:[%s517] sm:$0xff]
      %v529 = vld [vmem:[%s517 + $0x8] sm:$0xff]
      %v530 = vld [vmem:[%s522] sm:$0xff]
      %v531 = vld [vmem:[%s522 + $0x8] sm:$0xff]
      %v532 = vld [vmem:[%s6] sm:$0xf]
      %v533 = vld [vmem:[%s7] sm:$0xf]
      %vm534 = vcmask 130048
      %v536 = vsel %vm534, %v532, 0
      %538 = vmatprep.subr.mxu0 0.0
      %v539 = vand.u32 %v528, 4294901760
      %540 = vmatpush1.msra.mxu0 %v539
      %541 = vmatprep.subr.mxu0 0.0
      %v542 = vand.u32 %v529, 4294901760
      %543 = vmatpush1.msra.mxu0 %v542
      %544 = vmatprep.subr.mxu0 0.0
      %545 = vmatpush1.msra.mxu0 0.0
      %546 = vmatprep.subr.mxu0 0.0
      %547 = vmatpush1.msra.mxu0 0.0
      %548 = vmatprep.subr.mxu0 0.0
      %549 = vmatpush1.msra.mxu0 0.0
      %550 = vmatprep.subr.mxu0 0.0
      %551 = vmatpush1.msra.mxu0 0.0
      %552 = vmatprep.subr.mxu0 0.0
      %553 = vmatpush1.msra.mxu0 0.0
      %554 = vmatprep.subr.mxu0 0.0
      %555 = vmatpush1.msra.mxu0 0.0
      %556 = vmatprep.subr.mxu0 0.0
      %557 = vmatpush1.msra.mxu0 0.0
      %558 = vmatprep.subr.mxu0 0.0
      %559 = vmatpush1.msra.mxu0 0.0
      %560 = vmatprep.subr.mxu0 0.0
      %561 = vmatpush1.msra.mxu0 0.0
      %562 = vmatprep.subr.mxu0 0.0
      %563 = vmatpush1.msra.mxu0 0.0
      %564 = vmatprep.subr.mxu0 0.0
      %565 = vmatpush1.msra.mxu0 0.0
      %566 = vmatprep.subr.mxu0 0.0
      %567 = vmatpush1.msra.mxu0 0.0
      %568 = vmatprep.subr.mxu0 0.0
      %569 = vmatpush1.msra.mxu0 0.0
      %570 = vmatprep.subr.mxu0 0.0
      %571 = vmatpush1.msra.mxu0 0.0
      %572 = vmatprep.subr.mxu0 0.0
      %573 = vmatpush1.msra.mxu0 0.0
      %574 = vmatprep.subr.mxu0 0.0
      %575 = vmatpush1.msra.mxu0 0.0
      %576 = vmatprep.subr.mxu0 0.0
      %577 = vmatpush1.msra.mxu0 0.0
      %578 = vmatprep.subr.mxu0 0.0
      %579 = vmatpush1.msra.mxu0 0.0
      %580 = vmatprep.subr.mxu0 0.0
      %581 = vmatpush1.msra.mxu0 0.0
      %582 = vmatprep.subr.mxu0 0.0
      %583 = vmatpush1.msra.mxu0 0.0
      %584 = vmatprep.subr.mxu0 0.0
      %585 = vmatpush1.msra.mxu0 0.0
      %586 = vmatprep.subr.mxu0 0.0
      %587 = vmatpush1.msra.mxu0 0.0
      %588 = vmatprep.subr.mxu0 0.0
      %589 = vmatpush1.msra.mxu0 0.0
      %590 = vmatprep.subr.mxu0 0.0
      %591 = vmatpush1.msra.mxu0 0.0
      %592 = vmatprep.subr.mxu0 0.0
      %593 = vmatpush1.msra.mxu0 0.0
      %594 = vmatprep.subr.mxu0 0.0
      %595 = vmatpush1.msra.mxu0 0.0
      %596 = vmatprep.subr.mxu0 0.0
      %597 = vmatpush1.msra.mxu0 0.0
      %598 = vmatprep.subr.mxu0 0.0
      %599 = vmatpush1.msra.mxu0 0.0
      %600 = vmatprep.subr.mxu0 0.0
      %601 = vmatpush1.msra.mxu0 0.0
      %602 = vmatprep.subr.mxu0 0.0
      %603 = vmatpush1.msra.mxu0 0.0
      %604 = vmatprep.mubr.f32.mxu0 0.0
      %v605 = vand.u32 %v536, 4294901760
      %v606 = vsub.f32 %v536, %v605
      %v607 = vand.u32 %v606, 4294901760
      %v608 = vsub.f32 %v606, %v607
      %v609 = vand.u32 %v608, 4294901760
      %610 = vmatmul.mubr.f32.gmra.mrb[0].mxu0 %v609
      %v611 = vpop.f32.mrb[0].mxu0
      %v612 = vadd.f32 %v533, %v611
      %v613 = vpop.f32.mrb[0].mxu0
      %614 = vdwg.mxu0
      %615 = vmatprep.subr.mxu0 0.0
      %v616 = vand.u32 %v528, 4294901760
      %v617 = vsub.f32 %v528, %v616
      %v618 = vand.u32 %v617, 4294901760
      %v619 = vsub.f32 %v617, %v618
      %v620 = vand.u32 %v619, 4294901760
      %621 = vmatpush1.msra.mxu0 %v620
      %622 = vmatprep.subr.mxu0 0.0
      %v623 = vand.u32 %v529, 4294901760
      %v624 = vsub.f32 %v529, %v623
      %v625 = vand.u32 %v624, 4294901760
      %v626 = vsub.f32 %v624, %v625
      %v627 = vand.u32 %v626, 4294901760
      %628 = vmatpush1.msra.mxu0 %v627
      %629 = vmatprep.subr.mxu0 0.0
      %630 = vmatpush1.msra.mxu0 0.0
      %631 = vmatprep.subr.mxu0 0.0
      %632 = vmatpush1.msra.mxu0 0.0
      %633 = vmatprep.subr.mxu0 0.0
      %634 = vmatpush1.msra.mxu0 0.0
      %635 = vmatprep.subr.mxu0 0.0
      %636 = vmatpush1.msra.mxu0 0.0
      %637 = vmatprep.subr.mxu0 0.0
      %638 = vmatpush1.msra.mxu0 0.0
      %639 = vmatprep.subr.mxu0 0.0
      %640 = vmatpush1.msra.mxu0 0.0
      %641 = vmatprep.subr.mxu0 0.0
      %642 = vmatpush1.msra.mxu0 0.0
      %643 = vmatprep.subr.mxu0 0.0
      %644 = vmatpush1.msra.mxu0 0.0
      %645 = vmatprep.subr.mxu0 0.0
      %646 = vmatpush1.msra.mxu0 0.0
      %647 = vmatprep.subr.mxu0 0.0
      %648 = vmatpush1.msra.mxu0 0.0
      %649 = vmatprep.subr.mxu0 0.0
      %650 = vmatpush1.msra.mxu0 0.0
      %651 = vmatprep.subr.mxu0 0.0
      %652 = vmatpush1.msra.mxu0 0.0
      %653 = vmatprep.subr.mxu0 0.0
      %654 = vmatpush1.msra.mxu0 0.0
      %655 = vmatprep.subr.mxu0 0.0
      %656 = vmatpush1.msra.mxu0 0.0
      %657 = vmatprep.subr.mxu0 0.0
      %658 = vmatpush1.msra.mxu0 0.0
      %659 = vmatprep.subr.mxu0 0.0
      %660 = vmatpush1.msra.mxu0 0.0
      %661 = vmatprep.subr.mxu0 0.0
      %662 = vmatpush1.msra.mxu0 0.0
      %663 = vmatprep.subr.mxu0 0.0
      %664 = vmatpush1.msra.mxu0 0.0
      %665 = vmatprep.subr.mxu0 0.0
      %666 = vmatpush1.msra.mxu0 0.0
      %667 = vmatprep.subr.mxu0 0.0
      %668 = vmatpush1.msra.mxu0 0.0
      %669 = vmatprep.subr.mxu0 0.0
      %670 = vmatpush1.msra.mxu0 0.0
      %671 = vmatprep.subr.mxu0 0.0
      %672 = vmatpush1.msra.mxu0 0.0
      %673 = vmatprep.subr.mxu0 0.0
      %674 = vmatpush1.msra.mxu0 0.0
      %675 = vmatprep.subr.mxu0 0.0
      %676 = vmatpush1.msra.mxu0 0.0
      %677 = vmatprep.subr.mxu0 0.0
      %678 = vmatpush1.msra.mxu0 0.0
      %679 = vmatprep.subr.mxu0 0.0
      %680 = vmatpush1.msra.mxu0 0.0
      %681 = vmatprep.subr.mxu0 0.0
      %682 = vmatpush1.msra.mxu0 0.0
      %683 = vmatprep.subr.mxu0 0.0
      %684 = vmatpush1.msra.mxu0 0.0
      %685 = vmatprep.subr.mxu0 0.0
      %686 = vmatpush1.msra.mxu0 0.0
      %687 = vmatprep.subr.mxu0 0.0
      %688 = vmatpush1.msra.mxu0 0.0
      %689 = vmatprep.mubr.f32.mxu0 0.0
      %v690 = vand.u32 %v536, 4294901760
      %691 = vmatmul.mubr.f32.gmra.mrb[0].mxu0 %v690
      %v692 = vpop.f32.mrb[0].mxu0
      %v693 = vadd.f32 %v612, %v692
      %v694 = vpop.f32.mrb[0].mxu0
      %695 = vdwg.mxu0
      %696 = vmatprep.subr.mxu0 0.0
      %v697 = vand.u32 %v528, 4294901760
      %v698 = vsub.f32 %v528, %v697
      %699 = vmatpush1.msra.mxu0 %v698
      %700 = vmatprep.subr.mxu0 0.0
      %v701 = vand.u32 %v529, 4294901760
      %v702 = vsub.f32 %v529, %v701
      %703 = vmatpush1.msra.mxu0 %v702
      %704 = vmatprep.subr.mxu0 0.0
      %705 = vmatpush1.msra.mxu0 0.0
      %706 = vmatprep.subr.mxu0 0.0
      %707 = vmatpush1.msra.mxu0 0.0
      %708 = vmatprep.subr.mxu0 0.0
      %709 = vmatpush1.msra.mxu0 0.0
      %710 = vmatprep.subr.mxu0 0.0
      %711 = vmatpush1.msra.mxu0 0.0
      %712 = vmatprep.subr.mxu0 0.0
      %713 = vmatpush1.msra.mxu0 0.0
      %714 = vmatprep.subr.mxu0 0.0
      %715 = vmatpush1.msra.mxu0 0.0
      %716 = vmatprep.subr.mxu0 0.0
      %717 = vmatpush1.msra.mxu0 0.0
      %718 = vmatprep.subr.mxu0 0.0
      %719 = vmatpush1.msra.mxu0 0.0
      %720 = vmatprep.subr.mxu0 0.0
      %721 = vmatpush1.msra.mxu0 0.0
      %722 = vmatprep.subr.mxu0 0.0
      %723 = vmatpush1.msra.mxu0 0.0
      %724 = vmatprep.subr.mxu0 0.0
      %725 = vmatpush1.msra.mxu0 0.0
      %726 = vmatprep.subr.mxu0 0.0
      %727 = vmatpush1.msra.mxu0 0.0
      %728 = vmatprep.subr.mxu0 0.0
      %729 = vmatpush1.msra.mxu0 0.0
      %730 = vmatprep.subr.mxu0 0.0
      %731 = vmatpush1.msra.mxu0 0.0
      %732 = vmatprep.subr.mxu0 0.0
      %733 = vmatpush1.msra.mxu0 0.0
      %734 = vmatprep.subr.mxu0 0.0
      %735 = vmatpush1.msra.mxu0 0.0
      %736 = vmatprep.subr.mxu0 0.0
      %737 = vmatpush1.msra.mxu0 0.0
      %738 = vmatprep.subr.mxu0 0.0
      %739 = vmatpush1.msra.mxu0 0.0
      %740 = vmatprep.subr.mxu0 0.0
      %741 = vmatpush1.msra.mxu0 0.0
      %742 = vmatprep.subr.mxu0 0.0
      %743 = vmatpush1.msra.mxu0 0.0
      %744 = vmatprep.subr.mxu0 0.0
      %745 = vmatpush1.msra.mxu0 0.0
      %746 = vmatprep.subr.mxu0 0.0
      %747 = vmatpush1.msra.mxu0 0.0
      %748 = vmatprep.subr.mxu0 0.0
      %749 = vmatpush1.msra.mxu0 0.0
      %750 = vmatprep.subr.mxu0 0.0
      %751 = vmatpush1.msra.mxu0 0.0
      %752 = vmatprep.subr.mxu0 0.0
      %753 = vmatpush1.msra.mxu0 0.0
      %754 = vmatprep.subr.mxu0 0.0
      %755 = vmatpush1.msra.mxu0 0.0
      %756 = vmatprep.subr.mxu0 0.0
      %757 = vmatpush1.msra.mxu0 0.0
      %758 = vmatprep.subr.mxu0 0.0
      %759 = vmatpush1.msra.mxu0 0.0
      %760 = vmatprep.subr.mxu0 0.0
      %761 = vmatpush1.msra.mxu0 0.0
      %762 = vmatprep.subr.mxu0 0.0
      %763 = vmatpush1.msra.mxu0 0.0
      %764 = vmatprep.mubr.f32.mxu0 0.0
      %v765 = vand.u32 %v536, 4294901760
      %v766 = vsub.f32 %v536, %v765
      %767 = vmatmul.mubr.f32.gmra.mrb[0].mxu0 %v766
      %v768 = vpop.f32.mrb[0].mxu0
      %v769 = vadd.f32 %v693, %v768
      %v770 = vpop.f32.mrb[0].mxu0
      %771 = vdwg.mxu0
      %772 = vmatprep.subr.mxu0 0.0
      %v773 = vand.u32 %v528, 4294901760
      %774 = vmatpush1.msra.mxu0 %v773
      %775 = vmatprep.subr.mxu0 0.0
      %v776 = vand.u32 %v529, 4294901760
      %777 = vmatpush1.msra.mxu0 %v776
      %778 = vmatprep.subr.mxu0 0.0
      %779 = vmatpush1.msra.mxu0 0.0
      %780 = vmatprep.subr.mxu0 0.0
      %781 = vmatpush1.msra.mxu0 0.0
      %782 = vmatprep.subr.mxu0 0.0
      %783 = vmatpush1.msra.mxu0 0.0
      %784 = vmatprep.subr.mxu0 0.0
      %785 = vmatpush1.msra.mxu0 0.0
      %786 = vmatprep.subr.mxu0 0.0
      %787 = vmatpush1.msra.mxu0 0.0
      %788 = vmatprep.subr.mxu0 0.0
      %789 = vmatpush1.msra.mxu0 0.0
      %790 = vmatprep.subr.mxu0 0.0
      %791 = vmatpush1.msra.mxu0 0.0
      %792 = vmatprep.subr.mxu0 0.0
      %793 = vmatpush1.msra.mxu0 0.0
      %794 = vmatprep.subr.mxu0 0.0
      %795 = vmatpush1.msra.mxu0 0.0
      %796 = vmatprep.subr.mxu0 0.0
      %797 = vmatpush1.msra.mxu0 0.0
      %798 = vmatprep.subr.mxu0 0.0
      %799 = vmatpush1.msra.mxu0 0.0
      %800 = vmatprep.subr.mxu0 0.0
      %801 = vmatpush1.msra.mxu0 0.0
      %802 = vmatprep.subr.mxu0 0.0
      %803 = vmatpush1.msra.mxu0 0.0
      %804 = vmatprep.subr.mxu0 0.0
      %805 = vmatpush1.msra.mxu0 0.0
      %806 = vmatprep.subr.mxu0 0.0
      %807 = vmatpush1.msra.mxu0 0.0
      %808 = vmatprep.subr.mxu0 0.0
      %809 = vmatpush1.msra.mxu0 0.0
      %810 = vmatprep.subr.mxu0 0.0
      %811 = vmatpush1.msra.mxu0 0.0
      %812 = vmatprep.subr.mxu0 0.0
      %813 = vmatpush1.msra.mxu0 0.0
      %814 = vmatprep.subr.mxu0 0.0
      %815 = vmatpush1.msra.mxu0 0.0
      %816 = vmatprep.subr.mxu0 0.0
      %817 = vmatpush1.msra.mxu0 0.0
      %818 = vmatprep.subr.mxu0 0.0
      %819 = vmatpush1.msra.mxu0 0.0
      %820 = vmatprep.subr.mxu0 0.0
      %821 = vmatpush1.msra.mxu0 0.0
      %822 = vmatprep.subr.mxu0 0.0
      %823 = vmatpush1.msra.mxu0 0.0
      %824 = vmatprep.subr.mxu0 0.0
      %825 = vmatpush1.msra.mxu0 0.0
      %826 = vmatprep.subr.mxu0 0.0
      %827 = vmatpush1.msra.mxu0 0.0
      %828 = vmatprep.subr.mxu0 0.0
      %829 = vmatpush1.msra.mxu0 0.0
      %830 = vmatprep.subr.mxu0 0.0
      %831 = vmatpush1.msra.mxu0 0.0
      %832 = vmatprep.subr.mxu0 0.0
      %833 = vmatpush1.msra.mxu0 0.0
      %834 = vmatprep.subr.mxu0 0.0
      %835 = vmatpush1.msra.mxu0 0.0
      %836 = vmatprep.subr.mxu0 0.0
      %837 = vmatpush1.msra.mxu0 0.0
      %838 = vmatprep.mubr.f32.mxu0 0.0
      %v839 = vand.u32 %v536, 4294901760
      %v840 = vsub.f32 %v536, %v839
      %v841 = vand.u32 %v840, 4294901760
      %842 = vmatmul.mubr.f32.gmra.mrb[0].mxu0 %v841
      %v843 = vpop.f32.mrb[0].mxu0
      %v844 = vadd.f32 %v769, %v843
      %v845 = vpop.f32.mrb[0].mxu0
      %846 = vdwg.mxu0
      %847 = vmatprep.subr.mxu0 0.0
      %v848 = vand.u32 %v528, 4294901760
      %v849 = vsub.f32 %v528, %v848
      %v850 = vand.u32 %v849, 4294901760
      %851 = vmatpush1.msra.mxu0 %v850
      %852 = vmatprep.subr.mxu0 0.0
      %v853 = vand.u32 %v529, 4294901760
      %v854 = vsub.f32 %v529, %v853
      %v855 = vand.u32 %v854, 4294901760
      %856 = vmatpush1.msra.mxu0 %v855
      %857 = vmatprep.subr.mxu0 0.0
      %858 = vmatpush1.msra.mxu0 0.0
      %859 = vmatprep.subr.mxu0 0.0
      %860 = vmatpush1.msra.mxu0 0.0
      %861 = vmatprep.subr.mxu0 0.0
      %862 = vmatpush1.msra.mxu0 0.0
      %863 = vmatprep.subr.mxu0 0.0
      %864 = vmatpush1.msra.mxu0 0.0
      %865 = vmatprep.subr.mxu0 0.0
      %866 = vmatpush1.msra.mxu0 0.0
      %867 = vmatprep.subr.mxu0 0.0
      %868 = vmatpush1.msra.mxu0 0.0
      %869 = vmatprep.subr.mxu0 0.0
      %870 = vmatpush1.msra.mxu0 0.0
      %871 = vmatprep.subr.mxu0 0.0
      %872 = vmatpush1.msra.mxu0 0.0
      %873 = vmatprep.subr.mxu0 0.0
      %874 = vmatpush1.msra.mxu0 0.0
      %875 = vmatprep.subr.mxu0 0.0
      %876 = vmatpush1.msra.mxu0 0.0
      %877 = vmatprep.subr.mxu0 0.0
      %878 = vmatpush1.msra.mxu0 0.0
      %879 = vmatprep.subr.mxu0 0.0
      %880 = vmatpush1.msra.mxu0 0.0
      %881 = vmatprep.subr.mxu0 0.0
      %882 = vmatpush1.msra.mxu0 0.0
      %883 = vmatprep.subr.mxu0 0.0
      %884 = vmatpush1.msra.mxu0 0.0
      %885 = vmatprep.subr.mxu0 0.0
      %886 = vmatpush1.msra.mxu0 0.0
      %887 = vmatprep.subr.mxu0 0.0
      %888 = vmatpush1.msra.mxu0 0.0
      %889 = vmatprep.subr.mxu0 0.0
      %890 = vmatpush1.msra.mxu0 0.0
      %891 = vmatprep.subr.mxu0 0.0
      %892 = vmatpush1.msra.mxu0 0.0
      %893 = vmatprep.subr.mxu0 0.0
      %894 = vmatpush1.msra.mxu0 0.0
      %895 = vmatprep.subr.mxu0 0.0
      %896 = vmatpush1.msra.mxu0 0.0
      %897 = vmatprep.subr.mxu0 0.0
      %898 = vmatpush1.msra.mxu0 0.0
      %899 = vmatprep.subr.mxu0 0.0
      %900 = vmatpush1.msra.mxu0 0.0
      %901 = vmatprep.subr.mxu0 0.0
      %902 = vmatpush1.msra.mxu0 0.0
      %903 = vmatprep.subr.mxu0 0.0
      %904 = vmatpush1.msra.mxu0 0.0
      %905 = vmatprep.subr.mxu0 0.0
      %906 = vmatpush1.msra.mxu0 0.0
      %907 = vmatprep.subr.mxu0 0.0
      %908 = vmatpush1.msra.mxu0 0.0
      %909 = vmatprep.subr.mxu0 0.0
      %910 = vmatpush1.msra.mxu0 0.0
      %911 = vmatprep.subr.mxu0 0.0
      %912 = vmatpush1.msra.mxu0 0.0
      %913 = vmatprep.subr.mxu0 0.0
      %914 = vmatpush1.msra.mxu0 0.0
      %915 = vmatprep.subr.mxu0 0.0
      %916 = vmatpush1.msra.mxu0 0.0
      %917 = vmatprep.mubr.f32.mxu0 0.0
      %v918 = vand.u32 %v536, 4294901760
      %919 = vmatmul.mubr.f32.gmra.mrb[0].mxu0 %v918
      %v920 = vpop.f32.mrb[0].mxu0
      %v921 = vadd.f32 %v844, %v920
      %v922 = vpop.f32.mrb[0].mxu0
      %923 = vdwg.mxu0
      %924 = vmatprep.subr.mxu0 0.0
      %v925 = vand.u32 %v528, 4294901760
      %926 = vmatpush1.msra.mxu0 %v925
      %927 = vmatprep.subr.mxu0 0.0
      %v928 = vand.u32 %v529, 4294901760
      %929 = vmatpush1.msra.mxu0 %v928
      %930 = vmatprep.subr.mxu0 0.0
      %931 = vmatpush1.msra.mxu0 0.0
      %932 = vmatprep.subr.mxu0 0.0
      %933 = vmatpush1.msra.mxu0 0.0
      %934 = vmatprep.subr.mxu0 0.0
      %935 = vmatpush1.msra.mxu0 0.0
      %936 = vmatprep.subr.mxu0 0.0
      %937 = vmatpush1.msra.mxu0 0.0
      %938 = vmatprep.subr.mxu0 0.0
      %939 = vmatpush1.msra.mxu0 0.0
      %940 = vmatprep.subr.mxu0 0.0
      %941 = vmatpush1.msra.mxu0 0.0
      %942 = vmatprep.subr.mxu0 0.0
      %943 = vmatpush1.msra.mxu0 0.0
      %944 = vmatprep.subr.mxu0 0.0
      %945 = vmatpush1.msra.mxu0 0.0
      %946 = vmatprep.subr.mxu0 0.0
      %947 = vmatpush1.msra.mxu0 0.0
      %948 = vmatprep.subr.mxu0 0.0
      %949 = vmatpush1.msra.mxu0 0.0
      %950 = vmatprep.subr.mxu0 0.0
      %951 = vmatpush1.msra.mxu0 0.0
      %952 = vmatprep.subr.mxu0 0.0
      %953 = vmatpush1.msra.mxu0 0.0
      %954 = vmatprep.subr.mxu0 0.0
      %955 = vmatpush1.msra.mxu0 0.0
      %956 = vmatprep.subr.mxu0 0.0
      %957 = vmatpush1.msra.mxu0 0.0
      %958 = vmatprep.subr.mxu0 0.0
      %959 = vmatpush1.msra.mxu0 0.0
      %960 = vmatprep.subr.mxu0 0.0
      %961 = vmatpush1.msra.mxu0 0.0
      %962 = vmatprep.subr.mxu0 0.0
      %963 = vmatpush1.msra.mxu0 0.0
      %964 = vmatprep.subr.mxu0 0.0
      %965 = vmatpush1.msra.mxu0 0.0
      %966 = vmatprep.subr.mxu0 0.0
      %967 = vmatpush1.msra.mxu0 0.0
      %968 = vmatprep.subr.mxu0 0.0
      %969 = vmatpush1.msra.mxu0 0.0
      %970 = vmatprep.subr.mxu0 0.0
      %971 = vmatpush1.msra.mxu0 0.0
      %972 = vmatprep.subr.mxu0 0.0
      %973 = vmatpush1.msra.mxu0 0.0
      %974 = vmatprep.subr.mxu0 0.0
      %975 = vmatpush1.msra.mxu0 0.0
      %976 = vmatprep.subr.mxu0 0.0
      %977 = vmatpush1.msra.mxu0 0.0
      %978 = vmatprep.subr.mxu0 0.0
      %979 = vmatpush1.msra.mxu0 0.0
      %980 = vmatprep.subr.mxu0 0.0
      %981 = vmatpush1.msra.mxu0 0.0
      %982 = vmatprep.subr.mxu0 0.0
      %983 = vmatpush1.msra.mxu0 0.0
      %984 = vmatprep.subr.mxu0 0.0
      %985 = vmatpush1.msra.mxu0 0.0
      %986 = vmatprep.subr.mxu0 0.0
      %987 = vmatpush1.msra.mxu0 0.0
      %988 = vmatprep.subr.mxu0 0.0
      %989 = vmatpush1.msra.mxu0 0.0
      %990 = vmatprep.mubr.f32.mxu0 0.0
      %v991 = vand.u32 %v536, 4294901760
      %992 = vmatmul.mubr.f32.gmra.mrb[0].mxu0 %v991
      %v993 = vpop.f32.mrb[0].mxu0
      %v994 = vadd.f32 %v921, %v993
      %v995 = vpop.f32.mrb[0].mxu0
      %996 = vdwg.mxu0
      %v997 = vmul.f32 %v994, 0.5
      %v998 = vmul.f32 %v994, 0.044715
      %v999 = vmul.f32 %v998, %v994
      %v1000 = vmul.f32 %v999, %v994
      %v1001 = vadd.f32 %v994, %v1000
      %v1002 = vmul.f32 %v1001, 0.7978846
      %v1003 = vtanh.pop %v1002
      %v1004 = vadd.f32 %v1003, 1.0
      %v1005 = vmul.f32 %v997, %v1004
      %v1006 = vld [vmem:[%s8] sm:$0xf]
      %v1007 = vld [vmem:[%s9] sm:$0xf]
      %vm1008 = vcmask 31744
      %v1010 = vsel %vm1008, %v1006, 0
      %vm1012 = vcmask 1043456
      %v1014 = vsel %vm1012, %v1005, 0
      %1016 = vmatprep.subr.mxu0 0.0
      %v1017 = vand.u32 %v1014, 4294901760
      %1018 = vmatpush1.msra.mxu0 %v1017
      %1019 = vmatprep.subr.mxu0 0.0
      %1020 = vmatpush1.msra.mxu0 0.0
      %1021 = vmatprep.subr.mxu0 0.0
      %1022 = vmatpush1.msra.mxu0 0.0
      %1023 = vmatprep.subr.mxu0 0.0
      %1024 = vmatpush1.msra.mxu0 0.0
      %1025 = vmatprep.subr.mxu0 0.0
      %1026 = vmatpush1.msra.mxu0 0.0
      %1027 = vmatprep.subr.mxu0 0.0
      %1028 = vmatpush1.msra.mxu0 0.0
      %1029 = vmatprep.subr.mxu0 0.0
      %1030 = vmatpush1.msra.mxu0 0.0
      %1031 = vmatprep.subr.mxu0 0.0
      %1032 = vmatpush1.msra.mxu0 0.0
      %1033 = vmatprep.subr.mxu0 0.0
      %1034 = vmatpush1.msra.mxu0 0.0
      %1035 = vmatprep.subr.mxu0 0.0
      %1036 = vmatpush1.msra.mxu0 0.0
      %1037 = vmatprep.subr.mxu0 0.0
      %1038 = vmatpush1.msra.mxu0 0.0
      %1039 = vmatprep.subr.mxu0 0.0
      %1040 = vmatpush1.msra.mxu0 0.0
      %1041 = vmatprep.subr.mxu0 0.0
      %1042 = vmatpush1.msra.mxu0 0.0
      %1043 = vmatprep.subr.mxu0 0.0
      %1044 = vmatpush1.msra.mxu0 0.0
      %1045 = vmatprep.subr.mxu0 0.0
      %1046 = vmatpush1.msra.mxu0 0.0
      %1047 = vmatprep.subr.mxu0 0.0
      %1048 = vmatpush1.msra.mxu0 0.0
      %1049 = vmatprep.subr.mxu0 0.0
      %1050 = vmatpush1.msra.mxu0 0.0
      %1051 = vmatprep.subr.mxu0 0.0
      %1052 = vmatpush1.msra.mxu0 0.0
      %1053 = vmatprep.subr.mxu0 0.0
      %1054 = vmatpush1.msra.mxu0 0.0
      %1055 = vmatprep.subr.mxu0 0.0
      %1056 = vmatpush1.msra.mxu0 0.0
      %1057 = vmatprep.subr.mxu0 0.0
      %1058 = vmatpush1.msra.mxu0 0.0
      %1059 = vmatprep.subr.mxu0 0.0
      %1060 = vmatpush1.msra.mxu0 0.0
      %1061 = vmatprep.subr.mxu0 0.0
      %1062 = vmatpush1.msra.mxu0 0.0
      %1063 = vmatprep.subr.mxu0 0.0
      %1064 = vmatpush1.msra.mxu0 0.0
      %1065 = vmatprep.subr.mxu0 0.0
      %1066 = vmatpush1.msra.mxu0 0.0
      %1067 = vmatprep.subr.mxu0 0.0
      %1068 = vmatpush1.msra.mxu0 0.0
      %1069 = vmatprep.subr.mxu0 0.0
      %1070 = vmatpush1.msra.mxu0 0.0
      %1071 = vmatprep.subr.mxu0 0.0
      %1072 = vmatpush1.msra.mxu0 0.0
      %1073 = vmatprep.subr.mxu0 0.0
      %1074 = vmatpush1.msra.mxu0 0.0
      %1075 = vmatprep.subr.mxu0 0.0
      %1076 = vmatpush1.msra.mxu0 0.0
      %1077 = vmatprep.subr.mxu0 0.0
      %1078 = vmatpush1.msra.mxu0 0.0
      %1079 = vmatprep.subr.mxu0 0.0
      %1080 = vmatpush1.msra.mxu0 0.0
      %1081 = vmatprep.mubr.f32.mxu0 0.0
      %v1082 = vand.u32 %v1010, 4294901760
      %v1083 = vsub.f32 %v1010, %v1082
      %v1084 = vand.u32 %v1083, 4294901760
      %v1085 = vsub.f32 %v1083, %v1084
      %v1086 = vand.u32 %v1085, 4294901760
      %1087 = vmatmul.mubr.f32.gmra.mrb[0].mxu0 %v1086
      %v1088 = vpop.f32.mrb[0].mxu0
      %v1089 = vadd.f32 %v1007, %v1088
      %v1090 = vpop.f32.mrb[0].mxu0
      %1091 = vdwg.mxu0
      %1092 = vmatprep.subr.mxu0 0.0
      %v1093 = vand.u32 %v1014, 4294901760
      %v1094 = vsub.f32 %v1014, %v1093
      %v1095 = vand.u32 %v1094, 4294901760
      %v1096 = vsub.f32 %v1094, %v1095
      %v1097 = vand.u32 %v1096, 4294901760
      %1098 = vmatpush1.msra.mxu0 %v1097
      %1099 = vmatprep.subr.mxu0 0.0
      %1100 = vmatpush1.msra.mxu0 0.0
      %1101 = vmatprep.subr.mxu0 0.0
      %1102 = vmatpush1.msra.mxu0 0.0
      %1103 = vmatprep.subr.mxu0 0.0
      %1104 = vmatpush1.msra.mxu0 0.0
      %1105 = vmatprep.subr.mxu0 0.0
      %1106 = vmatpush1.msra.mxu0 0.0
      %1107 = vmatprep.subr.mxu0 0.0
      %1108 = vmatpush1.msra.mxu0 0.0
      %1109 = vmatprep.subr.mxu0 0.0
      %1110 = vmatpush1.msra.mxu0 0.0
      %1111 = vmatprep.subr.mxu0 0.0
      %1112 = vmatpush1.msra.mxu0 0.0
      %1113 = vmatprep.subr.mxu0 0.0
      %1114 = vmatpush1.msra.mxu0 0.0
      %1115 = vmatprep.subr.mxu0 0.0
      %1116 = vmatpush1.msra.mxu0 0.0
      %1117 = vmatprep.subr.mxu0 0.0
      %1118 = vmatpush1.msra.mxu0 0.0
      %1119 = vmatprep.subr.mxu0 0.0
      %1120 = vmatpush1.msra.mxu0 0.0
      %1121 = vmatprep.subr.mxu0 0.0
      %1122 = vmatpush1.msra.mxu0 0.0
      %1123 = vmatprep.subr.mxu0 0.0
      %1124 = vmatpush1.msra.mxu0 0.0
      %1125 = vmatprep.subr.mxu0 0.0
      %1126 = vmatpush1.msra.mxu0 0.0
      %1127 = vmatprep.subr.mxu0 0.0
      %1128 = vmatpush1.msra.mxu0 0.0
      %1129 = vmatprep.subr.mxu0 0.0
      %1130 = vmatpush1.msra.mxu0 0.0
      %1131 = vmatprep.subr.mxu0 0.0
      %1132 = vmatpush1.msra.mxu0 0.0
      %1133 = vmatprep.subr.mxu0 0.0
      %1134 = vmatpush1.msra.mxu0 0.0
      %1135 = vmatprep.subr.mxu0 0.0
      %1136 = vmatpush1.msra.mxu0 0.0
      %1137 = vmatprep.subr.mxu0 0.0
      %1138 = vmatpush1.msra.mxu0 0.0
      %1139 = vmatprep.subr.mxu0 0.0
      %1140 = vmatpush1.msra.mxu0 0.0
      %1141 = vmatprep.subr.mxu0 0.0
      %1142 = vmatpush1.msra.mxu0 0.0
      %1143 = vmatprep.subr.mxu0 0.0
      %1144 = vmatpush1.msra.mxu0 0.0
      %1145 = vmatprep.subr.mxu0 0.0
      %1146 = vmatpush1.msra.mxu0 0.0
      %1147 = vmatprep.subr.mxu0 0.0
      %1148 = vmatpush1.msra.mxu0 0.0
      %1149 = vmatprep.subr.mxu0 0.0
      %1150 = vmatpush1.msra.mxu0 0.0
      %1151 = vmatprep.subr.mxu0 0.0
      %1152 = vmatpush1.msra.mxu0 0.0
      %1153 = vmatprep.subr.mxu0 0.0
      %1154 = vmatpush1.msra.mxu0 0.0
      %1155 = vmatprep.subr.mxu0 0.0
      %1156 = vmatpush1.msra.mxu0 0.0
      %1157 = vmatprep.subr.mxu0 0.0
      %1158 = vmatpush1.msra.mxu0 0.0
      %1159 = vmatprep.subr.mxu0 0.0
      %1160 = vmatpush1.msra.mxu0 0.0
      %1161 = vmatprep.mubr.f32.mxu0 0.0
      %v1162 = vand.u32 %v1010, 4294901760
      %1163 = vmatmul.mubr.f32.gmra.mrb[0].mxu0 %v1162
      %v1164 = vpop.f32.mrb[0].mxu0
      %v1165 = vadd.f32 %v1089, %v1164
      %v1166 = vpop.f32.mrb[0].mxu0
      %1167 = vdwg.mxu0
      %1168 = vmatprep.subr.mxu0 0.0
      %v1169 = vand.u32 %v1014, 4294901760
      %v1170 = vsub.f32 %v1014, %v1169
      %1171 = vmatpush1.msra.mxu0 %v1170
      %1172 = vmatprep.subr.mxu0 0.0
      %1173 = vmatpush1.msra.mxu0 0.0
      %1174 = vmatprep.subr.mxu0 0.0
      %1175 = vmatpush1.msra.mxu0 0.0
      %1176 = vmatprep.subr.mxu0 0.0
      %1177 = vmatpush1.msra.mxu0 0.0
      %1178 = vmatprep.subr.mxu0 0.0
      %1179 = vmatpush1.msra.mxu0 0.0
      %1180 = vmatprep.subr.mxu0 0.0
      %1181 = vmatpush1.msra.mxu0 0.0
      %1182 = vmatprep.subr.mxu0 0.0
      %1183 = vmatpush1.msra.mxu0 0.0
      %1184 = vmatprep.subr.mxu0 0.0
      %1185 = vmatpush1.msra.mxu0 0.0
      %1186 = vmatprep.subr.mxu0 0.0
      %1187 = vmatpush1.msra.mxu0 0.0
      %1188 = vmatprep.subr.mxu0 0.0
      %1189 = vmatpush1.msra.mxu0 0.0
      %1190 = vmatprep.subr.mxu0 0.0
      %1191 = vmatpush1.msra.mxu0 0.0
      %1192 = vmatprep.subr.mxu0 0.0
      %1193 = vmatpush1.msra.mxu0 0.0
      %1194 = vmatprep.subr.mxu0 0.0
      %1195 = vmatpush1.msra.mxu0 0.0
      %1196 = vmatprep.subr.mxu0 0.0
      %1197 = vmatpush1.msra.mxu0 0.0
      %1198 = vmatprep.subr.mxu0 0.0
      %1199 = vmatpush1.msra.mxu0 0.0
      %1200 = vmatprep.subr.mxu0 0.0
      %1201 = vmatpush1.msra.mxu0 0.0
      %1202 = vmatprep.subr.mxu0 0.0
      %1203 = vmatpush1.msra.mxu0 0.0
      %1204 = vmatprep.subr.mxu0 0.0
      %1205 = vmatpush1.msra.mxu0 0.0
      %1206 = vmatprep.subr.mxu0 0.0
      %1207 = vmatpush1.msra.mxu0 0.0
      %1208 = vmatprep.subr.mxu0 0.0
      %1209 = vmatpush1.msra.mxu0 0.0
      %1210 = vmatprep.subr.mxu0 0.0
      %1211 = vmatpush1.msra.mxu0 0.0
      %1212 = vmatprep.subr.mxu0 0.0
      %1213 = vmatpush1.msra.mxu0 0.0
      %1214 = vmatprep.subr.mxu0 0.0
      %1215 = vmatpush1.msra.mxu0 0.0
      %1216 = vmatprep.subr.mxu0 0.0
      %1217 = vmatpush1.msra.mxu0 0.0
      %1218 = vmatprep.subr.mxu0 0.0
      %1219 = vmatpush1.msra.mxu0 0.0
      %1220 = vmatprep.subr.mxu0 0.0
      %1221 = vmatpush1.msra.mxu0 0.0
      %1222 = vmatprep.subr.mxu0 0.0
      %1223 = vmatpush1.msra.mxu0 0.0
      %1224 = vmatprep.subr.mxu0 0.0
      %1225 = vmatpush1.msra.mxu0 0.0
      %1226 = vmatprep.subr.mxu0 0.0
      %1227 = vmatpush1.msra.mxu0 0.0
      %1228 = vmatprep.subr.mxu0 0.0
      %1229 = vmatpush1.msra.mxu0 0.0
      %1230 = vmatprep.subr.mxu0 0.0
      %1231 = vmatpush1.msra.mxu0 0.0
      %1232 = vmatprep.subr.mxu0 0.0
      %1233 = vmatpush1.msra.mxu0 0.0
      %1234 = vmatprep.mubr.f32.mxu0 0.0
      %v1235 = vand.u32 %v1010, 4294901760
      %v1236 = vsub.f32 %v1010, %v1235
      %1237 = vmatmul.mubr.f32.gmra.mrb[0].mxu0 %v1236
      %v1238 = vpop.f32.mrb[0].mxu0
      %v1239 = vadd.f32 %v1165, %v1238
      %v1240 = vpop.f32.mrb[0].mxu0
      %1241 = vdwg.mxu0
      %1242 = vmatprep.subr.mxu0 0.0
      %v1243 = vand.u32 %v1014, 4294901760
      %1244 = vmatpush1.msra.mxu0 %v1243
      %1245 = vmatprep.subr.mxu0 0.0
      %1246 = vmatpush1.msra.mxu0 0.0
      %1247 = vmatprep.subr.mxu0 0.0
      %1248 = vmatpush1.msra.mxu0 0.0
      %1249 = vmatprep.subr.mxu0 0.0
      %1250 = vmatpush1.msra.mxu0 0.0
      %1251 = vmatprep.subr.mxu0 0.0
      %1252 = vmatpush1.msra.mxu0 0.0
      %1253 = vmatprep.subr.mxu0 0.0
      %1254 = vmatpush1.msra.mxu0 0.0
      %1255 = vmatprep.subr.mxu0 0.0
      %1256 = vmatpush1.msra.mxu0 0.0
      %1257 = vmatprep.subr.mxu0 0.0
      %1258 = vmatpush1.msra.mxu0 0.0
      %1259 = vmatprep.subr.mxu0 0.0
      %1260 = vmatpush1.msra.mxu0 0.0
      %1261 = vmatprep.subr.mxu0 0.0
      %1262 = vmatpush1.msra.mxu0 0.0
      %1263 = vmatprep.subr.mxu0 0.0
      %1264 = vmatpush1.msra.mxu0 0.0
      %1265 = vmatprep.subr.mxu0 0.0
      %1266 = vmatpush1.msra.mxu0 0.0
      %1267 = vmatprep.subr.mxu0 0.0
      %1268 = vmatpush1.msra.mxu0 0.0
      %1269 = vmatprep.subr.mxu0 0.0
      %1270 = vmatpush1.msra.mxu0 0.0
      %1271 = vmatprep.subr.mxu0 0.0
      %1272 = vmatpush1.msra.mxu0 0.0
      %1273 = vmatprep.subr.mxu0 0.0
      %1274 = vmatpush1.msra.mxu0 0.0
      %1275 = vmatprep.subr.mxu0 0.0
      %1276 = vmatpush1.msra.mxu0 0.0
      %1277 = vmatprep.subr.mxu0 0.0
      %1278 = vmatpush1.msra.mxu0 0.0
      %1279 = vmatprep.subr.mxu0 0.0
      %1280 = vmatpush1.msra.mxu0 0.0
      %1281 = vmatprep.subr.mxu0 0.0
      %1282 = vmatpush1.msra.mxu0 0.0
      %1283 = vmatprep.subr.mxu0 0.0
      %1284 = vmatpush1.msra.mxu0 0.0
      %1285 = vmatprep.subr.mxu0 0.0
      %1286 = vmatpush1.msra.mxu0 0.0
      %1287 = vmatprep.subr.mxu0 0.0
      %1288 = vmatpush1.msra.mxu0 0.0
      %1289 = vmatprep.subr.mxu0 0.0
      %1290 = vmatpush1.msra.mxu0 0.0
      %1291 = vmatprep.subr.mxu0 0.0
      %1292 = vmatpush1.msra.mxu0 0.0
      %1293 = vmatprep.subr.mxu0 0.0
      %1294 = vmatpush1.msra.mxu0 0.0
      %1295 = vmatprep.subr.mxu0 0.0
      %1296 = vmatpush1.msra.mxu0 0.0
      %1297 = vmatprep.subr.mxu0 0.0
      %1298 = vmatpush1.msra.mxu0 0.0
      %1299 = vmatprep.subr.mxu0 0.0
      %1300 = vmatpush1.msra.mxu0 0.0
      %1301 = vmatprep.subr.mxu0 0.0
      %1302 = vmatpush1.msra.mxu0 0.0
      %1303 = vmatprep.subr.mxu0 0.0
      %1304 = vmatpush1.msra.mxu0 0.0
      %1305 = vmatprep.subr.mxu0 0.0
      %1306 = vmatpush1.msra.mxu0 0.0
      %1307 = vmatprep.mubr.f32.mxu0 0.0
      %v1308 = vand.u32 %v1010, 4294901760
      %v1309 = vsub.f32 %v1010, %v1308
      %v1310 = vand.u32 %v1309, 4294901760
      %1311 = vmatmul.mubr.f32.gmra.mrb[0].mxu0 %v1310
      %v1312 = vpop.f32.mrb[0].mxu0
      %v1313 = vadd.f32 %v1239, %v1312
      %v1314 = vpop.f32.mrb[0].mxu0
      %1315 = vdwg.mxu0
      %1316 = vmatprep.subr.mxu0 0.0
      %v1317 = vand.u32 %v1014, 4294901760
      %v1318 = vsub.f32 %v1014, %v1317
      %v1319 = vand.u32 %v1318, 4294901760
      %1320 = vmatpush1.msra.mxu0 %v1319
      %1321 = vmatprep.subr.mxu0 0.0
      %1322 = vmatpush1.msra.mxu0 0.0
      %1323 = vmatprep.subr.mxu0 0.0
      %1324 = vmatpush1.msra.mxu0 0.0
      %1325 = vmatprep.subr.mxu0 0.0
      %1326 = vmatpush1.msra.mxu0 0.0
      %1327 = vmatprep.subr.mxu0 0.0
      %1328 = vmatpush1.msra.mxu0 0.0
      %1329 = vmatprep.subr.mxu0 0.0
      %1330 = vmatpush1.msra.mxu0 0.0
      %1331 = vmatprep.subr.mxu0 0.0
      %1332 = vmatpush1.msra.mxu0 0.0
      %1333 = vmatprep.subr.mxu0 0.0
      %1334 = vmatpush1.msra.mxu0 0.0
      %1335 = vmatprep.subr.mxu0 0.0
      %1336 = vmatpush1.msra.mxu0 0.0
      %1337 = vmatprep.subr.mxu0 0.0
      %1338 = vmatpush1.msra.mxu0 0.0
      %1339 = vmatprep.subr.mxu0 0.0
      %1340 = vmatpush1.msra.mxu0 0.0
      %1341 = vmatprep.subr.mxu0 0.0
      %1342 = vmatpush1.msra.mxu0 0.0
      %1343 = vmatprep.subr.mxu0 0.0
      %1344 = vmatpush1.msra.mxu0 0.0
      %1345 = vmatprep.subr.mxu0 0.0
      %1346 = vmatpush1.msra.mxu0 0.0
      %1347 = vmatprep.subr.mxu0 0.0
      %1348 = vmatpush1.msra.mxu0 0.0
      %1349 = vmatprep.subr.mxu0 0.0
      %1350 = vmatpush1.msra.mxu0 0.0
      %1351 = vmatprep.subr.mxu0 0.0
      %1352 = vmatpush1.msra.mxu0 0.0
      %1353 = vmatprep.subr.mxu0 0.0
      %1354 = vmatpush1.msra.mxu0 0.0
      %1355 = vmatprep.subr.mxu0 0.0
      %1356 = vmatpush1.msra.mxu0 0.0
      %1357 = vmatprep.subr.mxu0 0.0
      %1358 = vmatpush1.msra.mxu0 0.0
      %1359 = vmatprep.subr.mxu0 0.0
      %1360 = vmatpush1.msra.mxu0 0.0
      %1361 = vmatprep.subr.mxu0 0.0
      %1362 = vmatpush1.msra.mxu0 0.0
      %1363 = vmatprep.subr.mxu0 0.0
      %1364 = vmatpush1.msra.mxu0 0.0
      %1365 = vmatprep.subr.mxu0 0.0
      %1366 = vmatpush1.msra.mxu0 0.0
      %1367 = vmatprep.subr.mxu0 0.0
      %1368 = vmatpush1.msra.mxu0 0.0
      %1369 = vmatprep.subr.mxu0 0.0
      %1370 = vmatpush1.msra.mxu0 0.0
      %1371 = vmatprep.subr.mxu0 0.0
      %1372 = vmatpush1.msra.mxu0 0.0
      %1373 = vmatprep.subr.mxu0 0.0
      %1374 = vmatpush1.msra.mxu0 0.0
      %1375 = vmatprep.subr.mxu0 0.0
      %1376 = vmatpush1.msra.mxu0 0.0
      %1377 = vmatprep.subr.mxu0 0.0
      %1378 = vmatpush1.msra.mxu0 0.0
      %1379 = vmatprep.subr.mxu0 0.0
      %1380 = vmatpush1.msra.mxu0 0.0
      %1381 = vmatprep.subr.mxu0 0.0
      %1382 = vmatpush1.msra.mxu0 0.0
      %1383 = vmatprep.mubr.f32.mxu0 0.0
      %v1384 = vand.u32 %v1010, 4294901760
      %1385 = vmatmul.mubr.f32.gmra.mrb[0].mxu0 %v1384
      %v1386 = vpop.f32.mrb[0].mxu0
      %v1387 = vadd.f32 %v1313, %v1386
      %v1388 = vpop.f32.mrb[0].mxu0
      %1389 = vdwg.mxu0
      %1390 = vmatprep.subr.mxu0 0.0
      %v1391 = vand.u32 %v1014, 4294901760
      %1392 = vmatpush1.msra.mxu0 %v1391
      %1393 = vmatprep.subr.mxu0 0.0
      %1394 = vmatpush1.msra.mxu0 0.0
      %1395 = vmatprep.subr.mxu0 0.0
      %1396 = vmatpush1.msra.mxu0 0.0
      %1397 = vmatprep.subr.mxu0 0.0
      %1398 = vmatpush1.msra.mxu0 0.0
      %1399 = vmatprep.subr.mxu0 0.0
      %1400 = vmatpush1.msra.mxu0 0.0
      %1401 = vmatprep.subr.mxu0 0.0
      %1402 = vmatpush1.msra.mxu0 0.0
      %1403 = vmatprep.subr.mxu0 0.0
      %1404 = vmatpush1.msra.mxu0 0.0
      %1405 = vmatprep.subr.mxu0 0.0
      %1406 = vmatpush1.msra.mxu0 0.0
      %1407 = vmatprep.subr.mxu0 0.0
      %1408 = vmatpush1.msra.mxu0 0.0
      %1409 = vmatprep.subr.mxu0 0.0
      %1410 = vmatpush1.msra.mxu0 0.0
      %1411 = vmatprep.subr.mxu0 0.0
      %1412 = vmatpush1.msra.mxu0 0.0
      %1413 = vmatprep.subr.mxu0 0.0
      %1414 = vmatpush1.msra.mxu0 0.0
      %1415 = vmatprep.subr.mxu0 0.0
      %1416 = vmatpush1.msra.mxu0 0.0
      %1417 = vmatprep.subr.mxu0 0.0
      %1418 = vmatpush1.msra.mxu0 0.0
      %1419 = vmatprep.subr.mxu0 0.0
      %1420 = vmatpush1.msra.mxu0 0.0
      %1421 = vmatprep.subr.mxu0 0.0
      %1422 = vmatpush1.msra.mxu0 0.0
      %1423 = vmatprep.subr.mxu0 0.0
      %1424 = vmatpush1.msra.mxu0 0.0
      %1425 = vmatprep.subr.mxu0 0.0
      %1426 = vmatpush1.msra.mxu0 0.0
      %1427 = vmatprep.subr.mxu0 0.0
      %1428 = vmatpush1.msra.mxu0 0.0
      %1429 = vmatprep.subr.mxu0 0.0
      %1430 = vmatpush1.msra.mxu0 0.0
      %1431 = vmatprep.subr.mxu0 0.0
      %1432 = vmatpush1.msra.mxu0 0.0
      %1433 = vmatprep.subr.mxu0 0.0
      %1434 = vmatpush1.msra.mxu0 0.0
      %1435 = vmatprep.subr.mxu0 0.0
      %1436 = vmatpush1.msra.mxu0 0.0
      %1437 = vmatprep.subr.mxu0 0.0
      %1438 = vmatpush1.msra.mxu0 0.0
      %1439 = vmatprep.subr.mxu0 0.0
      %1440 = vmatpush1.msra.mxu0 0.0
      %1441 = vmatprep.subr.mxu0 0.0
      %1442 = vmatpush1.msra.mxu0 0.0
      %1443 = vmatprep.subr.mxu0 0.0
      %1444 = vmatpush1.msra.mxu0 0.0
      %1445 = vmatprep.subr.mxu0 0.0
      %1446 = vmatpush1.msra.mxu0 0.0
      %1447 = vmatprep.subr.mxu0 0.0
      %1448 = vmatpush1.msra.mxu0 0.0
      %1449 = vmatprep.subr.mxu0 0.0
      %1450 = vmatpush1.msra.mxu0 0.0
      %1451 = vmatprep.subr.mxu0 0.0
      %1452 = vmatpush1.msra.mxu0 0.0
      %1453 = vmatprep.subr.mxu0 0.0
      %1454 = vmatpush1.msra.mxu0 0.0
      %1455 = vmatprep.mubr.f32.mxu0 0.0
      %v1456 = vand.u32 %v1010, 4294901760
      %1457 = vmatmul.mubr.f32.gmra.mrb[0].mxu0 %v1456
      %v1458 = vpop.f32.mrb[0].mxu0
      %v1459 = vadd.f32 %v1387, %v1458
      %v1460 = vpop.f32.mrb[0].mxu0
      %1461 = vdwg.mxu0
      %v1462 = vld [vmem:[%s10] sm:$0xf]
      %v1463 = vld [vmem:[%s11] sm:$0xf]
      %v1465 = vsel %vm534, %v1462, 0
      %1467 = vmatprep.subr.mxu0 0.0
      %v1468 = vand.u32 %v530, 4294901760
      %1469 = vmatpush1.msra.mxu0 %v1468
      %1470 = vmatprep.subr.mxu0 0.0
      %v1471 = vand.u32 %v531, 4294901760
      %1472 = vmatpush1.msra.mxu0 %v1471
      %1473 = vmatprep.subr.mxu0 0.0
      %1474 = vmatpush1.msra.mxu0 0.0
      %1475 = vmatprep.subr.mxu0 0.0
      %1476 = vmatpush1.msra.mxu0 0.0
      %1477 = vmatprep.subr.mxu0 0.0
      %1478 = vmatpush1.msra.mxu0 0.0
      %1479 = vmatprep.subr.mxu0 0.0
      %1480 = vmatpush1.msra.mxu0 0.0
      %1481 = vmatprep.subr.mxu0 0.0
      %1482 = vmatpush1.msra.mxu0 0.0
      %1483 = vmatprep.subr.mxu0 0.0
      %1484 = vmatpush1.msra.mxu0 0.0
      %1485 = vmatprep.subr.mxu0 0.0
      %1486 = vmatpush1.msra.mxu0 0.0
      %1487 = vmatprep.subr.mxu0 0.0
      %1488 = vmatpush1.msra.mxu0 0.0
      %1489 = vmatprep.subr.mxu0 0.0
      %1490 = vmatpush1.msra.mxu0 0.0
      %1491 = vmatprep.subr.mxu0 0.0
      %1492 = vmatpush1.msra.mxu0 0.0
      %1493 = vmatprep.subr.mxu0 0.0
      %1494 = vmatpush1.msra.mxu0 0.0
      %1495 = vmatprep.subr.mxu0 0.0
      %1496 = vmatpush1.msra.mxu0 0.0
      %1497 = vmatprep.subr.mxu0 0.0
      %1498 = vmatpush1.msra.mxu0 0.0
      %1499 = vmatprep.subr.mxu0 0.0
      %1500 = vmatpush1.msra.mxu0 0.0
      %1501 = vmatprep.subr.mxu0 0.0
      %1502 = vmatpush1.msra.mxu0 0.0
      %1503 = vmatprep.subr.mxu0 0.0
      %1504 = vmatpush1.msra.mxu0 0.0
      %1505 = vmatprep.subr.mxu0 0.0
      %1506 = vmatpush1.msra.mxu0 0.0
      %1507 = vmatprep.subr.mxu0 0.0
      %1508 = vmatpush1.msra.mxu0 0.0
      %1509 = vmatprep.subr.mxu0 0.0
      %1510 = vmatpush1.msra.mxu0 0.0
      %1511 = vmatprep.subr.mxu0 0.0
      %1512 = vmatpush1.msra.mxu0 0.0
      %1513 = vmatprep.subr.mxu0 0.0
      %1514 = vmatpush1.msra.mxu0 0.0
      %1515 = vmatprep.subr.mxu0 0.0
      %1516 = vmatpush1.msra.mxu0 0.0
      %1517 = vmatprep.subr.mxu0 0.0
      %1518 = vmatpush1.msra.mxu0 0.0
      %1519 = vmatprep.subr.mxu0 0.0
      %1520 = vmatpush1.msra.mxu0 0.0
      %1521 = vmatprep.subr.mxu0 0.0
      %1522 = vmatpush1.msra.mxu0 0.0
      %1523 = vmatprep.subr.mxu0 0.0
      %1524 = vmatpush1.msra.mxu0 0.0
      %1525 = vmatprep.subr.mxu0 0.0
      %1526 = vmatpush1.msra.mxu0 0.0
      %1527 = vmatprep.subr.mxu0 0.0
      %1528 = vmatpush1.msra.mxu0 0.0
      %1529 = vmatprep.subr.mxu0 0.0
      %1530 = vmatpush1.msra.mxu0 0.0
      %1531 = vmatprep.subr.mxu0 0.0
      %1532 = vmatpush1.msra.mxu0 0.0
      %1533 = vmatprep.mubr.f32.mxu0 0.0
      %v1534 = vand.u32 %v1465, 4294901760
      %v1535 = vsub.f32 %v1465, %v1534
      %v1536 = vand.u32 %v1535, 4294901760
      %v1537 = vsub.f32 %v1535, %v1536
      %v1538 = vand.u32 %v1537, 4294901760
      %1539 = vmatmul.mubr.f32.gmra.mrb[0].mxu0 %v1538
      %v1540 = vpop.f32.mrb[0].mxu0
      %v1541 = vadd.f32 %v1463, %v1540
      %v1542 = vpop.f32.mrb[0].mxu0
      %1543 = vdwg.mxu0
      %1544 = vmatprep.subr.mxu0 0.0
      %v1545 = vand.u32 %v530, 4294901760
      %v1546 = vsub.f32 %v530, %v1545
      %v1547 = vand.u32 %v1546, 4294901760
      %v1548 = vsub.f32 %v1546, %v1547
      %v1549 = vand.u32 %v1548, 4294901760
      %1550 = vmatpush1.msra.mxu0 %v1549
      %1551 = vmatprep.subr.mxu0 0.0
      %v1552 = vand.u32 %v531, 4294901760
      %v1553 = vsub.f32 %v531, %v1552
      %v1554 = vand.u32 %v1553, 4294901760
      %v1555 = vsub.f32 %v1553, %v1554
      %v1556 = vand.u32 %v1555, 4294901760
      %1557 = vmatpush1.msra.mxu0 %v1556
      %1558 = vmatprep.subr.mxu0 0.0
      %1559 = vmatpush1.msra.mxu0 0.0
      %1560 = vmatprep.subr.mxu0 0.0
      %1561 = vmatpush1.msra.mxu0 0.0
      %1562 = vmatprep.subr.mxu0 0.0
      %1563 = vmatpush1.msra.mxu0 0.0
      %1564 = vmatprep.subr.mxu0 0.0
      %1565 = vmatpush1.msra.mxu0 0.0
      %1566 = vmatprep.subr.mxu0 0.0
      %1567 = vmatpush1.msra.mxu0 0.0
      %1568 = vmatprep.subr.mxu0 0.0
      %1569 = vmatpush1.msra.mxu0 0.0
      %1570 = vmatprep.subr.mxu0 0.0
      %1571 = vmatpush1.msra.mxu0 0.0
      %1572 = vmatprep.subr.mxu0 0.0
      %1573 = vmatpush1.msra.mxu0 0.0
      %1574 = vmatprep.subr.mxu0 0.0
      %1575 = vmatpush1.msra.mxu0 0.0
      %1576 = vmatprep.subr.mxu0 0.0
      %1577 = vmatpush1.msra.mxu0 0.0
      %1578 = vmatprep.subr.mxu0 0.0
      %1579 = vmatpush1.msra.mxu0 0.0
      %1580 = vmatprep.subr.mxu0 0.0
      %1581 = vmatpush1.msra.mxu0 0.0
      %1582 = vmatprep.subr.mxu0 0.0
      %1583 = vmatpush1.msra.mxu0 0.0
      %1584 = vmatprep.subr.mxu0 0.0
      %1585 = vmatpush1.msra.mxu0 0.0
      %1586 = vmatprep.subr.mxu0 0.0
      %1587 = vmatpush1.msra.mxu0 0.0
      %1588 = vmatprep.subr.mxu0 0.0
      %1589 = vmatpush1.msra.mxu0 0.0
      %1590 = vmatprep.subr.mxu0 0.0
      %1591 = vmatpush1.msra.mxu0 0.0
      %1592 = vmatprep.subr.mxu0 0.0
      %1593 = vmatpush1.msra.mxu0 0.0
      %1594 = vmatprep.subr.mxu0 0.0
      %1595 = vmatpush1.msra.mxu0 0.0
      %1596 = vmatprep.subr.mxu0 0.0
      %1597 = vmatpush1.msra.mxu0 0.0
      %1598 = vmatprep.subr.mxu0 0.0
      %1599 = vmatpush1.msra.mxu0 0.0
      %1600 = vmatprep.subr.mxu0 0.0
      %1601 = vmatpush1.msra.mxu0 0.0
      %1602 = vmatprep.subr.mxu0 0.0
      %1603 = vmatpush1.msra.mxu0 0.0
      %1604 = vmatprep.subr.mxu0 0.0
      %1605 = vmatpush1.msra.mxu0 0.0
      %1606 = vmatprep.subr.mxu0 0.0
      %1607 = vmatpush1.msra.mxu0 0.0
      %1608 = vmatprep.subr.mxu0 0.0
      %1609 = vmatpush1.msra.mxu0 0.0
      %1610 = vmatprep.subr.mxu0 0.0
      %1611 = vmatpush1.msra.mxu0 0.0
      %1612 = vmatprep.subr.mxu0 0.0
      %1613 = vmatpush1.msra.mxu0 0.0
      %1614 = vmatprep.subr.mxu0 0.0
      %1615 = vmatpush1.msra.mxu0 0.0
      %1616 = vmatprep.subr.mxu0 0.0
      %1617 = vmatpush1.msra.mxu0 0.0
      %1618 = vmatprep.mubr.f32.mxu0 0.0
      %v1619 = vand.u32 %v1465, 4294901760
      %1620 = vmatmul.mubr.f32.gmra.mrb[0].mxu0 %v1619
      %v1621 = vpop.f32.mrb[0].mxu0
      %v1622 = vadd.f32 %v1541, %v1621
      %v1623 = vpop.f32.mrb[0].mxu0
      %1624 = vdwg.mxu0
      %1625 = vmatprep.subr.mxu0 0.0
      %v1626 = vand.u32 %v530, 4294901760
      %v1627 = vsub.f32 %v530, %v1626
      %1628 = vmatpush1.msra.mxu0 %v1627
      %1629 = vmatprep.subr.mxu0 0.0
      %v1630 = vand.u32 %v531, 4294901760
      %v1631 = vsub.f32 %v531, %v1630
      %1632 = vmatpush1.msra.mxu0 %v1631
      %1633 = vmatprep.subr.mxu0 0.0
      %1634 = vmatpush1.msra.mxu0 0.0
      %1635 = vmatprep.subr.mxu0 0.0
      %1636 = vmatpush1.msra.mxu0 0.0
      %1637 = vmatprep.subr.mxu0 0.0
      %1638 = vmatpush1.msra.mxu0 0.0
      %1639 = vmatprep.subr.mxu0 0.0
      %1640 = vmatpush1.msra.mxu0 0.0
      %1641 = vmatprep.subr.mxu0 0.0
      %1642 = vmatpush1.msra.mxu0 0.0
      %1643 = vmatprep.subr.mxu0 0.0
      %1644 = vmatpush1.msra.mxu0 0.0
      %1645 = vmatprep.subr.mxu0 0.0
      %1646 = vmatpush1.msra.mxu0 0.0
      %1647 = vmatprep.subr.mxu0 0.0
      %1648 = vmatpush1.msra.mxu0 0.0
      %1649 = vmatprep.subr.mxu0 0.0
      %1650 = vmatpush1.msra.mxu0 0.0
      %1651 = vmatprep.subr.mxu0 0.0
      %1652 = vmatpush1.msra.mxu0 0.0
      %1653 = vmatprep.subr.mxu0 0.0
      %1654 = vmatpush1.msra.mxu0 0.0
      %1655 = vmatprep.subr.mxu0 0.0
      %1656 = vmatpush1.msra.mxu0 0.0
      %1657 = vmatprep.subr.mxu0 0.0
      %1658 = vmatpush1.msra.mxu0 0.0
      %1659 = vmatprep.subr.mxu0 0.0
      %1660 = vmatpush1.msra.mxu0 0.0
      %1661 = vmatprep.subr.mxu0 0.0
      %1662 = vmatpush1.msra.mxu0 0.0
      %1663 = vmatprep.subr.mxu0 0.0
      %1664 = vmatpush1.msra.mxu0 0.0
      %1665 = vmatprep.subr.mxu0 0.0
      %1666 = vmatpush1.msra.mxu0 0.0
      %1667 = vmatprep.subr.mxu0 0.0
      %1668 = vmatpush1.msra.mxu0 0.0
      %1669 = vmatprep.subr.mxu0 0.0
      %1670 = vmatpush1.msra.mxu0 0.0
      %1671 = vmatprep.subr.mxu0 0.0
      %1672 = vmatpush1.msra.mxu0 0.0
      %1673 = vmatprep.subr.mxu0 0.0
      %1674 = vmatpush1.msra.mxu0 0.0
      %1675 = vmatprep.subr.mxu0 0.0
      %1676 = vmatpush1.msra.mxu0 0.0
      %1677 = vmatprep.subr.mxu0 0.0
      %1678 = vmatpush1.msra.mxu0 0.0
      %1679 = vmatprep.subr.mxu0 0.0
      %1680 = vmatpush1.msra.mxu0 0.0
      %1681 = vmatprep.subr.mxu0 0.0
      %1682 = vmatpush1.msra.mxu0 0.0
      %1683 = vmatprep.subr.mxu0 0.0
      %1684 = vmatpush1.msra.mxu0 0.0
      %1685 = vmatprep.subr.mxu0 0.0
      %1686 = vmatpush1.msra.mxu0 0.0
      %1687 = vmatprep.subr.mxu0 0.0
      %1688 = vmatpush1.msra.mxu0 0.0
      %1689 = vmatprep.subr.mxu0 0.0
      %1690 = vmatpush1.msra.mxu0 0.0
      %1691 = vmatprep.subr.mxu0 0.0
      %1692 = vmatpush1.msra.mxu0 0.0
      %1693 = vmatprep.mubr.f32.mxu0 0.0
      %v1694 = vand.u32 %v1465, 4294901760
      %v1695 = vsub.f32 %v1465, %v1694
      %1696 = vmatmul.mubr.f32.gmra.mrb[0].mxu0 %v1695
      %v1697 = vpop.f32.mrb[0].mxu0
      %v1698 = vadd.f32 %v1622, %v1697
      %v1699 = vpop.f32.mrb[0].mxu0
      %1700 = vdwg.mxu0
      %1701 = vmatprep.subr.mxu0 0.0
      %v1702 = vand.u32 %v530, 4294901760
      %1703 = vmatpush1.msra.mxu0 %v1702
      %1704 = vmatprep.subr.mxu0 0.0
      %v1705 = vand.u32 %v531, 4294901760
      %1706 = vmatpush1.msra.mxu0 %v1705
      %1707 = vmatprep.subr.mxu0 0.0
      %1708 = vmatpush1.msra.mxu0 0.0
      %1709 = vmatprep.subr.mxu0 0.0
      %1710 = vmatpush1.msra.mxu0 0.0
      %1711 = vmatprep.subr.mxu0 0.0
      %1712 = vmatpush1.msra.mxu0 0.0
      %1713 = vmatprep.subr.mxu0 0.0
      %1714 = vmatpush1.msra.mxu0 0.0
      %1715 = vmatprep.subr.mxu0 0.0
      %1716 = vmatpush1.msra.mxu0 0.0
      %1717 = vmatprep.subr.mxu0 0.0
      %1718 = vmatpush1.msra.mxu0 0.0
      %1719 = vmatprep.subr.mxu0 0.0
      %1720 = vmatpush1.msra.mxu0 0.0
      %1721 = vmatprep.subr.mxu0 0.0
      %1722 = vmatpush1.msra.mxu0 0.0
      %1723 = vmatprep.subr.mxu0 0.0
      %1724 = vmatpush1.msra.mxu0 0.0
      %1725 = vmatprep.subr.mxu0 0.0
      %1726 = vmatpush1.msra.mxu0 0.0
      %1727 = vmatprep.subr.mxu0 0.0
      %1728 = vmatpush1.msra.mxu0 0.0
      %1729 = vmatprep.subr.mxu0 0.0
      %1730 = vmatpush1.msra.mxu0 0.0
      %1731 = vmatprep.subr.mxu0 0.0
      %1732 = vmatpush1.msra.mxu0 0.0
      %1733 = vmatprep.subr.mxu0 0.0
      %1734 = vmatpush1.msra.mxu0 0.0
      %1735 = vmatprep.subr.mxu0 0.0
      %1736 = vmatpush1.msra.mxu0 0.0
      %1737 = vmatprep.subr.mxu0 0.0
      %1738 = vmatpush1.msra.mxu0 0.0
      %1739 = vmatprep.subr.mxu0 0.0
      %1740 = vmatpush1.msra.mxu0 0.0
      %1741 = vmatprep.subr.mxu0 0.0
      %1742 = vmatpush1.msra.mxu0 0.0
      %1743 = vmatprep.subr.mxu0 0.0
      %1744 = vmatpush1.msra.mxu0 0.0
      %1745 = vmatprep.subr.mxu0 0.0
      %1746 = vmatpush1.msra.mxu0 0.0
      %1747 = vmatprep.subr.mxu0 0.0
      %1748 = vmatpush1.msra.mxu0 0.0
      %1749 = vmatprep.subr.mxu0 0.0
      %1750 = vmatpush1.msra.mxu0 0.0
      %1751 = vmatprep.subr.mxu0 0.0
      %1752 = vmatpush1.msra.mxu0 0.0
      %1753 = vmatprep.subr.mxu0 0.0
      %1754 = vmatpush1.msra.mxu0 0.0
      %1755 = vmatprep.subr.mxu0 0.0
      %1756 = vmatpush1.msra.mxu0 0.0
      %1757 = vmatprep.subr.mxu0 0.0
      %1758 = vmatpush1.msra.mxu0 0.0
      %1759 = vmatprep.subr.mxu0 0.0
      %1760 = vmatpush1.msra.mxu0 0.0
      %1761 = vmatprep.subr.mxu0 0.0
      %1762 = vmatpush1.msra.mxu0 0.0
      %1763 = vmatprep.subr.mxu0 0.0
      %1764 = vmatpush1.msra.mxu0 0.0
      %1765 = vmatprep.subr.mxu0 0.0
      %1766 = vmatpush1.msra.mxu0 0.0
      %1767 = vmatprep.mubr.f32.mxu0 0.0
      %v1768 = vand.u32 %v1465, 4294901760
      %v1769 = vsub.f32 %v1465, %v1768
      %v1770 = vand.u32 %v1769, 4294901760
      %1771 = vmatmul.mubr.f32.gmra.mrb[0].mxu0 %v1770
      %v1772 = vpop.f32.mrb[0].mxu0
      %v1773 = vadd.f32 %v1698, %v1772
      %v1774 = vpop.f32.mrb[0].mxu0
      %1775 = vdwg.mxu0
      %1776 = vmatprep.subr.mxu0 0.0
      %v1777 = vand.u32 %v530, 4294901760
      %v1778 = vsub.f32 %v530, %v1777
      %v1779 = vand.u32 %v1778, 4294901760
      %1780 = vmatpush1.msra.mxu0 %v1779
      %1781 = vmatprep.subr.mxu0 0.0
      %v1782 = vand.u32 %v531, 4294901760
      %v1783 = vsub.f32 %v531, %v1782
      %v1784 = vand.u32 %v1783, 4294901760
      %1785 = vmatpush1.msra.mxu0 %v1784
      %1786 = vmatprep.subr.mxu0 0.0
      %1787 = vmatpush1.msra.mxu0 0.0
      %1788 = vmatprep.subr.mxu0 0.0
      %1789 = vmatpush1.msra.mxu0 0.0
      %1790 = vmatprep.subr.mxu0 0.0
      %1791 = vmatpush1.msra.mxu0 0.0
      %1792 = vmatprep.subr.mxu0 0.0
      %1793 = vmatpush1.msra.mxu0 0.0
      %1794 = vmatprep.subr.mxu0 0.0
      %1795 = vmatpush1.msra.mxu0 0.0
      %1796 = vmatprep.subr.mxu0 0.0
      %1797 = vmatpush1.msra.mxu0 0.0
      %1798 = vmatprep.subr.mxu0 0.0
      %1799 = vmatpush1.msra.mxu0 0.0
      %1800 = vmatprep.subr.mxu0 0.0
      %1801 = vmatpush1.msra.mxu0 0.0
      %1802 = vmatprep.subr.mxu0 0.0
      %1803 = vmatpush1.msra.mxu0 0.0
      %1804 = vmatprep.subr.mxu0 0.0
      %1805 = vmatpush1.msra.mxu0 0.0
      %1806 = vmatprep.subr.mxu0 0.0
      %1807 = vmatpush1.msra.mxu0 0.0
      %1808 = vmatprep.subr.mxu0 0.0
      %1809 = vmatpush1.msra.mxu0 0.0
      %1810 = vmatprep.subr.mxu0 0.0
      %1811 = vmatpush1.msra.mxu0 0.0
      %1812 = vmatprep.subr.mxu0 0.0
      %1813 = vmatpush1.msra.mxu0 0.0
      %1814 = vmatprep.subr.mxu0 0.0
      %1815 = vmatpush1.msra.mxu0 0.0
      %1816 = vmatprep.subr.mxu0 0.0
      %1817 = vmatpush1.msra.mxu0 0.0
      %1818 = vmatprep.subr.mxu0 0.0
      %1819 = vmatpush1.msra.mxu0 0.0
      %1820 = vmatprep.subr.mxu0 0.0
      %1821 = vmatpush1.msra.mxu0 0.0
      %1822 = vmatprep.subr.mxu0 0.0
      %1823 = vmatpush1.msra.mxu0 0.0
      %1824 = vmatprep.subr.mxu0 0.0
      %1825 = vmatpush1.msra.mxu0 0.0
      %1826 = vmatprep.subr.mxu0 0.0
      %1827 = vmatpush1.msra.mxu0 0.0
      %1828 = vmatprep.subr.mxu0 0.0
      %1829 = vmatpush1.msra.mxu0 0.0
      %1830 = vmatprep.subr.mxu0 0.0
      %1831 = vmatpush1.msra.mxu0 0.0
      %1832 = vmatprep.subr.mxu0 0.0
      %1833 = vmatpush1.msra.mxu0 0.0
      %1834 = vmatprep.subr.mxu0 0.0
      %1835 = vmatpush1.msra.mxu0 0.0
      %1836 = vmatprep.subr.mxu0 0.0
      %1837 = vmatpush1.msra.mxu0 0.0
      %1838 = vmatprep.subr.mxu0 0.0
      %1839 = vmatpush1.msra.mxu0 0.0
      %1840 = vmatprep.subr.mxu0 0.0
      %1841 = vmatpush1.msra.mxu0 0.0
      %1842 = vmatprep.subr.mxu0 0.0
      %1843 = vmatpush1.msra.mxu0 0.0
      %1844 = vmatprep.subr.mxu0 0.0
      %1845 = vmatpush1.msra.mxu0 0.0
      %1846 = vmatprep.mubr.f32.mxu0 0.0
      %v1847 = vand.u32 %v1465, 4294901760
      %1848 = vmatmul.mubr.f32.gmra.mrb[0].mxu0 %v1847
      %v1849 = vpop.f32.mrb[0].mxu0
      %v1850 = vadd.f32 %v1773, %v1849
      %v1851 = vpop.f32.mrb[0].mxu0
      %1852 = vdwg.mxu0
      %1853 = vmatprep.subr.mxu0 0.0
      %v1854 = vand.u32 %v530, 4294901760
      %1855 = vmatpush1.msra.mxu0 %v1854
      %1856 = vmatprep.subr.mxu0 0.0
      %v1857 = vand.u32 %v531, 4294901760
      %1858 = vmatpush1.msra.mxu0 %v1857
      %1859 = vmatprep.subr.mxu0 0.0
      %1860 = vmatpush1.msra.mxu0 0.0
      %1861 = vmatprep.subr.mxu0 0.0
      %1862 = vmatpush1.msra.mxu0 0.0
      %1863 = vmatprep.subr.mxu0 0.0
      %1864 = vmatpush1.msra.mxu0 0.0
      %1865 = vmatprep.subr.mxu0 0.0
      %1866 = vmatpush1.msra.mxu0 0.0
      %1867 = vmatprep.subr.mxu0 0.0
      %1868 = vmatpush1.msra.mxu0 0.0
      %1869 = vmatprep.subr.mxu0 0.0
      %1870 = vmatpush1.msra.mxu0 0.0
      %1871 = vmatprep.subr.mxu0 0.0
      %1872 = vmatpush1.msra.mxu0 0.0
      %1873 = vmatprep.subr.mxu0 0.0
      %1874 = vmatpush1.msra.mxu0 0.0
      %1875 = vmatprep.subr.mxu0 0.0
      %1876 = vmatpush1.msra.mxu0 0.0
      %1877 = vmatprep.subr.mxu0 0.0
      %1878 = vmatpush1.msra.mxu0 0.0
      %1879 = vmatprep.subr.mxu0 0.0
      %1880 = vmatpush1.msra.mxu0 0.0
      %1881 = vmatprep.subr.mxu0 0.0
      %1882 = vmatpush1.msra.mxu0 0.0
      %1883 = vmatprep.subr.mxu0 0.0
      %1884 = vmatpush1.msra.mxu0 0.0
      %1885 = vmatprep.subr.mxu0 0.0
      %1886 = vmatpush1.msra.mxu0 0.0
      %1887 = vmatprep.subr.mxu0 0.0
      %1888 = vmatpush1.msra.mxu0 0.0
      %1889 = vmatprep.subr.mxu0 0.0
      %1890 = vmatpush1.msra.mxu0 0.0
      %1891 = vmatprep.subr.mxu0 0.0
      %1892 = vmatpush1.msra.mxu0 0.0
      %1893 = vmatprep.subr.mxu0 0.0
      %1894 = vmatpush1.msra.mxu0 0.0
      %1895 = vmatprep.subr.mxu0 0.0
      %1896 = vmatpush1.msra.mxu0 0.0
      %1897 = vmatprep.subr.mxu0 0.0
      %1898 = vmatpush1.msra.mxu0 0.0
      %1899 = vmatprep.subr.mxu0 0.0
      %1900 = vmatpush1.msra.mxu0 0.0
      %1901 = vmatprep.subr.mxu0 0.0
      %1902 = vmatpush1.msra.mxu0 0.0
      %1903 = vmatprep.subr.mxu0 0.0
      %1904 = vmatpush1.msra.mxu0 0.0
      %1905 = vmatprep.subr.mxu0 0.0
      %1906 = vmatpush1.msra.mxu0 0.0
      %1907 = vmatprep.subr.mxu0 0.0
      %1908 = vmatpush1.msra.mxu0 0.0
      %1909 = vmatprep.subr.mxu0 0.0
      %1910 = vmatpush1.msra.mxu0 0.0
      %1911 = vmatprep.subr.mxu0 0.0
      %1912 = vmatpush1.msra.mxu0 0.0
      %1913 = vmatprep.subr.mxu0 0.0
      %1914 = vmatpush1.msra.mxu0 0.0
      %1915 = vmatprep.subr.mxu0 0.0
      %1916 = vmatpush1.msra.mxu0 0.0
      %1917 = vmatprep.subr.mxu0 0.0
      %1918 = vmatpush1.msra.mxu0 0.0
      %1919 = vmatprep.mubr.f32.mxu0 0.0
      %v1920 = vand.u32 %v1465, 4294901760
      %1921 = vmatmul.mubr.f32.gmra.mrb[0].mxu0 %v1920
      %v1922 = vpop.f32.mrb[0].mxu0
      %v1923 = vadd.f32 %v1850, %v1922
      %v1924 = vpop.f32.mrb[0].mxu0
      %1925 = vdwg.mxu0
      %v1926 = vsub.f32 0.0, %v1923
      %v1927 = vmul.f32 %v1926, 1.442695
      %v1928 = vpow.pop %v1927
      %v1929 = vadd.f32 %v1928, 1.0
      %v1930 = vrcp.pop %v1929
      %v1931 = vmul.f32 %v1923, %v1930
      %v1932 = vld [vmem:[%s12] sm:$0xf]
      %v1933 = vld [vmem:[%s13] sm:$0xf]
      %v1935 = vsel %vm1008, %v1932, 0
      %v1938 = vsel %vm1012, %v1931, 0
      %1940 = vmatprep.subr.mxu0 0.0
      %v1941 = vand.u32 %v1938, 4294901760
      %1942 = vmatpush1.msra.mxu0 %v1941
      %1943 = vmatprep.subr.mxu0 0.0
      %1944 = vmatpush1.msra.mxu0 0.0
      %1945 = vmatprep.subr.mxu0 0.0
      %1946 = vmatpush1.msra.mxu0 0.0
      %1947 = vmatprep.subr.mxu0 0.0
      %1948 = vmatpush1.msra.mxu0 0.0
      %1949 = vmatprep.subr.mxu0 0.0
      %1950 = vmatpush1.msra.mxu0 0.0
      %1951 = vmatprep.subr.mxu0 0.0
      %1952 = vmatpush1.msra.mxu0 0.0
      %1953 = vmatprep.subr.mxu0 0.0
      %1954 = vmatpush1.msra.mxu0 0.0
      %1955 = vmatprep.subr.mxu0 0.0
      %1956 = vmatpush1.msra.mxu0 0.0
      %1957 = vmatprep.subr.mxu0 0.0
      %1958 = vmatpush1.msra.mxu0 0.0
      %1959 = vmatprep.subr.mxu0 0.0
      %1960 = vmatpush1.msra.mxu0 0.0
      %1961 = vmatprep.subr.mxu0 0.0
      %1962 = vmatpush1.msra.mxu0 0.0
      %1963 = vmatprep.subr.mxu0 0.0
      %1964 = vmatpush1.msra.mxu0 0.0
      %1965 = vmatprep.subr.mxu0 0.0
      %1966 = vmatpush1.msra.mxu0 0.0
      %1967 = vmatprep.subr.mxu0 0.0
      %1968 = vmatpush1.msra.mxu0 0.0
      %1969 = vmatprep.subr.mxu0 0.0
      %1970 = vmatpush1.msra.mxu0 0.0
      %1971 = vmatprep.subr.mxu0 0.0
      %1972 = vmatpush1.msra.mxu0 0.0
      %1973 = vmatprep.subr.mxu0 0.0
      %1974 = vmatpush1.msra.mxu0 0.0
      %1975 = vmatprep.subr.mxu0 0.0
      %1976 = vmatpush1.msra.mxu0 0.0
      %1977 = vmatprep.subr.mxu0 0.0
      %1978 = vmatpush1.msra.mxu0 0.0
      %1979 = vmatprep.subr.mxu0 0.0
      %1980 = vmatpush1.msra.mxu0 0.0
      %1981 = vmatprep.subr.mxu0 0.0
      %1982 = vmatpush1.msra.mxu0 0.0
      %1983 = vmatprep.subr.mxu0 0.0
      %1984 = vmatpush1.msra.mxu0 0.0
      %1985 = vmatprep.subr.mxu0 0.0
      %1986 = vmatpush1.msra.mxu0 0.0
      %1987 = vmatprep.subr.mxu0 0.0
      %1988 = vmatpush1.msra.mxu0 0.0
      %1989 = vmatprep.subr.mxu0 0.0
      %1990 = vmatpush1.msra.mxu0 0.0
      %1991 = vmatprep.subr.mxu0 0.0
      %1992 = vmatpush1.msra.mxu0 0.0
      %1993 = vmatprep.subr.mxu0 0.0
      %1994 = vmatpush1.msra.mxu0 0.0
      %1995 = vmatprep.subr.mxu0 0.0
      %1996 = vmatpush1.msra.mxu0 0.0
      %1997 = vmatprep.subr.mxu0 0.0
      %1998 = vmatpush1.msra.mxu0 0.0
      %1999 = vmatprep.subr.mxu0 0.0
      %2000 = vmatpush1.msra.mxu0 0.0
      %2001 = vmatprep.subr.mxu0 0.0
      %2002 = vmatpush1.msra.mxu0 0.0
      %2003 = vmatprep.subr.mxu0 0.0
      %2004 = vmatpush1.msra.mxu0 0.0
      %2005 = vmatprep.mubr.f32.mxu0 0.0
      %v2006 = vand.u32 %v1935, 4294901760
      %v2007 = vsub.f32 %v1935, %v2006
      %v2008 = vand.u32 %v2007, 4294901760
      %v2009 = vsub.f32 %v2007, %v2008
      %v2010 = vand.u32 %v2009, 4294901760
      %2011 = vmatmul.mubr.f32.gmra.mrb[0].mxu0 %v2010
      %v2012 = vpop.f32.mrb[0].mxu0
      %v2013 = vadd.f32 %v1933, %v2012
      %v2014 = vpop.f32.mrb[0].mxu0
      %2015 = vdwg.mxu0
      %2016 = vmatprep.subr.mxu0 0.0
      %v2017 = vand.u32 %v1938, 4294901760
      %v2018 = vsub.f32 %v1938, %v2017
      %v2019 = vand.u32 %v2018, 4294901760
      %v2020 = vsub.f32 %v2018, %v2019
      %v2021 = vand.u32 %v2020, 4294901760
      %2022 = vmatpush1.msra.mxu0 %v2021
      %2023 = vmatprep.subr.mxu0 0.0
      %2024 = vmatpush1.msra.mxu0 0.0
      %2025 = vmatprep.subr.mxu0 0.0
      %2026 = vmatpush1.msra.mxu0 0.0
      %2027 = vmatprep.subr.mxu0 0.0
      %2028 = vmatpush1.msra.mxu0 0.0
      %2029 = vmatprep.subr.mxu0 0.0
      %2030 = vmatpush1.msra.mxu0 0.0
      %2031 = vmatprep.subr.mxu0 0.0
      %2032 = vmatpush1.msra.mxu0 0.0
      %2033 = vmatprep.subr.mxu0 0.0
      %2034 = vmatpush1.msra.mxu0 0.0
      %2035 = vmatprep.subr.mxu0 0.0
      %2036 = vmatpush1.msra.mxu0 0.0
      %2037 = vmatprep.subr.mxu0 0.0
      %2038 = vmatpush1.msra.mxu0 0.0
      %2039 = vmatprep.subr.mxu0 0.0
      %2040 = vmatpush1.msra.mxu0 0.0
      %2041 = vmatprep.subr.mxu0 0.0
      %2042 = vmatpush1.msra.mxu0 0.0
      %2043 = vmatprep.subr.mxu0 0.0
      %2044 = vmatpush1.msra.mxu0 0.0
      %2045 = vmatprep.subr.mxu0 0.0
      %2046 = vmatpush1.msra.mxu0 0.0
      %2047 = vmatprep.subr.mxu0 0.0
      %2048 = vmatpush1.msra.mxu0 0.0
      %2049 = vmatprep.subr.mxu0 0.0
      %2050 = vmatpush1.msra.mxu0 0.0
      %2051 = vmatprep.subr.mxu0 0.0
      %2052 = vmatpush1.msra.mxu0 0.0
      %2053 = vmatprep.subr.mxu0 0.0
      %2054 = vmatpush1.msra.mxu0 0.0
      %2055 = vmatprep.subr.mxu0 0.0
      %2056 = vmatpush1.msra.mxu0 0.0
      %2057 = vmatprep.subr.mxu0 0.0
      %2058 = vmatpush1.msra.mxu0 0.0
      %2059 = vmatprep.subr.mxu0 0.0
      %2060 = vmatpush1.msra.mxu0 0.0
      %2061 = vmatprep.subr.mxu0 0.0
      %2062 = vmatpush1.msra.mxu0 0.0
      %2063 = vmatprep.subr.mxu0 0.0
      %2064 = vmatpush1.msra.mxu0 0.0
      %2065 = vmatprep.subr.mxu0 0.0
      %2066 = vmatpush1.msra.mxu0 0.0
      %2067 = vmatprep.subr.mxu0 0.0
      %2068 = vmatpush1.msra.mxu0 0.0
      %2069 = vmatprep.subr.mxu0 0.0
      %2070 = vmatpush1.msra.mxu0 0.0
      %2071 = vmatprep.subr.mxu0 0.0
      %2072 = vmatpush1.msra.mxu0 0.0
      %2073 = vmatprep.subr.mxu0 0.0
      %2074 = vmatpush1.msra.mxu0 0.0
      %2075 = vmatprep.subr.mxu0 0.0
      %2076 = vmatpush1.msra.mxu0 0.0
      %2077 = vmatprep.subr.mxu0 0.0
      %2078 = vmatpush1.msra.mxu0 0.0
      %2079 = vmatprep.subr.mxu0 0.0
      %2080 = vmatpush1.msra.mxu0 0.0
      %2081 = vmatprep.subr.mxu0 0.0
      %2082 = vmatpush1.msra.mxu0 0.0
      %2083 = vmatprep.subr.mxu0 0.0
      %2084 = vmatpush1.msra.mxu0 0.0
      %2085 = vmatprep.mubr.f32.mxu0 0.0
      %v2086 = vand.u32 %v1935, 4294901760
      %2087 = vmatmul.mubr.f32.gmra.mrb[0].mxu0 %v2086
      %v2088 = vpop.f32.mrb[0].mxu0
      %v2089 = vadd.f32 %v2013, %v2088
      %v2090 = vpop.f32.mrb[0].mxu0
      %2091 = vdwg.mxu0
      %2092 = vmatprep.subr.mxu0 0.0
      %v2093 = vand.u32 %v1938, 4294901760
      %v2094 = vsub.f32 %v1938, %v2093
      %2095 = vmatpush1.msra.mxu0 %v2094
      %2096 = vmatprep.subr.mxu0 0.0
      %2097 = vmatpush1.msra.mxu0 0.0
      %2098 = vmatprep.subr.mxu0 0.0
      %2099 = vmatpush1.msra.mxu0 0.0
      %2100 = vmatprep.subr.mxu0 0.0
      %2101 = vmatpush1.msra.mxu0 0.0
      %2102 = vmatprep.subr.mxu0 0.0
      %2103 = vmatpush1.msra.mxu0 0.0
      %2104 = vmatprep.subr.mxu0 0.0
      %2105 = vmatpush1.msra.mxu0 0.0
      %2106 = vmatprep.subr.mxu0 0.0
      %2107 = vmatpush1.msra.mxu0 0.0
      %2108 = vmatprep.subr.mxu0 0.0
      %2109 = vmatpush1.msra.mxu0 0.0
      %2110 = vmatprep.subr.mxu0 0.0
      %2111 = vmatpush1.msra.mxu0 0.0
      %2112 = vmatprep.subr.mxu0 0.0
      %2113 = vmatpush1.msra.mxu0 0.0
      %2114 = vmatprep.subr.mxu0 0.0
      %2115 = vmatpush1.msra.mxu0 0.0
      %2116 = vmatprep.subr.mxu0 0.0
      %2117 = vmatpush1.msra.mxu0 0.0
      %2118 = vmatprep.subr.mxu0 0.0
      %2119 = vmatpush1.msra.mxu0 0.0
      %2120 = vmatprep.subr.mxu0 0.0
      %2121 = vmatpush1.msra.mxu0 0.0
      %2122 = vmatprep.subr.mxu0 0.0
      %2123 = vmatpush1.msra.mxu0 0.0
      %2124 = vmatprep.subr.mxu0 0.0
      %2125 = vmatpush1.msra.mxu0 0.0
      %2126 = vmatprep.subr.mxu0 0.0
      %2127 = vmatpush1.msra.mxu0 0.0
      %2128 = vmatprep.subr.mxu0 0.0
      %2129 = vmatpush1.msra.mxu0 0.0
      %2130 = vmatprep.subr.mxu0 0.0
      %2131 = vmatpush1.msra.mxu0 0.0
      %2132 = vmatprep.subr.mxu0 0.0
      %2133 = vmatpush1.msra.mxu0 0.0
      %2134 = vmatprep.subr.mxu0 0.0
      %2135 = vmatpush1.msra.mxu0 0.0
      %2136 = vmatprep.subr.mxu0 0.0
      %2137 = vmatpush1.msra.mxu0 0.0
      %2138 = vmatprep.subr.mxu0 0.0
      %2139 = vmatpush1.msra.mxu0 0.0
      %2140 = vmatprep.subr.mxu0 0.0
      %2141 = vmatpush1.msra.mxu0 0.0
      %2142 = vmatprep.subr.mxu0 0.0
      %2143 = vmatpush1.msra.mxu0 0.0
      %2144 = vmatprep.subr.mxu0 0.0
      %2145 = vmatpush1.msra.mxu0 0.0
      %2146 = vmatprep.subr.mxu0 0.0
      %2147 = vmatpush1.msra.mxu0 0.0
      %2148 = vmatprep.subr.mxu0 0.0
      %2149 = vmatpush1.msra.mxu0 0.0
      %2150 = vmatprep.subr.mxu0 0.0
      %2151 = vmatpush1.msra.mxu0 0.0
      %2152 = vmatprep.subr.mxu0 0.0
      %2153 = vmatpush1.msra.mxu0 0.0
      %2154 = vmatprep.subr.mxu0 0.0
      %2155 = vmatpush1.msra.mxu0 0.0
      %2156 = vmatprep.subr.mxu0 0.0
      %2157 = vmatpush1.msra.mxu0 0.0
      %2158 = vmatprep.mubr.f32.mxu0 0.0
      %v2159 = vand.u32 %v1935, 4294901760
      %v2160 = vsub.f32 %v1935, %v2159
      %2161 = vmatmul.mubr.f32.gmra.mrb[0].mxu0 %v2160
      %v2162 = vpop.f32.mrb[0].mxu0
      %v2163 = vadd.f32 %v2089, %v2162
      %v2164 = vpop.f32.mrb[0].mxu0
      %2165 = vdwg.mxu0
      %2166 = vmatprep.subr.mxu0 0.0
      %v2167 = vand.u32 %v1938, 4294901760
      %2168 = vmatpush1.msra.mxu0 %v2167
      %2169 = vmatprep.subr.mxu0 0.0
      %2170 = vmatpush1.msra.mxu0 0.0
      %2171 = vmatprep.subr.mxu0 0.0
      %2172 = vmatpush1.msra.mxu0 0.0
      %2173 = vmatprep.subr.mxu0 0.0
      %2174 = vmatpush1.msra.mxu0 0.0
      %2175 = vmatprep.subr.mxu0 0.0
      %2176 = vmatpush1.msra.mxu0 0.0
      %2177 = vmatprep.subr.mxu0 0.0
      %2178 = vmatpush1.msra.mxu0 0.0
      %2179 = vmatprep.subr.mxu0 0.0
      %2180 = vmatpush1.msra.mxu0 0.0
      %2181 = vmatprep.subr.mxu0 0.0
      %2182 = vmatpush1.msra.mxu0 0.0
      %2183 = vmatprep.subr.mxu0 0.0
      %2184 = vmatpush1.msra.mxu0 0.0
      %2185 = vmatprep.subr.mxu0 0.0
      %2186 = vmatpush1.msra.mxu0 0.0
      %2187 = vmatprep.subr.mxu0 0.0
      %2188 = vmatpush1.msra.mxu0 0.0
      %2189 = vmatprep.subr.mxu0 0.0
      %2190 = vmatpush1.msra.mxu0 0.0
      %2191 = vmatprep.subr.mxu0 0.0
      %2192 = vmatpush1.msra.mxu0 0.0
      %2193 = vmatprep.subr.mxu0 0.0
      %2194 = vmatpush1.msra.mxu0 0.0
      %2195 = vmatprep.subr.mxu0 0.0
      %2196 = vmatpush1.msra.mxu0 0.0
      %2197 = vmatprep.subr.mxu0 0.0
      %2198 = vmatpush1.msra.mxu0 0.0
      %2199 = vmatprep.subr.mxu0 0.0
      %2200 = vmatpush1.msra.mxu0 0.0
      %2201 = vmatprep.subr.mxu0 0.0
      %2202 = vmatpush1.msra.mxu0 0.0
      %2203 = vmatprep.subr.mxu0 0.0
      %2204 = vmatpush1.msra.mxu0 0.0
      %2205 = vmatprep.subr.mxu0 0.0
      %2206 = vmatpush1.msra.mxu0 0.0
      %2207 = vmatprep.subr.mxu0 0.0
      %2208 = vmatpush1.msra.mxu0 0.0
      %2209 = vmatprep.subr.mxu0 0.0
      %2210 = vmatpush1.msra.mxu0 0.0
      %2211 = vmatprep.subr.mxu0 0.0
      %2212 = vmatpush1.msra.mxu0 0.0
      %2213 = vmatprep.subr.mxu0 0.0
      %2214 = vmatpush1.msra.mxu0 0.0
      %2215 = vmatprep.subr.mxu0 0.0
      %2216 = vmatpush1.msra.mxu0 0.0
      %2217 = vmatprep.subr.mxu0 0.0
      %2218 = vmatpush1.msra.mxu0 0.0
      %2219 = vmatprep.subr.mxu0 0.0
      %2220 = vmatpush1.msra.mxu0 0.0
      %2221 = vmatprep.subr.mxu0 0.0
      %2222 = vmatpush1.msra.mxu0 0.0
      %2223 = vmatprep.subr.mxu0 0.0
      %2224 = vmatpush1.msra.mxu0 0.0
      %2225 = vmatprep.subr.mxu0 0.0
      %2226 = vmatpush1.msra.mxu0 0.0
      %2227 = vmatprep.subr.mxu0 0.0
      %2228 = vmatpush1.msra.mxu0 0.0
      %2229 = vmatprep.subr.mxu0 0.0
      %2230 = vmatpush1.msra.mxu0 0.0
      %2231 = vmatprep.mubr.f32.mxu0 0.0
      %v2232 = vand.u32 %v1935, 4294901760
      %v2233 = vsub.f32 %v1935, %v2232
      %v2234 = vand.u32 %v2233, 4294901760
      %2235 = vmatmul.mubr.f32.gmra.mrb[0].mxu0 %v2234
      %v2236 = vpop.f32.mrb[0].mxu0
      %v2237 = vadd.f32 %v2163, %v2236
      %v2238 = vpop.f32.mrb[0].mxu0
      %2239 = vdwg.mxu0
      %2240 = vmatprep.subr.mxu0 0.0
      %v2241 = vand.u32 %v1938, 4294901760
      %v2242 = vsub.f32 %v1938, %v2241
      %v2243 = vand.u32 %v2242, 4294901760
      %2244 = vmatpush1.msra.mxu0 %v2243
      %2245 = vmatprep.subr.mxu0 0.0
      %2246 = vmatpush1.msra.mxu0 0.0
      %2247 = vmatprep.subr.mxu0 0.0
      %2248 = vmatpush1.msra.mxu0 0.0
      %2249 = vmatprep.subr.mxu0 0.0
      %2250 = vmatpush1.msra.mxu0 0.0
      %2251 = vmatprep.subr.mxu0 0.0
      %2252 = vmatpush1.msra.mxu0 0.0
      %2253 = vmatprep.subr.mxu0 0.0
      %2254 = vmatpush1.msra.mxu0 0.0
      %2255 = vmatprep.subr.mxu0 0.0
      %2256 = vmatpush1.msra.mxu0 0.0
      %2257 = vmatprep.subr.mxu0 0.0
      %2258 = vmatpush1.msra.mxu0 0.0
      %2259 = vmatprep.subr.mxu0 0.0
      %2260 = vmatpush1.msra.mxu0 0.0
      %2261 = vmatprep.subr.mxu0 0.0
      %2262 = vmatpush1.msra.mxu0 0.0
      %2263 = vmatprep.subr.mxu0 0.0
      %2264 = vmatpush1.msra.mxu0 0.0
      %2265 = vmatprep.subr.mxu0 0.0
      %2266 = vmatpush1.msra.mxu0 0.0
      %2267 = vmatprep.subr.mxu0 0.0
      %2268 = vmatpush1.msra.mxu0 0.0
      %2269 = vmatprep.subr.mxu0 0.0
      %2270 = vmatpush1.msra.mxu0 0.0
      %2271 = vmatprep.subr.mxu0 0.0
      %2272 = vmatpush1.msra.mxu0 0.0
      %2273 = vmatprep.subr.mxu0 0.0
      %2274 = vmatpush1.msra.mxu0 0.0
      %2275 = vmatprep.subr.mxu0 0.0
      %2276 = vmatpush1.msra.mxu0 0.0
      %2277 = vmatprep.subr.mxu0 0.0
      %2278 = vmatpush1.msra.mxu0 0.0
      %2279 = vmatprep.subr.mxu0 0.0
      %2280 = vmatpush1.msra.mxu0 0.0
      %2281 = vmatprep.subr.mxu0 0.0
      %2282 = vmatpush1.msra.mxu0 0.0
      %2283 = vmatprep.subr.mxu0 0.0
      %2284 = vmatpush1.msra.mxu0 0.0
      %2285 = vmatprep.subr.mxu0 0.0
      %2286 = vmatpush1.msra.mxu0 0.0
      %2287 = vmatprep.subr.mxu0 0.0
      %2288 = vmatpush1.msra.mxu0 0.0
      %2289 = vmatprep.subr.mxu0 0.0
      %2290 = vmatpush1.msra.mxu0 0.0
      %2291 = vmatprep.subr.mxu0 0.0
      %2292 = vmatpush1.msra.mxu0 0.0
      %2293 = vmatprep.subr.mxu0 0.0
      %2294 = vmatpush1.msra.mxu0 0.0
      %2295 = vmatprep.subr.mxu0 0.0
      %2296 = vmatpush1.msra.mxu0 0.0
      %2297 = vmatprep.subr.mxu0 0.0
      %2298 = vmatpush1.msra.mxu0 0.0
      %2299 = vmatprep.subr.mxu0 0.0
      %2300 = vmatpush1.msra.mxu0 0.0
      %2301 = vmatprep.subr.mxu0 0.0
      %2302 = vmatpush1.msra.mxu0 0.0
      %2303 = vmatprep.subr.mxu0 0.0
      %2304 = vmatpush1.msra.mxu0 0.0
      %2305 = vmatprep.subr.mxu0 0.0
      %2306 = vmatpush1.msra.mxu0 0.0
      %2307 = vmatprep.mubr.f32.mxu0 0.0
      %v2308 = vand.u32 %v1935, 4294901760
      %2309 = vmatmul.mubr.f32.gmra.mrb[0].mxu0 %v2308
      %v2310 = vpop.f32.mrb[0].mxu0
      %v2311 = vadd.f32 %v2237, %v2310
      %v2312 = vpop.f32.mrb[0].mxu0
      %2313 = vdwg.mxu0
      %2314 = vmatprep.subr.mxu0 0.0
      %v2315 = vand.u32 %v1938, 4294901760
      %2316 = vmatpush1.msra.mxu0 %v2315
      %2317 = vmatprep.subr.mxu0 0.0
      %2318 = vmatpush1.msra.mxu0 0.0
      %2319 = vmatprep.subr.mxu0 0.0
      %2320 = vmatpush1.msra.mxu0 0.0
      %2321 = vmatprep.subr.mxu0 0.0
      %2322 = vmatpush1.msra.mxu0 0.0
      %2323 = vmatprep.subr.mxu0 0.0
      %2324 = vmatpush1.msra.mxu0 0.0
      %2325 = vmatprep.subr.mxu0 0.0
      %2326 = vmatpush1.msra.mxu0 0.0
      %2327 = vmatprep.subr.mxu0 0.0
      %2328 = vmatpush1.msra.mxu0 0.0
      %2329 = vmatprep.subr.mxu0 0.0
      %2330 = vmatpush1.msra.mxu0 0.0
      %2331 = vmatprep.subr.mxu0 0.0
      %2332 = vmatpush1.msra.mxu0 0.0
      %2333 = vmatprep.subr.mxu0 0.0
      %2334 = vmatpush1.msra.mxu0 0.0
      %2335 = vmatprep.subr.mxu0 0.0
      %2336 = vmatpush1.msra.mxu0 0.0
      %2337 = vmatprep.subr.mxu0 0.0
      %2338 = vmatpush1.msra.mxu0 0.0
      %2339 = vmatprep.subr.mxu0 0.0
      %2340 = vmatpush1.msra.mxu0 0.0
      %2341 = vmatprep.subr.mxu0 0.0
      %2342 = vmatpush1.msra.mxu0 0.0
      %2343 = vmatprep.subr.mxu0 0.0
      %2344 = vmatpush1.msra.mxu0 0.0
      %2345 = vmatprep.subr.mxu0 0.0
      %2346 = vmatpush1.msra.mxu0 0.0
      %2347 = vmatprep.subr.mxu0 0.0
      %2348 = vmatpush1.msra.mxu0 0.0
      %2349 = vmatprep.subr.mxu0 0.0
      %2350 = vmatpush1.msra.mxu0 0.0
      %2351 = vmatprep.subr.mxu0 0.0
      %2352 = vmatpush1.msra.mxu0 0.0
      %2353 = vmatprep.subr.mxu0 0.0
      %2354 = vmatpush1.msra.mxu0 0.0
      %2355 = vmatprep.subr.mxu0 0.0
      %2356 = vmatpush1.msra.mxu0 0.0
      %2357 = vmatprep.subr.mxu0 0.0
      %2358 = vmatpush1.msra.mxu0 0.0
      %2359 = vmatprep.subr.mxu0 0.0
      %2360 = vmatpush1.msra.mxu0 0.0
      %2361 = vmatprep.subr.mxu0 0.0
      %2362 = vmatpush1.msra.mxu0 0.0
      %2363 = vmatprep.subr.mxu0 0.0
      %2364 = vmatpush1.msra.mxu0 0.0
      %2365 = vmatprep.subr.mxu0 0.0
      %2366 = vmatpush1.msra.mxu0 0.0
      %2367 = vmatprep.subr.mxu0 0.0
      %2368 = vmatpush1.msra.mxu0 0.0
      %2369 = vmatprep.subr.mxu0 0.0
      %2370 = vmatpush1.msra.mxu0 0.0
      %2371 = vmatprep.subr.mxu0 0.0
      %2372 = vmatpush1.msra.mxu0 0.0
      %2373 = vmatprep.subr.mxu0 0.0
      %2374 = vmatpush1.msra.mxu0 0.0
      %2375 = vmatprep.subr.mxu0 0.0
      %2376 = vmatpush1.msra.mxu0 0.0
      %2377 = vmatprep.subr.mxu0 0.0
      %2378 = vmatpush1.msra.mxu0 0.0
      %2379 = vmatprep.mubr.f32.mxu0 0.0
      %v2380 = vand.u32 %v1935, 4294901760
      %2381 = vmatmul.mubr.f32.gmra.mrb[0].mxu0 %v2380
      %v2382 = vpop.f32.mrb[0].mxu0
      %v2383 = vadd.f32 %v2311, %v2382
      %v2384 = vpop.f32.mrb[0].mxu0
      %2385 = vdwg.mxu0
      %v2386 = vadd.f32 %v1459, %v2383
      %v2387 = vld [vmem:[%s5] sm:$0xf]
      %v2388 = vadd.f32 %v2386, %v2387
      %v2389 = vld [vmem:[%s4] sm:$0xf]
      %v2390 = vld [vmem:[%s507] sm:$0xff]
      %2392 = vset.pattern.permute.xlu0 0
      %2393 = vperm.xlu0 %2392, %v2388
      %v2394 = vpop.permute.xlu0 %2393
      %v2397 = vcombine.high %v2390, %v2390
      %v2399 = vsel %vm1008, %v2389, 0
      %v2401 = vsel %vm1012, %v2390, 0
      %v2403 = vsel %vm1012, %v2397, 0
      %v2405 = vand.u32 %v2403, 4294901760
      %2406 = vmatprep.subr.mxu0 %v2405
      %v2407 = vand.u32 %v2401, 4294901760
      %2408 = vmatpush1.msra.mxu0 %v2407
      %2409 = vmatprep.subr.mxu0 0.0
      %2410 = vmatpush1.msra.mxu0 0.0
      %2411 = vmatprep.subr.mxu0 0.0
      %2412 = vmatpush1.msra.mxu0 0.0
      %2413 = vmatprep.subr.mxu0 0.0
      %2414 = vmatpush1.msra.mxu0 0.0
      %2415 = vmatprep.subr.mxu0 0.0
      %2416 = vmatpush1.msra.mxu0 0.0
      %2417 = vmatprep.subr.mxu0 0.0
      %2418 = vmatpush1.msra.mxu0 0.0
      %2419 = vmatprep.subr.mxu0 0.0
      %2420 = vmatpush1.msra.mxu0 0.0
      %2421 = vmatprep.subr.mxu0 0.0
      %2422 = vmatpush1.msra.mxu0 0.0
      %2423 = vmatprep.subr.mxu0 0.0
      %2424 = vmatpush1.msra.mxu0 0.0
      %2425 = vmatprep.subr.mxu0 0.0
      %2426 = vmatpush1.msra.mxu0 0.0
      %2427 = vmatprep.subr.mxu0 0.0
      %2428 = vmatpush1.msra.mxu0 0.0
      %2429 = vmatprep.subr.mxu0 0.0
      %2430 = vmatpush1.msra.mxu0 0.0
      %2431 = vmatprep.subr.mxu0 0.0
      %2432 = vmatpush1.msra.mxu0 0.0
      %2433 = vmatprep.subr.mxu0 0.0
      %2434 = vmatpush1.msra.mxu0 0.0
      %2435 = vmatprep.subr.mxu0 0.0
      %2436 = vmatpush1.msra.mxu0 0.0
      %2437 = vmatprep.subr.mxu0 0.0
      %2438 = vmatpush1.msra.mxu0 0.0
      %2439 = vmatprep.subr.mxu0 0.0
      %2440 = vmatpush1.msra.mxu0 0.0
      %2441 = vmatprep.subr.mxu0 0.0
      %2442 = vmatpush1.msra.mxu0 0.0
      %2443 = vmatprep.subr.mxu0 0.0
      %2444 = vmatpush1.msra.mxu0 0.0
      %2445 = vmatprep.subr.mxu0 0.0
      %2446 = vmatpush1.msra.mxu0 0.0
      %2447 = vmatprep.subr.mxu0 0.0
      %2448 = vmatpush1.msra.mxu0 0.0
      %2449 = vmatprep.subr.mxu0 0.0
      %2450 = vmatpush1.msra.mxu0 0.0
      %2451 = vmatprep.subr.mxu0 0.0
      %2452 = vmatpush1.msra.mxu0 0.0
      %2453 = vmatprep.subr.mxu0 0.0
      %2454 = vmatpush1.msra.mxu0 0.0
      %2455 = vmatprep.subr.mxu0 0.0
      %2456 = vmatpush1.msra.mxu0 0.0
      %2457 = vmatprep.subr.mxu0 0.0
      %2458 = vmatpush1.msra.mxu0 0.0
      %2459 = vmatprep.subr.mxu0 0.0
      %2460 = vmatpush1.msra.mxu0 0.0
      %2461 = vmatprep.subr.mxu0 0.0
      %2462 = vmatpush1.msra.mxu0 0.0
      %2463 = vmatprep.subr.mxu0 0.0
      %2464 = vmatpush1.msra.mxu0 0.0
      %2465 = vmatprep.subr.mxu0 0.0
      %2466 = vmatpush1.msra.mxu0 0.0
      %2467 = vmatprep.subr.mxu0 0.0
      %2468 = vmatpush1.msra.mxu0 0.0
      %2469 = vmatprep.subr.mxu0 0.0
      %2470 = vmatpush1.msra.mxu0 0.0
      %2471 = vmatprep.mubr.f32.mxu0 0.0
      %v2472 = vand.u32 %v2399, 4294901760
      %v2473 = vsub.f32 %v2399, %v2472
      %v2474 = vand.u32 %v2473, 4294901760
      %v2475 = vsub.f32 %v2473, %v2474
      %v2476 = vand.u32 %v2475, 4294901760
      %2477 = vmatmul.mubr.f32.gmra.mrb[0].mxu0 %v2476
      %v2478 = vpop.f32.mrb[0].mxu0
      %v2479 = vadd.f32 %v2394, %v2478
      %v2480 = vpop.f32.mrb[0].mxu0
      %v2481 = vadd.f32 %v2394, %v2480
      %2482 = vdwg.mxu0
      %v2483 = vand.u32 %v2403, 4294901760
      %v2484 = vsub.f32 %v2403, %v2483
      %v2485 = vand.u32 %v2484, 4294901760
      %v2486 = vsub.f32 %v2484, %v2485
      %v2487 = vand.u32 %v2486, 4294901760
      %2488 = vmatprep.subr.mxu0 %v2487
      %v2489 = vand.u32 %v2401, 4294901760
      %v2490 = vsub.f32 %v2401, %v2489
      %v2491 = vand.u32 %v2490, 4294901760
      %v2492 = vsub.f32 %v2490, %v2491
      %v2493 = vand.u32 %v2492, 4294901760
      %2494 = vmatpush1.msra.mxu0 %v2493
      %2495 = vmatprep.subr.mxu0 0.0
      %2496 = vmatpush1.msra.mxu0 0.0
      %2497 = vmatprep.subr.mxu0 0.0
      %2498 = vmatpush1.msra.mxu0 0.0
      %2499 = vmatprep.subr.mxu0 0.0
      %2500 = vmatpush1.msra.mxu0 0.0
      %2501 = vmatprep.subr.mxu0 0.0
      %2502 = vmatpush1.msra.mxu0 0.0
      %2503 = vmatprep.subr.mxu0 0.0
      %2504 = vmatpush1.msra.mxu0 0.0
      %2505 = vmatprep.subr.mxu0 0.0
      %2506 = vmatpush1.msra.mxu0 0.0
      %2507 = vmatprep.subr.mxu0 0.0
      %2508 = vmatpush1.msra.mxu0 0.0
      %2509 = vmatprep.subr.mxu0 0.0
      %2510 = vmatpush1.msra.mxu0 0.0
      %2511 = vmatprep.subr.mxu0 0.0
      %2512 = vmatpush1.msra.mxu0 0.0
      %2513 = vmatprep.subr.mxu0 0.0
      %2514 = vmatpush1.msra.mxu0 0.0
      %2515 = vmatprep.subr.mxu0 0.0
      %2516 = vmatpush1.msra.mxu0 0.0
      %2517 = vmatprep.subr.mxu0 0.0
      %2518 = vmatpush1.msra.mxu0 0.0
      %2519 = vmatprep.subr.mxu0 0.0
      %2520 = vmatpush1.msra.mxu0 0.0
      %2521 = vmatprep.subr.mxu0 0.0
      %2522 = vmatpush1.msra.mxu0 0.0
      %2523 = vmatprep.subr.mxu0 0.0
      %2524 = vmatpush1.msra.mxu0 0.0
      %2525 = vmatprep.subr.mxu0 0.0
      %2526 = vmatpush1.msra.mxu0 0.0
      %2527 = vmatprep.subr.mxu0 0.0
      %2528 = vmatpush1.msra.mxu0 0.0
      %2529 = vmatprep.subr.mxu0 0.0
      %2530 = vmatpush1.msra.mxu0 0.0
      %2531 = vmatprep.subr.mxu0 0.0
      %2532 = vmatpush1.msra.mxu0 0.0
      %2533 = vmatprep.subr.mxu0 0.0
      %2534 = vmatpush1.msra.mxu0 0.0
      %2535 = vmatprep.subr.mxu0 0.0
      %2536 = vmatpush1.msra.mxu0 0.0
      %2537 = vmatprep.subr.mxu0 0.0
      %2538 = vmatpush1.msra.mxu0 0.0
      %2539 = vmatprep.subr.mxu0 0.0
      %2540 = vmatpush1.msra.mxu0 0.0
      %2541 = vmatprep.subr.mxu0 0.0
      %2542 = vmatpush1.msra.mxu0 0.0
      %2543 = vmatprep.subr.mxu0 0.0
      %2544 = vmatpush1.msra.mxu0 0.0
      %2545 = vmatprep.subr.mxu0 0.0
      %2546 = vmatpush1.msra.mxu0 0.0
      %2547 = vmatprep.subr.mxu0 0.0
      %2548 = vmatpush1.msra.mxu0 0.0
      %2549 = vmatprep.subr.mxu0 0.0
      %2550 = vmatpush1.msra.mxu0 0.0
      %2551 = vmatprep.subr.mxu0 0.0
      %2552 = vmatpush1.msra.mxu0 0.0
      %2553 = vmatprep.subr.mxu0 0.0
      %2554 = vmatpush1.msra.mxu0 0.0
      %2555 = vmatprep.subr.mxu0 0.0
      %2556 = vmatpush1.msra.mxu0 0.0
      %2557 = vmatprep.mubr.f32.mxu0 0.0
      %v2558 = vand.u32 %v2399, 4294901760
      %2559 = vmatmul.mubr.f32.gmra.mrb[0].mxu0 %v2558
      %v2560 = vpop.f32.mrb[0].mxu0
      %v2561 = vadd.f32 %v2479, %v2560
      %v2562 = vpop.f32.mrb[0].mxu0
      %v2563 = vadd.f32 %v2481, %v2562
      %2564 = vdwg.mxu0
      %v2565 = vand.u32 %v2403, 4294901760
      %v2566 = vsub.f32 %v2403, %v2565
      %2567 = vmatprep.subr.mxu0 %v2566
      %v2568 = vand.u32 %v2401, 4294901760
      %v2569 = vsub.f32 %v2401, %v2568
      %2570 = vmatpush1.msra.mxu0 %v2569
      %2571 = vmatprep.subr.mxu0 0.0
      %2572 = vmatpush1.msra.mxu0 0.0
      %2573 = vmatprep.subr.mxu0 0.0
      %2574 = vmatpush1.msra.mxu0 0.0
      %2575 = vmatprep.subr.mxu0 0.0
      %2576 = vmatpush1.msra.mxu0 0.0
      %2577 = vmatprep.subr.mxu0 0.0
      %2578 = vmatpush1.msra.mxu0 0.0
      %2579 = vmatprep.subr.mxu0 0.0
      %2580 = vmatpush1.msra.mxu0 0.0
      %2581 = vmatprep.subr.mxu0 0.0
      %2582 = vmatpush1.msra.mxu0 0.0
      %2583 = vmatprep.subr.mxu0 0.0
      %2584 = vmatpush1.msra.mxu0 0.0
      %2585 = vmatprep.subr.mxu0 0.0
      %2586 = vmatpush1.msra.mxu0 0.0
      %2587 = vmatprep.subr.mxu0 0.0
      %2588 = vmatpush1.msra.mxu0 0.0
      %2589 = vmatprep.subr.mxu0 0.0
      %2590 = vmatpush1.msra.mxu0 0.0
      %2591 = vmatprep.subr.mxu0 0.0
      %2592 = vmatpush1.msra.mxu0 0.0
      %2593 = vmatprep.subr.mxu0 0.0
      %2594 = vmatpush1.msra.mxu0 0.0
      %2595 = vmatprep.subr.mxu0 0.0
      %2596 = vmatpush1.msra.mxu0 0.0
      %2597 = vmatprep.subr.mxu0 0.0
      %2598 = vmatpush1.msra.mxu0 0.0
      %2599 = vmatprep.subr.mxu0 0.0
      %2600 = vmatpush1.msra.mxu0 0.0
      %2601 = vmatprep.subr.mxu0 0.0
      %2602 = vmatpush1.msra.mxu0 0.0
      %2603 = vmatprep.subr.mxu0 0.0
      %2604 = vmatpush1.msra.mxu0 0.0
      %2605 = vmatprep.subr.mxu0 0.0
      %2606 = vmatpush1.msra.mxu0 0.0
      %2607 = vmatprep.subr.mxu0 0.0
      %2608 = vmatpush1.msra.mxu0 0.0
      %2609 = vmatprep.subr.mxu0 0.0
      %2610 = vmatpush1.msra.mxu0 0.0
      %2611 = vmatprep.subr.mxu0 0.0
      %2612 = vmatpush1.msra.mxu0 0.0
      %2613 = vmatprep.subr.mxu0 0.0
      %2614 = vmatpush1.msra.mxu0 0.0
      %2615 = vmatprep.subr.mxu0 0.0
      %2616 = vmatpush1.msra.mxu0 0.0
      %2617 = vmatprep.subr.mxu0 0.0
      %2618 = vmatpush1.msra.mxu0 0.0
      %2619 = vmatprep.subr.mxu0 0.0
      %2620 = vmatpush1.msra.mxu0 0.0
      %2621 = vmatprep.subr.mxu0 0.0
      %2622 = vmatpush1.msra.mxu0 0.0
      %2623 = vmatprep.subr.mxu0 0.0
      %2624 = vmatpush1.msra.mxu0 0.0
      %2625 = vmatprep.subr.mxu0 0.0
      %2626 = vmatpush1.msra.mxu0 0.0
      %2627 = vmatprep.subr.mxu0 0.0
      %2628 = vmatpush1.msra.mxu0 0.0
      %2629 = vmatprep.subr.mxu0 0.0
      %2630 = vmatpush1.msra.mxu0 0.0
      %2631 = vmatprep.subr.mxu0 0.0
      %2632 = vmatpush1.msra.mxu0 0.0
      %2633 = vmatprep.mubr.f32.mxu0 0.0
      %v2634 = vand.u32 %v2399, 4294901760
      %v2635 = vsub.f32 %v2399, %v2634
      %2636 = vmatmul.mubr.f32.gmra.mrb[0].mxu0 %v2635
      %v2637 = vpop.f32.mrb[0].mxu0
      %v2638 = vadd.f32 %v2561, %v2637
      %v2639 = vpop.f32.mrb[0].mxu0
      %v2640 = vadd.f32 %v2563, %v2639
      %2641 = vdwg.mxu0
      %v2642 = vand.u32 %v2403, 4294901760
      %2643 = vmatprep.subr.mxu0 %v2642
      %v2644 = vand.u32 %v2401, 4294901760
      %2645 = vmatpush1.msra.mxu0 %v2644
      %2646 = vmatprep.subr.mxu0 0.0
      %2647 = vmatpush1.msra.mxu0 0.0
      %2648 = vmatprep.subr.mxu0 0.0
      %2649 = vmatpush1.msra.mxu0 0.0
      %2650 = vmatprep.subr.mxu0 0.0
      %2651 = vmatpush1.msra.mxu0 0.0
      %2652 = vmatprep.subr.mxu0 0.0
      %2653 = vmatpush1.msra.mxu0 0.0
      %2654 = vmatprep.subr.mxu0 0.0
      %2655 = vmatpush1.msra.mxu0 0.0
      %2656 = vmatprep.subr.mxu0 0.0
      %2657 = vmatpush1.msra.mxu0 0.0
      %2658 = vmatprep.subr.mxu0 0.0
      %2659 = vmatpush1.msra.mxu0 0.0
      %2660 = vmatprep.subr.mxu0 0.0
      %2661 = vmatpush1.msra.mxu0 0.0
      %2662 = vmatprep.subr.mxu0 0.0
      %2663 = vmatpush1.msra.mxu0 0.0
      %2664 = vmatprep.subr.mxu0 0.0
      %2665 = vmatpush1.msra.mxu0 0.0
      %2666 = vmatprep.subr.mxu0 0.0
      %2667 = vmatpush1.msra.mxu0 0.0
      %2668 = vmatprep.subr.mxu0 0.0
      %2669 = vmatpush1.msra.mxu0 0.0
      %2670 = vmatprep.subr.mxu0 0.0
      %2671 = vmatpush1.msra.mxu0 0.0
      %2672 = vmatprep.subr.mxu0 0.0
      %2673 = vmatpush1.msra.mxu0 0.0
      %2674 = vmatprep.subr.mxu0 0.0
      %2675 = vmatpush1.msra.mxu0 0.0
      %2676 = vmatprep.subr.mxu0 0.0
      %2677 = vmatpush1.msra.mxu0 0.0
      %2678 = vmatprep.subr.mxu0 0.0
      %2679 = vmatpush1.msra.mxu0 0.0
      %2680 = vmatprep.subr.mxu0 0.0
      %2681 = vmatpush1.msra.mxu0 0.0
      %2682 = vmatprep.subr.mxu0 0.0
      %2683 = vmatpush1.msra.mxu0 0.0
      %2684 = vmatprep.subr.mxu0 0.0
      %2685 = vmatpush1.msra.mxu0 0.0
      %2686 = vmatprep.subr.mxu0 0.0
      %2687 = vmatpush1.msra.mxu0 0.0
      %2688 = vmatprep.subr.mxu0 0.0
      %2689 = vmatpush1.msra.mxu0 0.0
      %2690 = vmatprep.subr.mxu0 0.0
      %2691 = vmatpush1.msra.mxu0 0.0
      %2692 = vmatprep.subr.mxu0 0.0
      %2693 = vmatpush1.msra.mxu0 0.0
      %2694 = vmatprep.subr.mxu0 0.0
      %2695 = vmatpush1.msra.mxu0 0.0
      %2696 = vmatprep.subr.mxu0 0.0
      %2697 = vmatpush1.msra.mxu0 0.0
      %2698 = vmatprep.subr.mxu0 0.0
      %2699 = vmatpush1.msra.mxu0 0.0
      %2700 = vmatprep.subr.mxu0 0.0
      %2701 = vmatpush1.msra.mxu0 0.0
      %2702 = vmatprep.subr.mxu0 0.0
      %2703 = vmatpush1.msra.mxu0 0.0
      %2704 = vmatprep.subr.mxu0 0.0
      %2705 = vmatpush1.msra.mxu0 0.0
      %2706 = vmatprep.subr.mxu0 0.0
      %2707 = vmatpush1.msra.mxu0 0.0
      %2708 = vmatprep.mubr.f32.mxu0 0.0
      %v2709 = vand.u32 %v2399, 4294901760
      %v2710 = vsub.f32 %v2399, %v2709
      %v2711 = vand.u32 %v2710, 4294901760
      %2712 = vmatmul.mubr.f32.gmra.mrb[0].mxu0 %v2711
      %v2713 = vpop.f32.mrb[0].mxu0
      %v2714 = vadd.f32 %v2638, %v2713
      %v2715 = vpop.f32.mrb[0].mxu0
      %v2716 = vadd.f32 %v2640, %v2715
      %2717 = vdwg.mxu0
      %v2718 = vand.u32 %v2403, 4294901760
      %v2719 = vsub.f32 %v2403, %v2718
      %v2720 = vand.u32 %v2719, 4294901760
      %2721 = vmatprep.subr.mxu0 %v2720
      %v2722 = vand.u32 %v2401, 4294901760
      %v2723 = vsub.f32 %v2401, %v2722
      %v2724 = vand.u32 %v2723, 4294901760
      %2725 = vmatpush1.msra.mxu0 %v2724
      %2726 = vmatprep.subr.mxu0 0.0
      %2727 = vmatpush1.msra.mxu0 0.0
      %2728 = vmatprep.subr.mxu0 0.0
      %2729 = vmatpush1.msra.mxu0 0.0
      %2730 = vmatprep.subr.mxu0 0.0
      %2731 = vmatpush1.msra.mxu0 0.0
      %2732 = vmatprep.subr.mxu0 0.0
      %2733 = vmatpush1.msra.mxu0 0.0
      %2734 = vmatprep.subr.mxu0 0.0
      %2735 = vmatpush1.msra.mxu0 0.0
      %2736 = vmatprep.subr.mxu0 0.0
      %2737 = vmatpush1.msra.mxu0 0.0
      %2738 = vmatprep.subr.mxu0 0.0
      %2739 = vmatpush1.msra.mxu0 0.0
      %2740 = vmatprep.subr.mxu0 0.0
      %2741 = vmatpush1.msra.mxu0 0.0
      %2742 = vmatprep.subr.mxu0 0.0
      %2743 = vmatpush1.msra.mxu0 0.0
      %2744 = vmatprep.subr.mxu0 0.0
      %2745 = vmatpush1.msra.mxu0 0.0
      %2746 = vmatprep.subr.mxu0 0.0
      %2747 = vmatpush1.msra.mxu0 0.0
      %2748 = vmatprep.subr.mxu0 0.0
      %2749 = vmatpush1.msra.mxu0 0.0
      %2750 = vmatprep.subr.mxu0 0.0
      %2751 = vmatpush1.msra.mxu0 0.0
      %2752 = vmatprep.subr.mxu0 0.0
      %2753 = vmatpush1.msra.mxu0 0.0
      %2754 = vmatprep.subr.mxu0 0.0
      %2755 = vmatpush1.msra.mxu0 0.0
      %2756 = vmatprep.subr.mxu0 0.0
      %2757 = vmatpush1.msra.mxu0 0.0
      %2758 = vmatprep.subr.mxu0 0.0
      %2759 = vmatpush1.msra.mxu0 0.0
      %2760 = vmatprep.subr.mxu0 0.0
      %2761 = vmatpush1.msra.mxu0 0.0
      %2762 = vmatprep.subr.mxu0 0.0
      %2763 = vmatpush1.msra.mxu0 0.0
      %2764 = vmatprep.subr.mxu0 0.0
      %2765 = vmatpush1.msra.mxu0 0.0
      %2766 = vmatprep.subr.mxu0 0.0
      %2767 = vmatpush1.msra.mxu0 0.0
      %2768 = vmatprep.subr.mxu0 0.0
      %2769 = vmatpush1.msra.mxu0 0.0
      %2770 = vmatprep.subr.mxu0 0.0
      %2771 = vmatpush1.msra.mxu0 0.0
      %2772 = vmatprep.subr.mxu0 0.0
      %2773 = vmatpush1.msra.mxu0 0.0
      %2774 = vmatprep.subr.mxu0 0.0
      %2775 = vmatpush1.msra.mxu0 0.0
      %2776 = vmatprep.subr.mxu0 0.0
      %2777 = vmatpush1.msra.mxu0 0.0
      %2778 = vmatprep.subr.mxu0 0.0
      %2779 = vmatpush1.msra.mxu0 0.0
      %2780 = vmatprep.subr.mxu0 0.0
      %2781 = vmatpush1.msra.mxu0 0.0
      %2782 = vmatprep.subr.mxu0 0.0
      %2783 = vmatpush1.msra.mxu0 0.0
      %2784 = vmatprep.subr.mxu0 0.0
      %2785 = vmatpush1.msra.mxu0 0.0
      %2786 = vmatprep.subr.mxu0 0.0
      %2787 = vmatpush1.msra.mxu0 0.0
      %2788 = vmatprep.mubr.f32.mxu0 0.0
      %v2789 = vand.u32 %v2399, 4294901760
      %2790 = vmatmul.mubr.f32.gmra.mrb[0].mxu0 %v2789
      %v2791 = vpop.f32.mrb[0].mxu0
      %v2792 = vadd.f32 %v2714, %v2791
      %v2793 = vpop.f32.mrb[0].mxu0
      %v2794 = vadd.f32 %v2716, %v2793
      %2795 = vdwg.mxu0
      %v2796 = vand.u32 %v2403, 4294901760
      %2797 = vmatprep.subr.mxu0 %v2796
      %v2798 = vand.u32 %v2401, 4294901760
      %2799 = vmatpush1.msra.mxu0 %v2798
      %2800 = vmatprep.subr.mxu0 0.0
      %2801 = vmatpush1.msra.mxu0 0.0
      %2802 = vmatprep.subr.mxu0 0.0
      %2803 = vmatpush1.msra.mxu0 0.0
      %2804 = vmatprep.subr.mxu0 0.0
      %2805 = vmatpush1.msra.mxu0 0.0
      %2806 = vmatprep.subr.mxu0 0.0
      %2807 = vmatpush1.msra.mxu0 0.0
      %2808 = vmatprep.subr.mxu0 0.0
      %2809 = vmatpush1.msra.mxu0 0.0
      %2810 = vmatprep.subr.mxu0 0.0
      %2811 = vmatpush1.msra.mxu0 0.0
      %2812 = vmatprep.subr.mxu0 0.0
      %2813 = vmatpush1.msra.mxu0 0.0
      %2814 = vmatprep.subr.mxu0 0.0
      %2815 = vmatpush1.msra.mxu0 0.0
      %2816 = vmatprep.subr.mxu0 0.0
      %2817 = vmatpush1.msra.mxu0 0.0
      %2818 = vmatprep.subr.mxu0 0.0
      %2819 = vmatpush1.msra.mxu0 0.0
      %2820 = vmatprep.subr.mxu0 0.0
      %2821 = vmatpush1.msra.mxu0 0.0
      %2822 = vmatprep.subr.mxu0 0.0
      %2823 = vmatpush1.msra.mxu0 0.0
      %2824 = vmatprep.subr.mxu0 0.0
      %2825 = vmatpush1.msra.mxu0 0.0
      %2826 = vmatprep.subr.mxu0 0.0
      %2827 = vmatpush1.msra.mxu0 0.0
      %2828 = vmatprep.subr.mxu0 0.0
      %2829 = vmatpush1.msra.mxu0 0.0
      %2830 = vmatprep.subr.mxu0 0.0
      %2831 = vmatpush1.msra.mxu0 0.0
      %2832 = vmatprep.subr.mxu0 0.0
      %2833 = vmatpush1.msra.mxu0 0.0
      %2834 = vmatprep.subr.mxu0 0.0
      %2835 = vmatpush1.msra.mxu0 0.0
      %2836 = vmatprep.subr.mxu0 0.0
      %2837 = vmatpush1.msra.mxu0 0.0
      %2838 = vmatprep.subr.mxu0 0.0
      %2839 = vmatpush1.msra.mxu0 0.0
      %2840 = vmatprep.subr.mxu0 0.0
      %2841 = vmatpush1.msra.mxu0 0.0
      %2842 = vmatprep.subr.mxu0 0.0
      %2843 = vmatpush1.msra.mxu0 0.0
      %2844 = vmatprep.subr.mxu0 0.0
      %2845 = vmatpush1.msra.mxu0 0.0
      %2846 = vmatprep.subr.mxu0 0.0
      %2847 = vmatpush1.msra.mxu0 0.0
      %2848 = vmatprep.subr.mxu0 0.0
      %2849 = vmatpush1.msra.mxu0 0.0
      %2850 = vmatprep.subr.mxu0 0.0
      %2851 = vmatpush1.msra.mxu0 0.0
      %2852 = vmatprep.subr.mxu0 0.0
      %2853 = vmatpush1.msra.mxu0 0.0
      %2854 = vmatprep.subr.mxu0 0.0
      %2855 = vmatpush1.msra.mxu0 0.0
      %2856 = vmatprep.subr.mxu0 0.0
      %2857 = vmatpush1.msra.mxu0 0.0
      %2858 = vmatprep.subr.mxu0 0.0
      %2859 = vmatpush1.msra.mxu0 0.0
      %2860 = vmatprep.subr.mxu0 0.0
      %2861 = vmatpush1.msra.mxu0 0.0
      %2862 = vmatprep.mubr.f32.mxu0 0.0
      %v2863 = vand.u32 %v2399, 4294901760
      %2864 = vmatmul.mubr.f32.gmra.mrb[0].mxu0 %v2863
      %v2865 = vpop.f32.mrb[0].mxu0
      %v2866 = vadd.f32 %v2792, %v2865
      %v2867 = vpop.f32.mrb[0].mxu0
      %v2868 = vadd.f32 %v2794, %v2867
      %2869 = vdwg.mxu0
      %v2870 = vld [vmem:[%s512] sm:$0xff]
      %v2872 = vcombine.high %v2870, %v2870
      %v2874 = vadd.f32 %v2866, %v2870
      %v2875 = vadd.f32 %v2868, %v2872
      %v2876 = vmul.f32 %v2874, 0.5
      %v2877 = vmul.f32 %v2875, 0.5
      %v2878 = vmul.f32 %v2874, 0.044715
      %v2879 = vmul.f32 %v2875, 0.044715
      %v2880 = vmul.f32 %v2878, %v2874
      %v2881 = vmul.f32 %v2879, %v2875
      %v2882 = vmul.f32 %v2880, %v2874
      %v2883 = vmul.f32 %v2881, %v2875
      %v2884 = vadd.f32 %v2874, %v2882
      %v2885 = vadd.f32 %v2875, %v2883
      %v2886 = vmul.f32 %v2884, 0.7978846
      %v2887 = vmul.f32 %v2885, 0.7978846
      %v2888 = vtanh.pop %v2886
      %v2889 = vtanh.pop %v2887
      %v2890 = vadd.f32 %v2888, 1.0
      %v2891 = vadd.f32 %v2889, 1.0
      %v2892 = vmul.f32 %v2876, %v2890
      %v2893 = vmul.f32 %v2877, %v2891
      %v2896 = vcombine.low %v2892, %v2893
      %2898 = vst [vmem:[%s527] sm:$0xff] %v2896
      %p2899 = scmp.lt.s32.totalorder %s25, 1
      %s2900 = scalar_select %p2899, %s25, 1
      %s2901 = smul.addr %s2900, 2
      %s2902 = smul.addr %s2901, 4
      %s2903 = scalar_lea.vmem %s14, %s2902
      // Predicated region
      $region77: #{fno_block_t_theta.3} parent=75 // pred_check
        %p2904 = pneg %p357
      $region78: #{fno_block_t_theta.3} parent=75 // pred_check_branch
        %2906 = sbr.rel (%p2904) target = $region80
      $region79: #{fno_block_t_theta.3} parent=75 // pred_region
        _
      $region80: #{fno_block_t_theta.3} parent=75 // pred_fallthru
        _
    $region76: #{fno_block_t_theta.3} parent=5 // pred_fallthru
      _
    %p2907 = scmp.le.s32.totalorder 2, %s20
    // Predicated region
    $region81: #{fno_block_t_theta.3} parent=5 // pred_check
      %p2908 = pneg %p2907
    $region82: #{fno_block_t_theta.3} parent=5 // pred_check_branch
      %2910 = sbr.rel (%p2908) target = $region84
    $region83: #{fno_block_t_theta.3} parent=5 // pred_region
      %s2911 = ssub.s32 %s20, 2
      // Predicated region
      $region85: #{fno_block_t_theta.3} parent=83 // pred_check
        %p2912 = pneg %p363
      $region86: #{fno_block_t_theta.3} parent=83 // pred_check_branch
        %2914 = sbr.rel (%p2912) target = $region88
      $region87: #{fno_block_t_theta.3} parent=83 // pred_region
        %p2915 = scmp.lt.s32.totalorder %s26, 1
        %s2916 = scalar_select %p2915, %s26, 1
        %s2917 = smul.addr %s2916, 2
        %s2918 = smul.addr %s2917, 4
        %s2919 = scalar_lea.vmem %s14, %s2918
      $region88: #{fno_block_t_theta.3} parent=83 // pred_fallthru
        _
    $region84: #{fno_block_t_theta.3} parent=5 // pred_fallthru
      _
  $region6: #{fno_block_t_theta.3} parent=0 // loop_footer
    %s24 = sadd.s32 1, %s20
  $region7: #{fno_block_t_theta.3} parent=0 // loop_footer_branch
    %19 = sbr.rel target = $region3
  $region8: #{fno_block_t_theta.3} parent=0 // loop_exit
    _

</llo_original>
